<compile_context>
chip_gen: v6e
topology: v6e:2x2x1
jax: 0.10.0
libtpu: 0.0.40
codegen_flags: <defaults>
</compile_context>

<pallas_src>
import math

import jax
import jax.numpy as jnp
from jax.experimental import pallas as pl
from jax.experimental.pallas import tpu as pltpu

HIDDEN_SIZE = 128
NUM_LAYERS = 2
FEATURES = ["lat", "lon", "geoaltitude"]
INPUT_SIZE = len(FEATURES)     # 3
OUTPUT_SIZE = len(FEATURES)    # 3


def gru_fc_kernel(x_ref,                       # (T*Bp, F) f32, time-major
                  wih0_ref,                    # (F, 3H)  f32
                  whh0_ref,                    # (H, 3H)  bf16
                  bias0_ref, bhn0_ref,         # (1, 3H) f32, (Bp, H) f32
                  wih1_hbm, whh1_hbm,          # (H, 3H) bf16 in HBM (pl.ANY)
                  bias1_ref, bhn1_ref,         # (1, 3H) f32, (Bp, H) f32
                  fcw_ref, fcb_ref,            # (H, O) f32, (1, O) f32
                  o_ref,                       # (Bp, O) f32
                  gi0_ref,                     # scratch (T*Bp, 3H) f32
                  wih1_v, whh1_v,              # scratch (H, 3H) bf16 x2
                  sem):                        # DMA sems (2,)
    Bp = o_ref.shape[0]
    TB = x_ref.shape[0]
    T = TB // Bp
    H = whh0_ref.shape[0]
    f32 = jnp.float32
    bf16 = jnp.bfloat16

    # Kick off layer-1 weight DMA immediately; it overlaps the layer-0
    # input projection and first recurrent step.
    cp_wih1 = pltpu.make_async_copy(wih1_hbm, wih1_v, sem.at[0])
    cp_whh1 = pltpu.make_async_copy(whh1_hbm, whh1_v, sem.at[1])
    cp_wih1.start()
    cp_whh1.start()

    # Layer-0 input->hidden projection for ALL timesteps in one matmul
    # (K=3, off the serial critical path -> keep f32 for precision).
    gi0_ref[...] = (jnp.dot(x_ref[...], wih0_ref[...],
                            preferred_element_type=f32)
                    + bias0_ref[...])

    bhn0 = bhn0_ref[...]
    bhn1 = bhn1_ref[...]
    bias1 = bias1_ref[...]

    def recur_step(gi, h, whh_ref, b_hn):
        # One bf16 recurrent matmul per step; weight read at use site so it is
        # never pinned in vregs across the unrolled loop.
        gh = jnp.dot(h.astype(bf16), whh_ref[...], preferred_element_type=f32)
        rz = jax.nn.sigmoid(gi[:, :2 * H] + gh[:, :2 * H])   # fused r,z
        r = rz[:, :H]
        z = rz[:, H:]
        n = jnp.tanh(gi[:, 2 * H:] + r * (gh[:, 2 * H:] + b_hn))
        return n + z * (h - n)                                # == (1-z)*n + z*h

    def gi1_step(h0_t):
        return (jnp.dot(h0_t.astype(bf16), wih1_v[...],
                        preferred_element_type=f32) + bias1)

    h0 = jnp.zeros((Bp, H), f32)
    h1 = jnp.zeros((Bp, H), f32)

    # t = 0: only layer 0 has work yet.
    h0 = recur_step(gi0_ref[0:Bp, :], h0, whh0_ref, bhn0)

    # Layer-1 weights must be resident before layer 1's first use.
    cp_wih1.wait()
    cp_whh1.wait()

    # Interleaved recurrences: layer 1 runs one timestep behind layer 0, so
    # within each unrolled iteration the layer-0 step t and layer-1 step t-1
    # are independent (3 independent MXU pushes + 2 layers of gate math).
    for t in range(1, T):
        i = t * Bp
        h0_prev = h0
        h0 = recur_step(gi0_ref[i:i + Bp, :], h0_prev, whh0_ref, bhn0)
        h1 = recur_step(gi1_step(h0_prev), h1, whh1_v, bhn1)

    # Epilogue: last layer-1 step (consumes h0 at t = T-1).
    h1 = recur_step(gi1_step(h0), h1, whh1_v, bhn1)

    # fc(out[:, -1, :]) == fc(h1 of the last step); tiny matmul, keep f32.
    o_ref[...] = (jnp.dot(h1, fcw_ref[...], preferred_element_type=f32)
                  + fcb_ref[...])


def gru_model_forward(x, params):
    """x: (B, T, F) float32 -> (B, O) float32."""
    B, T, F = x.shape
    H = params["whh0"].shape[0]
    O = params["fcw"].shape[1]
    bf16 = jnp.bfloat16

    # Pad batch to a sublane multiple (>= 8): full-sublane tiles, and the
    # per-step (Bp, H) hidden state is exactly one vreg at Bp=8, H=128.
    Bp = max(8, ((B + 7) // 8) * 8)
    x_pad = jnp.zeros((Bp, T, F), jnp.float32).at[:B].set(x)
    x_flat = jnp.transpose(x_pad, (1, 0, 2)).reshape(T * Bp, F)   # time-major

    # Pre-fold biases in the wrapper: b_ih fully + b_hh for r/z gates; b_hn
    # stays separate (inside the r-multiplied term, PyTorch GRU semantics)
    # and is pre-broadcast to (Bp, H).
    def fold(bih, bhh):
        return jnp.concatenate(
            [bih[:, :2 * H] + bhh[:, :2 * H], bih[:, 2 * H:]], axis=-1)

    bias0 = fold(params["bih0"], params["bhh0"])
    bias1 = fold(params["bih1"], params["bhh1"])
    bhn0 = jnp.broadcast_to(params["bhh0"][:, 2 * H:], (Bp, H))
    bhn1 = jnp.broadcast_to(params["bhh1"][:, 2 * H:], (Bp, H))

    # bf16 weights for all MXU work on/near the serial recurrent chain.
    whh0 = params["whh0"].astype(bf16)
    wih1 = params["wih1"].astype(bf16)
    whh1 = params["whh1"].astype(bf16)

    vmem = pl.BlockSpec(memory_space=pltpu.MemorySpace.VMEM)
    anym = pl.BlockSpec(memory_space=pl.ANY)   # raw HBM ref, manual DMA

    args = (x_flat,
            params["wih0"], whh0, bias0, bhn0,
            wih1, whh1, bias1, bhn1,
            params["fcw"], params["fcb"])
    in_specs = [vmem,
                vmem, vmem, vmem, vmem,
                anym, anym, vmem, vmem,
                vmem, vmem]

    out_pad = pl.pallas_call(
        gru_fc_kernel,
        out_shape=jax.ShapeDtypeStruct((Bp, O), jnp.float32),
        in_specs=in_specs,
        out_specs=vmem,
        scratch_shapes=[pltpu.VMEM((T * Bp, 3 * H), jnp.float32),  # gi layer 0
                        pltpu.VMEM((H, 3 * H), bf16),              # wih1 landing
                        pltpu.VMEM((H, 3 * H), bf16),              # whh1 landing
                        pltpu.SemaphoreType.DMA((2,))],
    )(*args)
    return out_pad[:B]


def init_params(key, input_size, hidden_size, output_size):
    """Deterministic init mirroring PyTorch shapes (weights stored transposed)."""
    ks = jax.random.split(key, 11)
    bound_gru = 1.0 / math.sqrt(hidden_size)
    bound_fc = 1.0 / math.sqrt(hidden_size)

    def u(k, shape, bound):
        return jax.random.uniform(k, shape, jnp.float32, -bound, bound)

    return {
        # layer 0: weight_ih_l0 is (3H, F) in torch -> store (F, 3H)
        "wih0": u(ks[0], (input_size, 3 * hidden_size), bound_gru),
        "whh0": u(ks[1], (hidden_size, 3 * hidden_size), bound_gru),
        "bih0": u(ks[2], (1, 3 * hidden_size), bound_gru),
        "bhh0": u(ks[3], (1, 3 * hidden_size), bound_gru),
        # layer 1: weight_ih_l1 is (3H, H) in torch -> store (H, 3H)
        "wih1": u(ks[4], (hidden_size, 3 * hidden_size), bound_gru),
        "whh1": u(ks[5], (hidden_size, 3 * hidden_size), bound_gru),
        "bih1": u(ks[6], (1, 3 * hidden_size), bound_gru),
        "bhh1": u(ks[7], (1, 3 * hidden_size), bound_gru),
        # fc: torch Linear weight (O, H) -> store (H, O)
        "fcw": u(ks[8], (hidden_size, output_size), bound_fc),
        "fcb": u(ks[9], (1, output_size), bound_fc),
    }


def _gru_cell_ref(x_t, h, w_ih, w_hh, b_ih, b_hh, hidden):
    """Pure-JAX PyTorch-semantics GRU cell (f32 reference only)."""
    gi = jnp.dot(x_t, w_ih) + b_ih
    gh = jnp.dot(h, w_hh) + b_hh
    H = hidden
    r = jax.nn.sigmoid(gi[:, 0:H] + gh[:, 0:H])
    z = jax.nn.sigmoid(gi[:, H:2 * H] + gh[:, H:2 * H])
    n = jnp.tanh(gi[:, 2 * H:3 * H] + r * gh[:, 2 * H:3 * H])
    return (1.0 - z) * n + z * h


def reference_forward(x, params):
    """Pure-JAX f32 reference with identical semantics (sanity check)."""
    B, T, F = x.shape
    H = params["whh0"].shape[0]
    h0 = jnp.zeros((B, H), jnp.float32)
    h1 = jnp.zeros((B, H), jnp.float32)
    for t in range(T):
        x_t = x[:, t, :]
        h0 = _gru_cell_ref(x_t, h0, params["wih0"], params["whh0"],
                           params["bih0"], params["bhh0"], H)
        h1 = _gru_cell_ref(h0, h1, params["wih1"], params["whh1"],
                           params["bih1"], params["bhh1"], H)
    return jnp.dot(h1, params["fcw"]) + params["fcb"]


if __name__ == "__main__":
    key = jax.random.PRNGKey(0)
    k_params, k_x = jax.random.split(key)

    B, T = 2, 8
    params = init_params(k_params, INPUT_SIZE, HIDDEN_SIZE, OUTPUT_SIZE)
    x = jax.random.normal(k_x, (B, T, INPUT_SIZE), jnp.float32)

    out = gru_model_forward(x, params)
    out = jax.block_until_ready(out)

    ref = reference_forward(x, params)
    assert out.shape == (B, OUTPUT_SIZE)
    # bf16 recurrent matmuls -> relaxed tolerance vs the f32 reference.
    assert jnp.allclose(out, ref, atol=5e-2, rtol=5e-2), (out, ref)

    print("KERNEL_OK")
</pallas_src>

<mosaic_0001>
module attributes {stable_mosaic.version = 11 : i64} {
  func.func @gru_fc_kernel(%arg0: memref<64x3xf32, #tpu.memory_space<vmem>>, %arg1: memref<3x384xf32, #tpu.memory_space<vmem>>, %arg2: memref<128x384xbf16, #tpu.memory_space<vmem>>, %arg3: memref<1x384xf32, #tpu.memory_space<vmem>>, %arg4: memref<8x128xf32, #tpu.memory_space<vmem>>, %arg5: memref<128x384xbf16, #tpu.memory_space<any>>, %arg6: memref<128x384xbf16, #tpu.memory_space<any>>, %arg7: memref<1x384xf32, #tpu.memory_space<vmem>>, %arg8: memref<8x128xf32, #tpu.memory_space<vmem>>, %arg9: memref<128x3xf32, #tpu.memory_space<vmem>>, %arg10: memref<1x3xf32, #tpu.memory_space<vmem>>, %arg11: memref<8x3xf32, #tpu.memory_space<vmem>>, %arg12: memref<64x384xf32, #tpu.memory_space<vmem>>, %arg13: memref<128x384xbf16, #tpu.memory_space<vmem>>, %arg14: memref<128x384xbf16, #tpu.memory_space<vmem>>, %arg15: memref<2x!tpu.dma_semaphore, #tpu.memory_space<semaphore_mem>>) attributes {dimension_semantics = [], scalar_prefetch = 0 : i64, scratch_operands = 4 : i64, tpu.core_type = #tpu.core_type<tc>} {
    %c0_i32 = arith.constant 0 : i32
    %0 = tpu.memref_slice %arg15[%c0_i32] : memref<2x!tpu.dma_semaphore, #tpu.memory_space<semaphore_mem>> -> memref<1x!tpu.dma_semaphore, #tpu.memory_space<semaphore_mem>>
    %1 = tpu.memref_squeeze %0 : memref<1x!tpu.dma_semaphore, #tpu.memory_space<semaphore_mem>> -> memref<!tpu.dma_semaphore, #tpu.memory_space<semaphore_mem>>
    tpu.enqueue_dma source(%arg5 : memref<128x384xbf16, #tpu.memory_space<any>>) target(%arg13 : memref<128x384xbf16, #tpu.memory_space<vmem>>) target_semaphore(%1 : memref<!tpu.dma_semaphore, #tpu.memory_space<semaphore_mem>>)
    %c1_i32 = arith.constant 1 : i32
    %2 = tpu.memref_slice %arg15[%c1_i32] : memref<2x!tpu.dma_semaphore, #tpu.memory_space<semaphore_mem>> -> memref<1x!tpu.dma_semaphore, #tpu.memory_space<semaphore_mem>>
    %3 = tpu.memref_squeeze %2 : memref<1x!tpu.dma_semaphore, #tpu.memory_space<semaphore_mem>> -> memref<!tpu.dma_semaphore, #tpu.memory_space<semaphore_mem>>
    tpu.enqueue_dma source(%arg6 : memref<128x384xbf16, #tpu.memory_space<any>>) target(%arg14 : memref<128x384xbf16, #tpu.memory_space<vmem>>) target_semaphore(%3 : memref<!tpu.dma_semaphore, #tpu.memory_space<semaphore_mem>>)
    %c0 = arith.constant 0 : index
    %c0_0 = arith.constant 0 : index
    %4 = vector.load %arg0[%c0, %c0_0] : memref<64x3xf32, #tpu.memory_space<vmem>>, vector<64x3xf32>
    %c0_1 = arith.constant 0 : index
    %c0_2 = arith.constant 0 : index
    %5 = vector.load %arg1[%c0_1, %c0_2] : memref<3x384xf32, #tpu.memory_space<vmem>>, vector<3x384xf32>
    %cst = arith.constant dense<0.000000e+00> : vector<64x384xf32>
    %6 = tpu.matmul %4, %5, %cst {dimension_numbers = #tpu.dot_dimension_numbers<[1], [0], [0], [1], [0, 0, 1, 1], [], []>} : vector<64x3xf32>, vector<3x384xf32>, vector<64x384xf32> -> vector<64x384xf32>
    %c0_3 = arith.constant 0 : index
    %c0_4 = arith.constant 0 : index
    %7 = vector.load %arg3[%c0_3, %c0_4] : memref<1x384xf32, #tpu.memory_space<vmem>>, vector<1x384xf32>
    %8 = vector.broadcast %7 : vector<1x384xf32> to vector<64x384xf32>
    %9 = arith.addf %6, %8 : vector<64x384xf32>
    %c0_5 = arith.constant 0 : index
    %c0_6 = arith.constant 0 : index
    %10 = vector.load %arg12[%c0_5, %c0_6] : memref<64x384xf32, #tpu.memory_space<vmem>>, vector<64x384xf32>
    tpu.vector_store %arg12[%c0_5, %c0_6], %9 {strides = array<i32>} : memref<64x384xf32, #tpu.memory_space<vmem>>, vector<64x384xf32>,
    %c0_7 = arith.constant 0 : index
    %c0_8 = arith.constant 0 : index
    %11 = vector.load %arg4[%c0_7, %c0_8] : memref<8x128xf32, #tpu.memory_space<vmem>>, vector<8x128xf32>
    %c0_9 = arith.constant 0 : index
    %c0_10 = arith.constant 0 : index
    %12 = vector.load %arg8[%c0_9, %c0_10] : memref<8x128xf32, #tpu.memory_space<vmem>>, vector<8x128xf32>
    %c0_11 = arith.constant 0 : index
    %c0_12 = arith.constant 0 : index
    %13 = vector.load %arg7[%c0_11, %c0_12] : memref<1x384xf32, #tpu.memory_space<vmem>>, vector<1x384xf32>
    %cst_13 = arith.constant 0.000000e+00 : f32
    %14 = vector.broadcast %cst_13 : f32 to vector<8x128xf32>
    %cst_14 = arith.constant 0.000000e+00 : f32
    %15 = vector.broadcast %cst_14 : f32 to vector<8x128xf32>
    %c0_15 = arith.constant 0 : index
    %c0_16 = arith.constant 0 : index
    %16 = vector.load %arg12[%c0_15, %c0_16] : memref<64x384xf32, #tpu.memory_space<vmem>>, vector<8x384xf32>
    %17 = arith.truncf %14 : vector<8x128xf32> to vector<8x128xbf16>
    %c0_17 = arith.constant 0 : index
    %c0_18 = arith.constant 0 : index
    %18 = vector.load %arg2[%c0_17, %c0_18] : memref<128x384xbf16, #tpu.memory_space<vmem>>, vector<128x384xbf16>
    %cst_19 = arith.constant dense<0.000000e+00> : vector<8x384xf32>
    %19 = tpu.matmul %17, %18, %cst_19 {dimension_numbers = #tpu.dot_dimension_numbers<[1], [0], [0], [1], [0, 0, 1, 1], [], []>} : vector<8x128xbf16>, vector<128x384xbf16>, vector<8x384xf32> -> vector<8x384xf32>
    %20 = vector.extract_strided_slice %16 {offsets = [0, 0], sizes = [8, 256], strides = [1, 1]} : vector<8x384xf32> to vector<8x256xf32>
    %21 = vector.extract_strided_slice %19 {offsets = [0, 0], sizes = [8, 256], strides = [1, 1]} : vector<8x384xf32> to vector<8x256xf32>
    %22 = arith.addf %20, %21 : vector<8x256xf32>
    %23 = arith.negf %22 : vector<8x256xf32>
    %24 = math.exp %23 : vector<8x256xf32>
    %cst_20 = arith.constant 1.000000e+00 : f32
    %25 = vector.broadcast %cst_20 : f32 to vector<8x256xf32>
    %26 = arith.addf %25, %24 : vector<8x256xf32>
    %27 = arith.divf %25, %26 : vector<8x256xf32>
    %28 = vector.extract_strided_slice %27 {offsets = [0, 0], sizes = [8, 128], strides = [1, 1]} : vector<8x256xf32> to vector<8x128xf32>
    %29 = vector.extract_strided_slice %27 {offsets = [0, 128], sizes = [8, 128], strides = [1, 1]} : vector<8x256xf32> to vector<8x128xf32>
    %30 = vector.extract_strided_slice %16 {offsets = [0, 256], sizes = [8, 128], strides = [1, 1]} : vector<8x384xf32> to vector<8x128xf32>
    %31 = vector.extract_strided_slice %19 {offsets = [0, 256], sizes = [8, 128], strides = [1, 1]} : vector<8x384xf32> to vector<8x128xf32>
    %32 = arith.addf %31, %11 : vector<8x128xf32>
    %33 = arith.mulf %28, %32 : vector<8x128xf32>
    %34 = arith.addf %30, %33 : vector<8x128xf32>
    %35 = math.tanh %34 : vector<8x128xf32>
    %36 = arith.subf %14, %35 : vector<8x128xf32>
    %37 = arith.mulf %29, %36 : vector<8x128xf32>
    %38 = arith.addf %35, %37 : vector<8x128xf32>
    %c0_i32_21 = arith.constant 0 : i32
    %39 = tpu.memref_slice %arg15[%c0_i32_21] : memref<2x!tpu.dma_semaphore, #tpu.memory_space<semaphore_mem>> -> memref<1x!tpu.dma_semaphore, #tpu.memory_space<semaphore_mem>>
    %40 = tpu.memref_squeeze %39 : memref<1x!tpu.dma_semaphore, #tpu.memory_space<semaphore_mem>> -> memref<!tpu.dma_semaphore, #tpu.memory_space<semaphore_mem>>
    tpu.wait_dma2 semaphore(%40 : memref<!tpu.dma_semaphore, #tpu.memory_space<semaphore_mem>>) src(%arg5 : memref<128x384xbf16, #tpu.memory_space<any>>) dst(%arg13 : memref<128x384xbf16, #tpu.memory_space<vmem>>)
    %c1_i32_22 = arith.constant 1 : i32
    %41 = tpu.memref_slice %arg15[%c1_i32_22] : memref<2x!tpu.dma_semaphore, #tpu.memory_space<semaphore_mem>> -> memref<1x!tpu.dma_semaphore, #tpu.memory_space<semaphore_mem>>
    %42 = tpu.memref_squeeze %41 : memref<1x!tpu.dma_semaphore, #tpu.memory_space<semaphore_mem>> -> memref<!tpu.dma_semaphore, #tpu.memory_space<semaphore_mem>>
    tpu.wait_dma2 semaphore(%42 : memref<!tpu.dma_semaphore, #tpu.memory_space<semaphore_mem>>) src(%arg6 : memref<128x384xbf16, #tpu.memory_space<any>>) dst(%arg14 : memref<128x384xbf16, #tpu.memory_space<vmem>>)
    %c8 = arith.constant 8 : index
    %c0_23 = arith.constant 0 : index
    %43 = vector.load %arg12[%c8, %c0_23] : memref<64x384xf32, #tpu.memory_space<vmem>>, vector<8x384xf32>
    %44 = arith.truncf %38 : vector<8x128xf32> to vector<8x128xbf16>
    %c0_24 = arith.constant 0 : index
    %c0_25 = arith.constant 0 : index
    %45 = vector.load %arg2[%c0_24, %c0_25] : memref<128x384xbf16, #tpu.memory_space<vmem>>, vector<128x384xbf16>
    %cst_26 = arith.constant dense<0.000000e+00> : vector<8x384xf32>
    %46 = tpu.matmul %44, %45, %cst_26 {dimension_numbers = #tpu.dot_dimension_numbers<[1], [0], [0], [1], [0, 0, 1, 1], [], []>} : vector<8x128xbf16>, vector<128x384xbf16>, vector<8x384xf32> -> vector<8x384xf32>
    %47 = vector.extract_strided_slice %43 {offsets = [0, 0], sizes = [8, 256], strides = [1, 1]} : vector<8x384xf32> to vector<8x256xf32>
    %48 = vector.extract_strided_slice %46 {offsets = [0, 0], sizes = [8, 256], strides = [1, 1]} : vector<8x384xf32> to vector<8x256xf32>
    %49 = arith.addf %47, %48 : vector<8x256xf32>
    %50 = arith.negf %49 : vector<8x256xf32>
    %51 = math.exp %50 : vector<8x256xf32>
    %cst_27 = arith.constant 1.000000e+00 : f32
    %52 = vector.broadcast %cst_27 : f32 to vector<8x256xf32>
    %53 = arith.addf %52, %51 : vector<8x256xf32>
    %54 = arith.divf %52, %53 : vector<8x256xf32>
    %55 = vector.extract_strided_slice %54 {offsets = [0, 0], sizes = [8, 128], strides = [1, 1]} : vector<8x256xf32> to vector<8x128xf32>
    %56 = vector.extract_strided_slice %54 {offsets = [0, 128], sizes = [8, 128], strides = [1, 1]} : vector<8x256xf32> to vector<8x128xf32>
    %57 = vector.extract_strided_slice %43 {offsets = [0, 256], sizes = [8, 128], strides = [1, 1]} : vector<8x384xf32> to vector<8x128xf32>
    %58 = vector.extract_strided_slice %46 {offsets = [0, 256], sizes = [8, 128], strides = [1, 1]} : vector<8x384xf32> to vector<8x128xf32>
    %59 = arith.addf %58, %11 : vector<8x128xf32>
    %60 = arith.mulf %55, %59 : vector<8x128xf32>
    %61 = arith.addf %57, %60 : vector<8x128xf32>
    %62 = math.tanh %61 : vector<8x128xf32>
    %63 = arith.subf %38, %62 : vector<8x128xf32>
    %64 = arith.mulf %56, %63 : vector<8x128xf32>
    %65 = arith.addf %62, %64 : vector<8x128xf32>
    %66 = arith.truncf %38 : vector<8x128xf32> to vector<8x128xbf16>
    %c0_28 = arith.constant 0 : index
    %c0_29 = arith.constant 0 : index
    %67 = vector.load %arg13[%c0_28, %c0_29] : memref<128x384xbf16, #tpu.memory_space<vmem>>, vector<128x384xbf16>
    %cst_30 = arith.constant dense<0.000000e+00> : vector<8x384xf32>
    %68 = tpu.matmul %66, %67, %cst_30 {dimension_numbers = #tpu.dot_dimension_numbers<[1], [0], [0], [1], [0, 0, 1, 1], [], []>} : vector<8x128xbf16>, vector<128x384xbf16>, vector<8x384xf32> -> vector<8x384xf32>
    %69 = vector.broadcast %13 : vector<1x384xf32> to vector<8x384xf32>
    %70 = arith.addf %68, %69 : vector<8x384xf32>
    %71 = arith.truncf %15 : vector<8x128xf32> to vector<8x128xbf16>
    %c0_31 = arith.constant 0 : index
    %c0_32 = arith.constant 0 : index
    %72 = vector.load %arg14[%c0_31, %c0_32] : memref<128x384xbf16, #tpu.memory_space<vmem>>, vector<128x384xbf16>
    %cst_33 = arith.constant dense<0.000000e+00> : vector<8x384xf32>
    %73 = tpu.matmul %71, %72, %cst_33 {dimension_numbers = #tpu.dot_dimension_numbers<[1], [0], [0], [1], [0, 0, 1, 1], [], []>} : vector<8x128xbf16>, vector<128x384xbf16>, vector<8x384xf32> -> vector<8x384xf32>
    %74 = vector.extract_strided_slice %70 {offsets = [0, 0], sizes = [8, 256], strides = [1, 1]} : vector<8x384xf32> to vector<8x256xf32>
    %75 = vector.extract_strided_slice %73 {offsets = [0, 0], sizes = [8, 256], strides = [1, 1]} : vector<8x384xf32> to vector<8x256xf32>
    %76 = arith.addf %74, %75 : vector<8x256xf32>
    %77 = arith.negf %76 : vector<8x256xf32>
    %78 = math.exp %77 : vector<8x256xf32>
    %cst_34 = arith.constant 1.000000e+00 : f32
    %79 = vector.broadcast %cst_34 : f32 to vector<8x256xf32>
    %80 = arith.addf %79, %78 : vector<8x256xf32>
    %81 = arith.divf %79, %80 : vector<8x256xf32>
    %82 = vector.extract_strided_slice %81 {offsets = [0, 0], sizes = [8, 128], strides = [1, 1]} : vector<8x256xf32> to vector<8x128xf32>
    %83 = vector.extract_strided_slice %81 {offsets = [0, 128], sizes = [8, 128], strides = [1, 1]} : vector<8x256xf32> to vector<8x128xf32>
    %84 = vector.extract_strided_slice %70 {offsets = [0, 256], sizes = [8, 128], strides = [1, 1]} : vector<8x384xf32> to vector<8x128xf32>
    %85 = vector.extract_strided_slice %73 {offsets = [0, 256], sizes = [8, 128], strides = [1, 1]} : vector<8x384xf32> to vector<8x128xf32>
    %86 = arith.addf %85, %12 : vector<8x128xf32>
    %87 = arith.mulf %82, %86 : vector<8x128xf32>
    %88 = arith.addf %84, %87 : vector<8x128xf32>
    %89 = math.tanh %88 : vector<8x128xf32>
    %90 = arith.subf %15, %89 : vector<8x128xf32>
    %91 = arith.mulf %83, %90 : vector<8x128xf32>
    %92 = arith.addf %89, %91 : vector<8x128xf32>
    %c16 = arith.constant 16 : index
    %c0_35 = arith.constant 0 : index
    %93 = vector.load %arg12[%c16, %c0_35] : memref<64x384xf32, #tpu.memory_space<vmem>>, vector<8x384xf32>
    %94 = arith.truncf %65 : vector<8x128xf32> to vector<8x128xbf16>
    %c0_36 = arith.constant 0 : index
    %c0_37 = arith.constant 0 : index
    %95 = vector.load %arg2[%c0_36, %c0_37] : memref<128x384xbf16, #tpu.memory_space<vmem>>, vector<128x384xbf16>
    %cst_38 = arith.constant dense<0.000000e+00> : vector<8x384xf32>
    %96 = tpu.matmul %94, %95, %cst_38 {dimension_numbers = #tpu.dot_dimension_numbers<[1], [0], [0], [1], [0, 0, 1, 1], [], []>} : vector<8x128xbf16>, vector<128x384xbf16>, vector<8x384xf32> -> vector<8x384xf32>
    %97 = vector.extract_strided_slice %93 {offsets = [0, 0], sizes = [8, 256], strides = [1, 1]} : vector<8x384xf32> to vector<8x256xf32>
    %98 = vector.extract_strided_slice %96 {offsets = [0, 0], sizes = [8, 256], strides = [1, 1]} : vector<8x384xf32> to vector<8x256xf32>
    %99 = arith.addf %97, %98 : vector<8x256xf32>
    %100 = arith.negf %99 : vector<8x256xf32>
    %101 = math.exp %100 : vector<8x256xf32>
    %cst_39 = arith.constant 1.000000e+00 : f32
    %102 = vector.broadcast %cst_39 : f32 to vector<8x256xf32>
    %103 = arith.addf %102, %101 : vector<8x256xf32>
    %104 = arith.divf %102, %103 : vector<8x256xf32>
    %105 = vector.extract_strided_slice %104 {offsets = [0, 0], sizes = [8, 128], strides = [1, 1]} : vector<8x256xf32> to vector<8x128xf32>
    %106 = vector.extract_strided_slice %104 {offsets = [0, 128], sizes = [8, 128], strides = [1, 1]} : vector<8x256xf32> to vector<8x128xf32>
    %107 = vector.extract_strided_slice %93 {offsets = [0, 256], sizes = [8, 128], strides = [1, 1]} : vector<8x384xf32> to vector<8x128xf32>
    %108 = vector.extract_strided_slice %96 {offsets = [0, 256], sizes = [8, 128], strides = [1, 1]} : vector<8x384xf32> to vector<8x128xf32>
    %109 = arith.addf %108, %11 : vector<8x128xf32>
    %110 = arith.mulf %105, %109 : vector<8x128xf32>
    %111 = arith.addf %107, %110 : vector<8x128xf32>
    %112 = math.tanh %111 : vector<8x128xf32>
    %113 = arith.subf %65, %112 : vector<8x128xf32>
    %114 = arith.mulf %106, %113 : vector<8x128xf32>
    %115 = arith.addf %112, %114 : vector<8x128xf32>
    %116 = arith.truncf %65 : vector<8x128xf32> to vector<8x128xbf16>
    %c0_40 = arith.constant 0 : index
    %c0_41 = arith.constant 0 : index
    %117 = vector.load %arg13[%c0_40, %c0_41] : memref<128x384xbf16, #tpu.memory_space<vmem>>, vector<128x384xbf16>
    %cst_42 = arith.constant dense<0.000000e+00> : vector<8x384xf32>
    %118 = tpu.matmul %116, %117, %cst_42 {dimension_numbers = #tpu.dot_dimension_numbers<[1], [0], [0], [1], [0, 0, 1, 1], [], []>} : vector<8x128xbf16>, vector<128x384xbf16>, vector<8x384xf32> -> vector<8x384xf32>
    %119 = vector.broadcast %13 : vector<1x384xf32> to vector<8x384xf32>
    %120 = arith.addf %118, %119 : vector<8x384xf32>
    %121 = arith.truncf %92 : vector<8x128xf32> to vector<8x128xbf16>
    %c0_43 = arith.constant 0 : index
    %c0_44 = arith.constant 0 : index
    %122 = vector.load %arg14[%c0_43, %c0_44] : memref<128x384xbf16, #tpu.memory_space<vmem>>, vector<128x384xbf16>
    %cst_45 = arith.constant dense<0.000000e+00> : vector<8x384xf32>
    %123 = tpu.matmul %121, %122, %cst_45 {dimension_numbers = #tpu.dot_dimension_numbers<[1], [0], [0], [1], [0, 0, 1, 1], [], []>} : vector<8x128xbf16>, vector<128x384xbf16>, vector<8x384xf32> -> vector<8x384xf32>
    %124 = vector.extract_strided_slice %120 {offsets = [0, 0], sizes = [8, 256], strides = [1, 1]} : vector<8x384xf32> to vector<8x256xf32>
    %125 = vector.extract_strided_slice %123 {offsets = [0, 0], sizes = [8, 256], strides = [1, 1]} : vector<8x384xf32> to vector<8x256xf32>
    %126 = arith.addf %124, %125 : vector<8x256xf32>
    %127 = arith.negf %126 : vector<8x256xf32>
    %128 = math.exp %127 : vector<8x256xf32>
    %cst_46 = arith.constant 1.000000e+00 : f32
    %129 = vector.broadcast %cst_46 : f32 to vector<8x256xf32>
    %130 = arith.addf %129, %128 : vector<8x256xf32>
    %131 = arith.divf %129, %130 : vector<8x256xf32>
    %132 = vector.extract_strided_slice %131 {offsets = [0, 0], sizes = [8, 128], strides = [1, 1]} : vector<8x256xf32> to vector<8x128xf32>
    %133 = vector.extract_strided_slice %131 {offsets = [0, 128], sizes = [8, 128], strides = [1, 1]} : vector<8x256xf32> to vector<8x128xf32>
    %134 = vector.extract_strided_slice %120 {offsets = [0, 256], sizes = [8, 128], strides = [1, 1]} : vector<8x384xf32> to vector<8x128xf32>
    %135 = vector.extract_strided_slice %123 {offsets = [0, 256], sizes = [8, 128], strides = [1, 1]} : vector<8x384xf32> to vector<8x128xf32>
    %136 = arith.addf %135, %12 : vector<8x128xf32>
    %137 = arith.mulf %132, %136 : vector<8x128xf32>
    %138 = arith.addf %134, %137 : vector<8x128xf32>
    %139 = math.tanh %138 : vector<8x128xf32>
    %140 = arith.subf %92, %139 : vector<8x128xf32>
    %141 = arith.mulf %133, %140 : vector<8x128xf32>
    %142 = arith.addf %139, %141 : vector<8x128xf32>
    %c24 = arith.constant 24 : index
    %c0_47 = arith.constant 0 : index
    %143 = vector.load %arg12[%c24, %c0_47] : memref<64x384xf32, #tpu.memory_space<vmem>>, vector<8x384xf32>
    %144 = arith.truncf %115 : vector<8x128xf32> to vector<8x128xbf16>
    %c0_48 = arith.constant 0 : index
    %c0_49 = arith.constant 0 : index
    %145 = vector.load %arg2[%c0_48, %c0_49] : memref<128x384xbf16, #tpu.memory_space<vmem>>, vector<128x384xbf16>
    %cst_50 = arith.constant dense<0.000000e+00> : vector<8x384xf32>
    %146 = tpu.matmul %144, %145, %cst_50 {dimension_numbers = #tpu.dot_dimension_numbers<[1], [0], [0], [1], [0, 0, 1, 1], [], []>} : vector<8x128xbf16>, vector<128x384xbf16>, vector<8x384xf32> -> vector<8x384xf32>
    %147 = vector.extract_strided_slice %143 {offsets = [0, 0], sizes = [8, 256], strides = [1, 1]} : vector<8x384xf32> to vector<8x256xf32>
    %148 = vector.extract_strided_slice %146 {offsets = [0, 0], sizes = [8, 256], strides = [1, 1]} : vector<8x384xf32> to vector<8x256xf32>
    %149 = arith.addf %147, %148 : vector<8x256xf32>
    %150 = arith.negf %149 : vector<8x256xf32>
    %151 = math.exp %150 : vector<8x256xf32>
    %cst_51 = arith.constant 1.000000e+00 : f32
    %152 = vector.broadcast %cst_51 : f32 to vector<8x256xf32>
    %153 = arith.addf %152, %151 : vector<8x256xf32>
    %154 = arith.divf %152, %153 : vector<8x256xf32>
    %155 = vector.extract_strided_slice %154 {offsets = [0, 0], sizes = [8, 128], strides = [1, 1]} : vector<8x256xf32> to vector<8x128xf32>
    %156 = vector.extract_strided_slice %154 {offsets = [0, 128], sizes = [8, 128], strides = [1, 1]} : vector<8x256xf32> to vector<8x128xf32>
    %157 = vector.extract_strided_slice %143 {offsets = [0, 256], sizes = [8, 128], strides = [1, 1]} : vector<8x384xf32> to vector<8x128xf32>
    %158 = vector.extract_strided_slice %146 {offsets = [0, 256], sizes = [8, 128], strides = [1, 1]} : vector<8x384xf32> to vector<8x128xf32>
    %159 = arith.addf %158, %11 : vector<8x128xf32>
    %160 = arith.mulf %155, %159 : vector<8x128xf32>
    %161 = arith.addf %157, %160 : vector<8x128xf32>
    %162 = math.tanh %161 : vector<8x128xf32>
    %163 = arith.subf %115, %162 : vector<8x128xf32>
    %164 = arith.mulf %156, %163 : vector<8x128xf32>
    %165 = arith.addf %162, %164 : vector<8x128xf32>
    %166 = arith.truncf %115 : vector<8x128xf32> to vector<8x128xbf16>
    %c0_52 = arith.constant 0 : index
    %c0_53 = arith.constant 0 : index
    %167 = vector.load %arg13[%c0_52, %c0_53] : memref<128x384xbf16, #tpu.memory_space<vmem>>, vector<128x384xbf16>
    %cst_54 = arith.constant dense<0.000000e+00> : vector<8x384xf32>
    %168 = tpu.matmul %166, %167, %cst_54 {dimension_numbers = #tpu.dot_dimension_numbers<[1], [0], [0], [1], [0, 0, 1, 1], [], []>} : vector<8x128xbf16>, vector<128x384xbf16>, vector<8x384xf32> -> vector<8x384xf32>
    %169 = vector.broadcast %13 : vector<1x384xf32> to vector<8x384xf32>
    %170 = arith.addf %168, %169 : vector<8x384xf32>
    %171 = arith.truncf %142 : vector<8x128xf32> to vector<8x128xbf16>
    %c0_55 = arith.constant 0 : index
    %c0_56 = arith.constant 0 : index
    %172 = vector.load %arg14[%c0_55, %c0_56] : memref<128x384xbf16, #tpu.memory_space<vmem>>, vector<128x384xbf16>
    %cst_57 = arith.constant dense<0.000000e+00> : vector<8x384xf32>
    %173 = tpu.matmul %171, %172, %cst_57 {dimension_numbers = #tpu.dot_dimension_numbers<[1], [0], [0], [1], [0, 0, 1, 1], [], []>} : vector<8x128xbf16>, vector<128x384xbf16>, vector<8x384xf32> -> vector<8x384xf32>
    %174 = vector.extract_strided_slice %170 {offsets = [0, 0], sizes = [8, 256], strides = [1, 1]} : vector<8x384xf32> to vector<8x256xf32>
    %175 = vector.extract_strided_slice %173 {offsets = [0, 0], sizes = [8, 256], strides = [1, 1]} : vector<8x384xf32> to vector<8x256xf32>
    %176 = arith.addf %174, %175 : vector<8x256xf32>
    %177 = arith.negf %176 : vector<8x256xf32>
    %178 = math.exp %177 : vector<8x256xf32>
    %cst_58 = arith.constant 1.000000e+00 : f32
    %179 = vector.broadcast %cst_58 : f32 to vector<8x256xf32>
    %180 = arith.addf %179, %178 : vector<8x256xf32>
    %181 = arith.divf %179, %180 : vector<8x256xf32>
    %182 = vector.extract_strided_slice %181 {offsets = [0, 0], sizes = [8, 128], strides = [1, 1]} : vector<8x256xf32> to vector<8x128xf32>
    %183 = vector.extract_strided_slice %181 {offsets = [0, 128], sizes = [8, 128], strides = [1, 1]} : vector<8x256xf32> to vector<8x128xf32>
    %184 = vector.extract_strided_slice %170 {offsets = [0, 256], sizes = [8, 128], strides = [1, 1]} : vector<8x384xf32> to vector<8x128xf32>
    %185 = vector.extract_strided_slice %173 {offsets = [0, 256], sizes = [8, 128], strides = [1, 1]} : vector<8x384xf32> to vector<8x128xf32>
    %186 = arith.addf %185, %12 : vector<8x128xf32>
    %187 = arith.mulf %182, %186 : vector<8x128xf32>
    %188 = arith.addf %184, %187 : vector<8x128xf32>
    %189 = math.tanh %188 : vector<8x128xf32>
    %190 = arith.subf %142, %189 : vector<8x128xf32>
    %191 = arith.mulf %183, %190 : vector<8x128xf32>
    %192 = arith.addf %189, %191 : vector<8x128xf32>
    %c32 = arith.constant 32 : index
    %c0_59 = arith.constant 0 : index
    %193 = vector.load %arg12[%c32, %c0_59] : memref<64x384xf32, #tpu.memory_space<vmem>>, vector<8x384xf32>
    %194 = arith.truncf %165 : vector<8x128xf32> to vector<8x128xbf16>
    %c0_60 = arith.constant 0 : index
    %c0_61 = arith.constant 0 : index
    %195 = vector.load %arg2[%c0_60, %c0_61] : memref<128x384xbf16, #tpu.memory_space<vmem>>, vector<128x384xbf16>
    %cst_62 = arith.constant dense<0.000000e+00> : vector<8x384xf32>
    %196 = tpu.matmul %194, %195, %cst_62 {dimension_numbers = #tpu.dot_dimension_numbers<[1], [0], [0], [1], [0, 0, 1, 1], [], []>} : vector<8x128xbf16>, vector<128x384xbf16>, vector<8x384xf32> -> vector<8x384xf32>
    %197 = vector.extract_strided_slice %193 {offsets = [0, 0], sizes = [8, 256], strides = [1, 1]} : vector<8x384xf32> to vector<8x256xf32>
    %198 = vector.extract_strided_slice %196 {offsets = [0, 0], sizes = [8, 256], strides = [1, 1]} : vector<8x384xf32> to vector<8x256xf32>
    %199 = arith.addf %197, %198 : vector<8x256xf32>
    %200 = arith.negf %199 : vector<8x256xf32>
    %201 = math.exp %200 : vector<8x256xf32>
    %cst_63 = arith.constant 1.000000e+00 : f32
    %202 = vector.broadcast %cst_63 : f32 to vector<8x256xf32>
    %203 = arith.addf %202, %201 : vector<8x256xf32>
    %204 = arith.divf %202, %203 : vector<8x256xf32>
    %205 = vector.extract_strided_slice %204 {offsets = [0, 0], sizes = [8, 128], strides = [1, 1]} : vector<8x256xf32> to vector<8x128xf32>
    %206 = vector.extract_strided_slice %204 {offsets = [0, 128], sizes = [8, 128], strides = [1, 1]} : vector<8x256xf32> to vector<8x128xf32>
    %207 = vector.extract_strided_slice %193 {offsets = [0, 256], sizes = [8, 128], strides = [1, 1]} : vector<8x384xf32> to vector<8x128xf32>
    %208 = vector.extract_strided_slice %196 {offsets = [0, 256], sizes = [8, 128], strides = [1, 1]} : vector<8x384xf32> to vector<8x128xf32>
    %209 = arith.addf %208, %11 : vector<8x128xf32>
    %210 = arith.mulf %205, %209 : vector<8x128xf32>
    %211 = arith.addf %207, %210 : vector<8x128xf32>
    %212 = math.tanh %211 : vector<8x128xf32>
    %213 = arith.subf %165, %212 : vector<8x128xf32>
    %214 = arith.mulf %206, %213 : vector<8x128xf32>
    %215 = arith.addf %212, %214 : vector<8x128xf32>
    %216 = arith.truncf %165 : vector<8x128xf32> to vector<8x128xbf16>
    %c0_64 = arith.constant 0 : index
    %c0_65 = arith.constant 0 : index
    %217 = vector.load %arg13[%c0_64, %c0_65] : memref<128x384xbf16, #tpu.memory_space<vmem>>, vector<128x384xbf16>
    %cst_66 = arith.constant dense<0.000000e+00> : vector<8x384xf32>
    %218 = tpu.matmul %216, %217, %cst_66 {dimension_numbers = #tpu.dot_dimension_numbers<[1], [0], [0], [1], [0, 0, 1, 1], [], []>} : vector<8x128xbf16>, vector<128x384xbf16>, vector<8x384xf32> -> vector<8x384xf32>
    %219 = vector.broadcast %13 : vector<1x384xf32> to vector<8x384xf32>
    %220 = arith.addf %218, %219 : vector<8x384xf32>
    %221 = arith.truncf %192 : vector<8x128xf32> to vector<8x128xbf16>
    %c0_67 = arith.constant 0 : index
    %c0_68 = arith.constant 0 : index
    %222 = vector.load %arg14[%c0_67, %c0_68] : memref<128x384xbf16, #tpu.memory_space<vmem>>, vector<128x384xbf16>
    %cst_69 = arith.constant dense<0.000000e+00> : vector<8x384xf32>
    %223 = tpu.matmul %221, %222, %cst_69 {dimension_numbers = #tpu.dot_dimension_numbers<[1], [0], [0], [1], [0, 0, 1, 1], [], []>} : vector<8x128xbf16>, vector<128x384xbf16>, vector<8x384xf32> -> vector<8x384xf32>
    %224 = vector.extract_strided_slice %220 {offsets = [0, 0], sizes = [8, 256], strides = [1, 1]} : vector<8x384xf32> to vector<8x256xf32>
    %225 = vector.extract_strided_slice %223 {offsets = [0, 0], sizes = [8, 256], strides = [1, 1]} : vector<8x384xf32> to vector<8x256xf32>
    %226 = arith.addf %224, %225 : vector<8x256xf32>
    %227 = arith.negf %226 : vector<8x256xf32>
    %228 = math.exp %227 : vector<8x256xf32>
    %cst_70 = arith.constant 1.000000e+00 : f32
    %229 = vector.broadcast %cst_70 : f32 to vector<8x256xf32>
    %230 = arith.addf %229, %228 : vector<8x256xf32>
    %231 = arith.divf %229, %230 : vector<8x256xf32>
    %232 = vector.extract_strided_slice %231 {offsets = [0, 0], sizes = [8, 128], strides = [1, 1]} : vector<8x256xf32> to vector<8x128xf32>
    %233 = vector.extract_strided_slice %231 {offsets = [0, 128], sizes = [8, 128], strides = [1, 1]} : vector<8x256xf32> to vector<8x128xf32>
    %234 = vector.extract_strided_slice %220 {offsets = [0, 256], sizes = [8, 128], strides = [1, 1]} : vector<8x384xf32> to vector<8x128xf32>
    %235 = vector.extract_strided_slice %223 {offsets = [0, 256], sizes = [8, 128], strides = [1, 1]} : vector<8x384xf32> to vector<8x128xf32>
    %236 = arith.addf %235, %12 : vector<8x128xf32>
    %237 = arith.mulf %232, %236 : vector<8x128xf32>
    %238 = arith.addf %234, %237 : vector<8x128xf32>
    %239 = math.tanh %238 : vector<8x128xf32>
    %240 = arith.subf %192, %239 : vector<8x128xf32>
    %241 = arith.mulf %233, %240 : vector<8x128xf32>
    %242 = arith.addf %239, %241 : vector<8x128xf32>
    %c40 = arith.constant 40 : index
    %c0_71 = arith.constant 0 : index
    %243 = vector.load %arg12[%c40, %c0_71] : memref<64x384xf32, #tpu.memory_space<vmem>>, vector<8x384xf32>
    %244 = arith.truncf %215 : vector<8x128xf32> to vector<8x128xbf16>
    %c0_72 = arith.constant 0 : index
    %c0_73 = arith.constant 0 : index
    %245 = vector.load %arg2[%c0_72, %c0_73] : memref<128x384xbf16, #tpu.memory_space<vmem>>, vector<128x384xbf16>
    %cst_74 = arith.constant dense<0.000000e+00> : vector<8x384xf32>
    %246 = tpu.matmul %244, %245, %cst_74 {dimension_numbers = #tpu.dot_dimension_numbers<[1], [0], [0], [1], [0, 0, 1, 1], [], []>} : vector<8x128xbf16>, vector<128x384xbf16>, vector<8x384xf32> -> vector<8x384xf32>
    %247 = vector.extract_strided_slice %243 {offsets = [0, 0], sizes = [8, 256], strides = [1, 1]} : vector<8x384xf32> to vector<8x256xf32>
    %248 = vector.extract_strided_slice %246 {offsets = [0, 0], sizes = [8, 256], strides = [1, 1]} : vector<8x384xf32> to vector<8x256xf32>
    %249 = arith.addf %247, %248 : vector<8x256xf32>
    %250 = arith.negf %249 : vector<8x256xf32>
    %251 = math.exp %250 : vector<8x256xf32>
    %cst_75 = arith.constant 1.000000e+00 : f32
    %252 = vector.broadcast %cst_75 : f32 to vector<8x256xf32>
    %253 = arith.addf %252, %251 : vector<8x256xf32>
    %254 = arith.divf %252, %253 : vector<8x256xf32>
    %255 = vector.extract_strided_slice %254 {offsets = [0, 0], sizes = [8, 128], strides = [1, 1]} : vector<8x256xf32> to vector<8x128xf32>
    %256 = vector.extract_strided_slice %254 {offsets = [0, 128], sizes = [8, 128], strides = [1, 1]} : vector<8x256xf32> to vector<8x128xf32>
    %257 = vector.extract_strided_slice %243 {offsets = [0, 256], sizes = [8, 128], strides = [1, 1]} : vector<8x384xf32> to vector<8x128xf32>
    %258 = vector.extract_strided_slice %246 {offsets = [0, 256], sizes = [8, 128], strides = [1, 1]} : vector<8x384xf32> to vector<8x128xf32>
    %259 = arith.addf %258, %11 : vector<8x128xf32>
    %260 = arith.mulf %255, %259 : vector<8x128xf32>
    %261 = arith.addf %257, %260 : vector<8x128xf32>
    %262 = math.tanh %261 : vector<8x128xf32>
    %263 = arith.subf %215, %262 : vector<8x128xf32>
    %264 = arith.mulf %256, %263 : vector<8x128xf32>
    %265 = arith.addf %262, %264 : vector<8x128xf32>
    %266 = arith.truncf %215 : vector<8x128xf32> to vector<8x128xbf16>
    %c0_76 = arith.constant 0 : index
    %c0_77 = arith.constant 0 : index
    %267 = vector.load %arg13[%c0_76, %c0_77] : memref<128x384xbf16, #tpu.memory_space<vmem>>, vector<128x384xbf16>
    %cst_78 = arith.constant dense<0.000000e+00> : vector<8x384xf32>
    %268 = tpu.matmul %266, %267, %cst_78 {dimension_numbers = #tpu.dot_dimension_numbers<[1], [0], [0], [1], [0, 0, 1, 1], [], []>} : vector<8x128xbf16>, vector<128x384xbf16>, vector<8x384xf32> -> vector<8x384xf32>
    %269 = vector.broadcast %13 : vector<1x384xf32> to vector<8x384xf32>
    %270 = arith.addf %268, %269 : vector<8x384xf32>
    %271 = arith.truncf %242 : vector<8x128xf32> to vector<8x128xbf16>
    %c0_79 = arith.constant 0 : index
    %c0_80 = arith.constant 0 : index
    %272 = vector.load %arg14[%c0_79, %c0_80] : memref<128x384xbf16, #tpu.memory_space<vmem>>, vector<128x384xbf16>
    %cst_81 = arith.constant dense<0.000000e+00> : vector<8x384xf32>
    %273 = tpu.matmul %271, %272, %cst_81 {dimension_numbers = #tpu.dot_dimension_numbers<[1], [0], [0], [1], [0, 0, 1, 1], [], []>} : vector<8x128xbf16>, vector<128x384xbf16>, vector<8x384xf32> -> vector<8x384xf32>
    %274 = vector.extract_strided_slice %270 {offsets = [0, 0], sizes = [8, 256], strides = [1, 1]} : vector<8x384xf32> to vector<8x256xf32>
    %275 = vector.extract_strided_slice %273 {offsets = [0, 0], sizes = [8, 256], strides = [1, 1]} : vector<8x384xf32> to vector<8x256xf32>
    %276 = arith.addf %274, %275 : vector<8x256xf32>
    %277 = arith.negf %276 : vector<8x256xf32>
    %278 = math.exp %277 : vector<8x256xf32>
    %cst_82 = arith.constant 1.000000e+00 : f32
    %279 = vector.broadcast %cst_82 : f32 to vector<8x256xf32>
    %280 = arith.addf %279, %278 : vector<8x256xf32>
    %281 = arith.divf %279, %280 : vector<8x256xf32>
    %282 = vector.extract_strided_slice %281 {offsets = [0, 0], sizes = [8, 128], strides = [1, 1]} : vector<8x256xf32> to vector<8x128xf32>
    %283 = vector.extract_strided_slice %281 {offsets = [0, 128], sizes = [8, 128], strides = [1, 1]} : vector<8x256xf32> to vector<8x128xf32>
    %284 = vector.extract_strided_slice %270 {offsets = [0, 256], sizes = [8, 128], strides = [1, 1]} : vector<8x384xf32> to vector<8x128xf32>
    %285 = vector.extract_strided_slice %273 {offsets = [0, 256], sizes = [8, 128], strides = [1, 1]} : vector<8x384xf32> to vector<8x128xf32>
    %286 = arith.addf %285, %12 : vector<8x128xf32>
    %287 = arith.mulf %282, %286 : vector<8x128xf32>
    %288 = arith.addf %284, %287 : vector<8x128xf32>
    %289 = math.tanh %288 : vector<8x128xf32>
    %290 = arith.subf %242, %289 : vector<8x128xf32>
    %291 = arith.mulf %283, %290 : vector<8x128xf32>
    %292 = arith.addf %289, %291 : vector<8x128xf32>
    %c48 = arith.constant 48 : index
    %c0_83 = arith.constant 0 : index
    %293 = vector.load %arg12[%c48, %c0_83] : memref<64x384xf32, #tpu.memory_space<vmem>>, vector<8x384xf32>
    %294 = arith.truncf %265 : vector<8x128xf32> to vector<8x128xbf16>
    %c0_84 = arith.constant 0 : index
    %c0_85 = arith.constant 0 : index
    %295 = vector.load %arg2[%c0_84, %c0_85] : memref<128x384xbf16, #tpu.memory_space<vmem>>, vector<128x384xbf16>
    %cst_86 = arith.constant dense<0.000000e+00> : vector<8x384xf32>
    %296 = tpu.matmul %294, %295, %cst_86 {dimension_numbers = #tpu.dot_dimension_numbers<[1], [0], [0], [1], [0, 0, 1, 1], [], []>} : vector<8x128xbf16>, vector<128x384xbf16>, vector<8x384xf32> -> vector<8x384xf32>
    %297 = vector.extract_strided_slice %293 {offsets = [0, 0], sizes = [8, 256], strides = [1, 1]} : vector<8x384xf32> to vector<8x256xf32>
    %298 = vector.extract_strided_slice %296 {offsets = [0, 0], sizes = [8, 256], strides = [1, 1]} : vector<8x384xf32> to vector<8x256xf32>
    %299 = arith.addf %297, %298 : vector<8x256xf32>
    %300 = arith.negf %299 : vector<8x256xf32>
    %301 = math.exp %300 : vector<8x256xf32>
    %cst_87 = arith.constant 1.000000e+00 : f32
    %302 = vector.broadcast %cst_87 : f32 to vector<8x256xf32>
    %303 = arith.addf %302, %301 : vector<8x256xf32>
    %304 = arith.divf %302, %303 : vector<8x256xf32>
    %305 = vector.extract_strided_slice %304 {offsets = [0, 0], sizes = [8, 128], strides = [1, 1]} : vector<8x256xf32> to vector<8x128xf32>
    %306 = vector.extract_strided_slice %304 {offsets = [0, 128], sizes = [8, 128], strides = [1, 1]} : vector<8x256xf32> to vector<8x128xf32>
    %307 = vector.extract_strided_slice %293 {offsets = [0, 256], sizes = [8, 128], strides = [1, 1]} : vector<8x384xf32> to vector<8x128xf32>
    %308 = vector.extract_strided_slice %296 {offsets = [0, 256], sizes = [8, 128], strides = [1, 1]} : vector<8x384xf32> to vector<8x128xf32>
    %309 = arith.addf %308, %11 : vector<8x128xf32>
    %310 = arith.mulf %305, %309 : vector<8x128xf32>
    %311 = arith.addf %307, %310 : vector<8x128xf32>
    %312 = math.tanh %311 : vector<8x128xf32>
    %313 = arith.subf %265, %312 : vector<8x128xf32>
    %314 = arith.mulf %306, %313 : vector<8x128xf32>
    %315 = arith.addf %312, %314 : vector<8x128xf32>
    %316 = arith.truncf %265 : vector<8x128xf32> to vector<8x128xbf16>
    %c0_88 = arith.constant 0 : index
    %c0_89 = arith.constant 0 : index
    %317 = vector.load %arg13[%c0_88, %c0_89] : memref<128x384xbf16, #tpu.memory_space<vmem>>, vector<128x384xbf16>
    %cst_90 = arith.constant dense<0.000000e+00> : vector<8x384xf32>
    %318 = tpu.matmul %316, %317, %cst_90 {dimension_numbers = #tpu.dot_dimension_numbers<[1], [0], [0], [1], [0, 0, 1, 1], [], []>} : vector<8x128xbf16>, vector<128x384xbf16>, vector<8x384xf32> -> vector<8x384xf32>
    %319 = vector.broadcast %13 : vector<1x384xf32> to vector<8x384xf32>
    %320 = arith.addf %318, %319 : vector<8x384xf32>
    %321 = arith.truncf %292 : vector<8x128xf32> to vector<8x128xbf16>
    %c0_91 = arith.constant 0 : index
    %c0_92 = arith.constant 0 : index
    %322 = vector.load %arg14[%c0_91, %c0_92] : memref<128x384xbf16, #tpu.memory_space<vmem>>, vector<128x384xbf16>
    %cst_93 = arith.constant dense<0.000000e+00> : vector<8x384xf32>
    %323 = tpu.matmul %321, %322, %cst_93 {dimension_numbers = #tpu.dot_dimension_numbers<[1], [0], [0], [1], [0, 0, 1, 1], [], []>} : vector<8x128xbf16>, vector<128x384xbf16>, vector<8x384xf32> -> vector<8x384xf32>
    %324 = vector.extract_strided_slice %320 {offsets = [0, 0], sizes = [8, 256], strides = [1, 1]} : vector<8x384xf32> to vector<8x256xf32>
    %325 = vector.extract_strided_slice %323 {offsets = [0, 0], sizes = [8, 256], strides = [1, 1]} : vector<8x384xf32> to vector<8x256xf32>
    %326 = arith.addf %324, %325 : vector<8x256xf32>
    %327 = arith.negf %326 : vector<8x256xf32>
    %328 = math.exp %327 : vector<8x256xf32>
    %cst_94 = arith.constant 1.000000e+00 : f32
    %329 = vector.broadcast %cst_94 : f32 to vector<8x256xf32>
    %330 = arith.addf %329, %328 : vector<8x256xf32>
    %331 = arith.divf %329, %330 : vector<8x256xf32>
    %332 = vector.extract_strided_slice %331 {offsets = [0, 0], sizes = [8, 128], strides = [1, 1]} : vector<8x256xf32> to vector<8x128xf32>
    %333 = vector.extract_strided_slice %331 {offsets = [0, 128], sizes = [8, 128], strides = [1, 1]} : vector<8x256xf32> to vector<8x128xf32>
    %334 = vector.extract_strided_slice %320 {offsets = [0, 256], sizes = [8, 128], strides = [1, 1]} : vector<8x384xf32> to vector<8x128xf32>
    %335 = vector.extract_strided_slice %323 {offsets = [0, 256], sizes = [8, 128], strides = [1, 1]} : vector<8x384xf32> to vector<8x128xf32>
    %336 = arith.addf %335, %12 : vector<8x128xf32>
    %337 = arith.mulf %332, %336 : vector<8x128xf32>
    %338 = arith.addf %334, %337 : vector<8x128xf32>
    %339 = math.tanh %338 : vector<8x128xf32>
    %340 = arith.subf %292, %339 : vector<8x128xf32>
    %341 = arith.mulf %333, %340 : vector<8x128xf32>
    %342 = arith.addf %339, %341 : vector<8x128xf32>
    %c56 = arith.constant 56 : index
    %c0_95 = arith.constant 0 : index
    %343 = vector.load %arg12[%c56, %c0_95] : memref<64x384xf32, #tpu.memory_space<vmem>>, vector<8x384xf32>
    %344 = arith.truncf %315 : vector<8x128xf32> to vector<8x128xbf16>
    %c0_96 = arith.constant 0 : index
    %c0_97 = arith.constant 0 : index
    %345 = vector.load %arg2[%c0_96, %c0_97] : memref<128x384xbf16, #tpu.memory_space<vmem>>, vector<128x384xbf16>
    %cst_98 = arith.constant dense<0.000000e+00> : vector<8x384xf32>
    %346 = tpu.matmul %344, %345, %cst_98 {dimension_numbers = #tpu.dot_dimension_numbers<[1], [0], [0], [1], [0, 0, 1, 1], [], []>} : vector<8x128xbf16>, vector<128x384xbf16>, vector<8x384xf32> -> vector<8x384xf32>
    %347 = vector.extract_strided_slice %343 {offsets = [0, 0], sizes = [8, 256], strides = [1, 1]} : vector<8x384xf32> to vector<8x256xf32>
    %348 = vector.extract_strided_slice %346 {offsets = [0, 0], sizes = [8, 256], strides = [1, 1]} : vector<8x384xf32> to vector<8x256xf32>
    %349 = arith.addf %347, %348 : vector<8x256xf32>
    %350 = arith.negf %349 : vector<8x256xf32>
    %351 = math.exp %350 : vector<8x256xf32>
    %cst_99 = arith.constant 1.000000e+00 : f32
    %352 = vector.broadcast %cst_99 : f32 to vector<8x256xf32>
    %353 = arith.addf %352, %351 : vector<8x256xf32>
    %354 = arith.divf %352, %353 : vector<8x256xf32>
    %355 = vector.extract_strided_slice %354 {offsets = [0, 0], sizes = [8, 128], strides = [1, 1]} : vector<8x256xf32> to vector<8x128xf32>
    %356 = vector.extract_strided_slice %354 {offsets = [0, 128], sizes = [8, 128], strides = [1, 1]} : vector<8x256xf32> to vector<8x128xf32>
    %357 = vector.extract_strided_slice %343 {offsets = [0, 256], sizes = [8, 128], strides = [1, 1]} : vector<8x384xf32> to vector<8x128xf32>
    %358 = vector.extract_strided_slice %346 {offsets = [0, 256], sizes = [8, 128], strides = [1, 1]} : vector<8x384xf32> to vector<8x128xf32>
    %359 = arith.addf %358, %11 : vector<8x128xf32>
    %360 = arith.mulf %355, %359 : vector<8x128xf32>
    %361 = arith.addf %357, %360 : vector<8x128xf32>
    %362 = math.tanh %361 : vector<8x128xf32>
    %363 = arith.subf %315, %362 : vector<8x128xf32>
    %364 = arith.mulf %356, %363 : vector<8x128xf32>
    %365 = arith.addf %362, %364 : vector<8x128xf32>
    %366 = arith.truncf %315 : vector<8x128xf32> to vector<8x128xbf16>
    %c0_100 = arith.constant 0 : index
    %c0_101 = arith.constant 0 : index
    %367 = vector.load %arg13[%c0_100, %c0_101] : memref<128x384xbf16, #tpu.memory_space<vmem>>, vector<128x384xbf16>
    %cst_102 = arith.constant dense<0.000000e+00> : vector<8x384xf32>
    %368 = tpu.matmul %366, %367, %cst_102 {dimension_numbers = #tpu.dot_dimension_numbers<[1], [0], [0], [1], [0, 0, 1, 1], [], []>} : vector<8x128xbf16>, vector<128x384xbf16>, vector<8x384xf32> -> vector<8x384xf32>
    %369 = vector.broadcast %13 : vector<1x384xf32> to vector<8x384xf32>
    %370 = arith.addf %368, %369 : vector<8x384xf32>
    %371 = arith.truncf %342 : vector<8x128xf32> to vector<8x128xbf16>
    %c0_103 = arith.constant 0 : index
    %c0_104 = arith.constant 0 : index
    %372 = vector.load %arg14[%c0_103, %c0_104] : memref<128x384xbf16, #tpu.memory_space<vmem>>, vector<128x384xbf16>
    %cst_105 = arith.constant dense<0.000000e+00> : vector<8x384xf32>
    %373 = tpu.matmul %371, %372, %cst_105 {dimension_numbers = #tpu.dot_dimension_numbers<[1], [0], [0], [1], [0, 0, 1, 1], [], []>} : vector<8x128xbf16>, vector<128x384xbf16>, vector<8x384xf32> -> vector<8x384xf32>
    %374 = vector.extract_strided_slice %370 {offsets = [0, 0], sizes = [8, 256], strides = [1, 1]} : vector<8x384xf32> to vector<8x256xf32>
    %375 = vector.extract_strided_slice %373 {offsets = [0, 0], sizes = [8, 256], strides = [1, 1]} : vector<8x384xf32> to vector<8x256xf32>
    %376 = arith.addf %374, %375 : vector<8x256xf32>
    %377 = arith.negf %376 : vector<8x256xf32>
    %378 = math.exp %377 : vector<8x256xf32>
    %cst_106 = arith.constant 1.000000e+00 : f32
    %379 = vector.broadcast %cst_106 : f32 to vector<8x256xf32>
    %380 = arith.addf %379, %378 : vector<8x256xf32>
    %381 = arith.divf %379, %380 : vector<8x256xf32>
    %382 = vector.extract_strided_slice %381 {offsets = [0, 0], sizes = [8, 128], strides = [1, 1]} : vector<8x256xf32> to vector<8x128xf32>
    %383 = vector.extract_strided_slice %381 {offsets = [0, 128], sizes = [8, 128], strides = [1, 1]} : vector<8x256xf32> to vector<8x128xf32>
    %384 = vector.extract_strided_slice %370 {offsets = [0, 256], sizes = [8, 128], strides = [1, 1]} : vector<8x384xf32> to vector<8x128xf32>
    %385 = vector.extract_strided_slice %373 {offsets = [0, 256], sizes = [8, 128], strides = [1, 1]} : vector<8x384xf32> to vector<8x128xf32>
    %386 = arith.addf %385, %12 : vector<8x128xf32>
    %387 = arith.mulf %382, %386 : vector<8x128xf32>
    %388 = arith.addf %384, %387 : vector<8x128xf32>
    %389 = math.tanh %388 : vector<8x128xf32>
    %390 = arith.subf %342, %389 : vector<8x128xf32>
    %391 = arith.mulf %383, %390 : vector<8x128xf32>
    %392 = arith.addf %389, %391 : vector<8x128xf32>
    %393 = arith.truncf %365 : vector<8x128xf32> to vector<8x128xbf16>
    %c0_107 = arith.constant 0 : index
    %c0_108 = arith.constant 0 : index
    %394 = vector.load %arg13[%c0_107, %c0_108] : memref<128x384xbf16, #tpu.memory_space<vmem>>, vector<128x384xbf16>
    %cst_109 = arith.constant dense<0.000000e+00> : vector<8x384xf32>
    %395 = tpu.matmul %393, %394, %cst_109 {dimension_numbers = #tpu.dot_dimension_numbers<[1], [0], [0], [1], [0, 0, 1, 1], [], []>} : vector<8x128xbf16>, vector<128x384xbf16>, vector<8x384xf32> -> vector<8x384xf32>
    %396 = vector.broadcast %13 : vector<1x384xf32> to vector<8x384xf32>
    %397 = arith.addf %395, %396 : vector<8x384xf32>
    %398 = arith.truncf %392 : vector<8x128xf32> to vector<8x128xbf16>
    %c0_110 = arith.constant 0 : index
    %c0_111 = arith.constant 0 : index
    %399 = vector.load %arg14[%c0_110, %c0_111] : memref<128x384xbf16, #tpu.memory_space<vmem>>, vector<128x384xbf16>
    %cst_112 = arith.constant dense<0.000000e+00> : vector<8x384xf32>
    %400 = tpu.matmul %398, %399, %cst_112 {dimension_numbers = #tpu.dot_dimension_numbers<[1], [0], [0], [1], [0, 0, 1, 1], [], []>} : vector<8x128xbf16>, vector<128x384xbf16>, vector<8x384xf32> -> vector<8x384xf32>
    %401 = vector.extract_strided_slice %397 {offsets = [0, 0], sizes = [8, 256], strides = [1, 1]} : vector<8x384xf32> to vector<8x256xf32>
    %402 = vector.extract_strided_slice %400 {offsets = [0, 0], sizes = [8, 256], strides = [1, 1]} : vector<8x384xf32> to vector<8x256xf32>
    %403 = arith.addf %401, %402 : vector<8x256xf32>
    %404 = arith.negf %403 : vector<8x256xf32>
    %405 = math.exp %404 : vector<8x256xf32>
    %cst_113 = arith.constant 1.000000e+00 : f32
    %406 = vector.broadcast %cst_113 : f32 to vector<8x256xf32>
    %407 = arith.addf %406, %405 : vector<8x256xf32>
    %408 = arith.divf %406, %407 : vector<8x256xf32>
    %409 = vector.extract_strided_slice %408 {offsets = [0, 0], sizes = [8, 128], strides = [1, 1]} : vector<8x256xf32> to vector<8x128xf32>
    %410 = vector.extract_strided_slice %408 {offsets = [0, 128], sizes = [8, 128], strides = [1, 1]} : vector<8x256xf32> to vector<8x128xf32>
    %411 = vector.extract_strided_slice %397 {offsets = [0, 256], sizes = [8, 128], strides = [1, 1]} : vector<8x384xf32> to vector<8x128xf32>
    %412 = vector.extract_strided_slice %400 {offsets = [0, 256], sizes = [8, 128], strides = [1, 1]} : vector<8x384xf32> to vector<8x128xf32>
    %413 = arith.addf %412, %12 : vector<8x128xf32>
    %414 = arith.mulf %409, %413 : vector<8x128xf32>
    %415 = arith.addf %411, %414 : vector<8x128xf32>
    %416 = math.tanh %415 : vector<8x128xf32>
    %417 = arith.subf %392, %416 : vector<8x128xf32>
    %418 = arith.mulf %410, %417 : vector<8x128xf32>
    %419 = arith.addf %416, %418 : vector<8x128xf32>
    %c0_114 = arith.constant 0 : index
    %c0_115 = arith.constant 0 : index
    %420 = vector.load %arg9[%c0_114, %c0_115] : memref<128x3xf32, #tpu.memory_space<vmem>>, vector<128x3xf32>
    %cst_116 = arith.constant dense<0.000000e+00> : vector<8x3xf32>
    %421 = tpu.matmul %419, %420, %cst_116 {dimension_numbers = #tpu.dot_dimension_numbers<[1], [0], [0], [1], [0, 0, 1, 1], [], []>} : vector<8x128xf32>, vector<128x3xf32>, vector<8x3xf32> -> vector<8x3xf32>
    %c0_117 = arith.constant 0 : index
    %c0_118 = arith.constant 0 : index
    %422 = vector.load %arg10[%c0_117, %c0_118] : memref<1x3xf32, #tpu.memory_space<vmem>>, vector<1x3xf32>
    %423 = vector.broadcast %422 : vector<1x3xf32> to vector<8x3xf32>
    %424 = arith.addf %421, %423 : vector<8x3xf32>
    %c0_119 = arith.constant 0 : index
    %c0_120 = arith.constant 0 : index
    %425 = vector.load %arg11[%c0_119, %c0_120] : memref<8x3xf32, #tpu.memory_space<vmem>>, vector<8x3xf32>
    tpu.vector_store %arg11[%c0_119, %c0_120], %424 {strides = array<i32>} : memref<8x3xf32, #tpu.memory_space<vmem>>, vector<8x3xf32>,
    return
  }
}

</mosaic_0001>

<llo_original>
// kernel: tpu_custom_call.1
$region0: #{tpu_custom_call.1}
  #allocation0 [shape = 'u32[]', space=smem, size = 0x4, offset = 0x4, fixed_abs, tag = 'smem constant byte address 0x4 - core index']
  #allocation1 [shape = 'u32[144,128]{1,0:T(1,128)}', space=vmem, size = 0x12000, scoped, tag = 'internal scratch']
  #allocation2 [shape = 'f32[64,384]{1,0:T(8,128)}', space=vmem, size = 0x18000, scoped, tag = 'scratch operand']
  #allocation3 [shape = 'bf16[128,384]{1,0:T(8,128)(2,1)}', space=vmem, size = 0x18000, scoped, tag = 'scratch operand']
  #allocation4 [shape = 'bf16[128,384]{1,0:T(8,128)(2,1)}', space=vmem, size = 0x18000, scoped, tag = 'scratch operand']
  #allocation5 [shape = 's32[2]{0}', space=sflag, size = 0x8, scoped, tag = 'scratch operand']
  #allocation11 [shape = 's32[]', space=sflag, size = 0x4, offset = 0, fixed_abs, tag = 'sflag constant byte address 0x0 - dummy sync flag']
  #allocation12 [shape = 's32[]', space=sflag, size = 0x4, offset = 0, fixed_abs, tag = 'sflag constant byte address 0x0 - dummy sync flag']
  #allocation13 [shape = 'u32[]', space=smem, size = 0x4, offset = 0x44, fixed_abs, tag = 'smem constant byte address 0x44 - assertion arg 0']
  #allocation14 [shape = 'u32[]', space=smem, size = 0x4, offset = 0x48, fixed_abs, tag = 'smem constant byte address 0x48 - assertion arg 1']
  #allocation15 [shape = 's32[]', space=sflag, size = 0x4, offset = 0, fixed_abs, tag = 'sflag constant byte address 0x0 - dummy sync flag']
  #allocation16 [shape = 's32[]', space=sflag, size = 0x4, offset = 0, fixed_abs, tag = 'sflag constant byte address 0x0 - dummy sync flag']
  %s0 = inlined_call_operand.vmem [shape: f32[64,3], index: 0, kind: input, shape index: {}]
  %s1 = inlined_call_operand.hbm [shape: f32[3,384], index: 1, kind: input, shape index: {}]
  %s2 = inlined_call_operand.vmem [shape: bf16[128,384], index: 2, kind: input, shape index: {}]
  %s3 = inlined_call_operand.hbm [shape: f32[1,384], index: 3, kind: input, shape index: {}]
  %s4 = inlined_call_operand.vmem [shape: f32[8,128], index: 4, kind: input, shape index: {}]
  %s5 = inlined_call_operand.hbm [shape: bf16[128,384], index: 5, kind: input, shape index: {}]
  %s6 = inlined_call_operand.hbm [shape: bf16[128,384], index: 6, kind: input, shape index: {}]
  %s7 = inlined_call_operand.hbm [shape: f32[1,384], index: 7, kind: input, shape index: {}]
  %s8 = inlined_call_operand.vmem [shape: f32[8,128], index: 8, kind: input, shape index: {}]
  %s9 = inlined_call_operand.vmem [shape: f32[128,3], index: 9, kind: input, shape index: {}]
  %s10 = inlined_call_operand.vmem [shape: f32[1,3], index: 10, kind: input, shape index: {}]
  %s11 = inlined_call_operand.vmem [shape: f32[8,3], index: 11, kind: output, shape index: {}]
  %s12 = sld [smem:[#allocation0]]
  $region66: #{tpu_custom_call.1} parent=0
    _
  %s14 = ssub.s32 1, %s12
  %s15 = scalar_select 0, %s14, %s12
  $region1: #{tpu_custom_call.1} parent=0
    #allocation6 [shape = 'u8[6144]{0}', space=vmem, size = 0x1800, scoped, tag = 'input window, operand 1, single buffered']
    #allocation7 [shape = 's32[1]{0}', space=sflag, size = 0x4, scoped, tag = 'scoped memory for tpu_custom_call.1']
    #allocation8 [shape = 'u8[1536]{0}', space=vmem, size = 0x800, scoped, tag = 'input window, operand 3, single buffered']
    #allocation9 [shape = 's32[1]{0}', space=sflag, size = 0x4, scoped, tag = 'scoped memory for tpu_custom_call.1']
    #allocation10 [shape = 'u8[1536]{0}', space=vmem, size = 0x800, scoped, tag = 'input window, operand 7, single buffered']
    %16 = vsyncpa [#allocation7], 0
    %17 = vsyncpa [#allocation9], 0
    // Predicated region
    $region2: #{tpu_custom_call.1} parent=1 // pred_check
      _
    $region3: #{tpu_custom_call.1} parent=1 // pred_check_branch
      %19 = sbr.rel (0) target = $region5
    $region4: #{tpu_custom_call.1} parent=1 // pred_region
      _
    $region5: #{tpu_custom_call.1} parent=1 // pred_fallthru
      _
    // Predicated region
    $region6: #{tpu_custom_call.1} parent=1 // pred_check
      _
    $region7: #{tpu_custom_call.1} parent=1 // pred_check_branch
      %21 = sbr.rel (0) target = $region9
    $region8: #{tpu_custom_call.1} parent=1 // pred_region
      %s23 = ssub.s32 192, 192
      %24 = vsyncadd [#allocation7], %s23
      %s26 = sshll.u32 [#allocation6], 4
      %s27 = int_to_ptr.vmem [resolvable:$true] %s26
      %29 = dma.hbm_to_vmem [thread:$0]  %s1, 192, %s27, [#allocation7]
    $region9: #{tpu_custom_call.1} parent=1 // pred_fallthru
      _
    // Predicated region
    $region10: #{tpu_custom_call.1} parent=1 // pred_check
      _
    $region11: #{tpu_custom_call.1} parent=1 // pred_check_branch
      %31 = sbr.rel (0) target = $region13
    $region12: #{tpu_custom_call.1} parent=1 // pred_region
      _
    $region13: #{tpu_custom_call.1} parent=1 // pred_fallthru
      _
    // Predicated region
    $region14: #{tpu_custom_call.1} parent=1 // pred_check
      _
    $region15: #{tpu_custom_call.1} parent=1 // pred_check_branch
      %33 = sbr.rel (0) target = $region17
    $region16: #{tpu_custom_call.1} parent=1 // pred_region
      %s35 = ssub.s32 48, 48
      %36 = vsyncadd [#allocation9], %s35
      %s38 = sshll.u32 [#allocation8], 4
      %s39 = int_to_ptr.vmem [resolvable:$true] %s38
      %41 = dma.hbm_to_vmem [thread:$0]  %s3, 48, %s39, [#allocation9]
    $region17: #{tpu_custom_call.1} parent=1 // pred_fallthru
      _
    // Predicated region
    $region18: #{tpu_custom_call.1} parent=1 // pred_check
      _
    $region19: #{tpu_custom_call.1} parent=1 // pred_check_branch
      %43 = sbr.rel (0) target = $region21
    $region20: #{tpu_custom_call.1} parent=1 // pred_region
      _
    $region21: #{tpu_custom_call.1} parent=1 // pred_fallthru
      _
    // Predicated region
    $region22: #{tpu_custom_call.1} parent=1 // pred_check
      _
    $region23: #{tpu_custom_call.1} parent=1 // pred_check_branch
      %45 = sbr.rel (0) target = $region25
    $region24: #{tpu_custom_call.1} parent=1 // pred_region
      %s47 = ssub.s32 48, 48
      %48 = vsyncadd [#allocation9], %s47
      %s50 = sshll.u32 [#allocation10], 4
      %s51 = int_to_ptr.vmem [resolvable:$true] %s50
      %53 = dma.hbm_to_vmem [thread:$0]  %s7, 48, %s51, [#allocation9]
    $region25: #{tpu_custom_call.1} parent=1 // pred_fallthru
      _
    // Predicated region
    $region26: #{tpu_custom_call.1} parent=1 // pred_check
      _
    $region27: #{tpu_custom_call.1} parent=1 // pred_check_branch
      %55 = sbr.rel (0) target = $region29
    $region28: #{tpu_custom_call.1} parent=1 // pred_region
      _
    $region29: #{tpu_custom_call.1} parent=1 // pred_fallthru
      _
    // Predicated region
    $region30: #{tpu_custom_call.1} parent=1 // pred_check
      _
    $region31: #{tpu_custom_call.1} parent=1 // pred_check_branch
      %57 = sbr.rel (0) target = $region33
    $region32: #{tpu_custom_call.1} parent=1 // pred_region
      _
    $region33: #{tpu_custom_call.1} parent=1 // pred_fallthru
      _
    // Predicated region
    $region34: #{tpu_custom_call.1} parent=1 // pred_check
      _
    $region35: #{tpu_custom_call.1} parent=1 // pred_check_branch
      %59 = sbr.rel (0) target = $region37
    $region36: #{tpu_custom_call.1} parent=1 // pred_region
      _
    $region37: #{tpu_custom_call.1} parent=1 // pred_fallthru
      _
    // Predicated region
    $region38: #{tpu_custom_call.1} parent=1 // pred_check
      _
    $region39: #{tpu_custom_call.1} parent=1 // pred_check_branch
      %61 = sbr.rel (0) target = $region41
    $region40: #{tpu_custom_call.1} parent=1 // pred_region
      %62 = dma.done [#allocation7], 192
    $region41: #{tpu_custom_call.1} parent=1 // pred_fallthru
      _
    // Predicated region
    $region42: #{tpu_custom_call.1} parent=1 // pred_check
      _
    $region43: #{tpu_custom_call.1} parent=1 // pred_check_branch
      %64 = sbr.rel (0) target = $region45
    $region44: #{tpu_custom_call.1} parent=1 // pred_region
      %65 = dma.done [#allocation9], 48
    $region45: #{tpu_custom_call.1} parent=1 // pred_fallthru
      _
    // Predicated region
    $region46: #{tpu_custom_call.1} parent=1 // pred_check
      _
    $region47: #{tpu_custom_call.1} parent=1 // pred_check_branch
      %67 = sbr.rel (0) target = $region49
    $region48: #{tpu_custom_call.1} parent=1 // pred_region
      %68 = dma.done [#allocation9], 48
    $region49: #{tpu_custom_call.1} parent=1 // pred_fallthru
      _
    // Predicated region
    $region50: #{tpu_custom_call.1} parent=1 // pred_check
      _
    $region51: #{tpu_custom_call.1} parent=1 // pred_check_branch
      %71 = sbr.rel target = $region53
    $region52: #{tpu_custom_call.1} parent=1 // pred_region
      %72 = sst [smem:[#allocation13]] [#allocation12]
      %73 = sst [smem:[#allocation14]] [#allocation11]
    $region53: #{tpu_custom_call.1} parent=1 // pred_fallthru
      _
    %75 = shalt.err (0)
    %s77 = sshll.u32 [#allocation3], 4
    %s78 = int_to_ptr.vmem [resolvable:$true] %s77
    %80 = dma.hbm_to_vmem [thread:$0]  %s5, 3072, %s78, [#allocation5]
    %s81 = scalar_lea.sflag [#allocation5], 1
    // Predicated region
    $region54: #{tpu_custom_call.1} parent=1 // pred_check
      _
    $region55: #{tpu_custom_call.1} parent=1 // pred_check_branch
      %83 = sbr.rel target = $region57
    $region56: #{tpu_custom_call.1} parent=1 // pred_region
      %84 = sst [smem:[#allocation13]] [#allocation16]
      %85 = sst [smem:[#allocation14]] [#allocation15]
    $region57: #{tpu_custom_call.1} parent=1 // pred_fallthru
      _
    %87 = shalt.err (0)
    %s89 = sshll.u32 [#allocation4], 4
    %s90 = int_to_ptr.vmem [resolvable:$true] %s89
    %92 = dma.hbm_to_vmem [thread:$0]  %s6, 3072, %s90, %s81
    %v93 = vld [vmem:[%s0] sm:$0xff]
    %v94 = vld [vmem:[%s0 + $0x8] sm:$0xff]
    %v95 = vld [vmem:[%s0 + $0x10] sm:$0xff]
    %v96 = vld [vmem:[%s0 + $0x18] sm:$0xff]
    %v97 = vld [vmem:[%s0 + $0x20] sm:$0xff]
    %v98 = vld [vmem:[%s0 + $0x28] sm:$0xff]
    %v99 = vld [vmem:[%s0 + $0x30] sm:$0xff]
    %v100 = vld [vmem:[%s0 + $0x38] sm:$0xff]
    %v101 = vld [vmem:[#allocation6] sm:$0x77]
    %v102 = vld [vmem:[#allocation6 + $0x8] sm:$0x7]
    %v103 = vld [vmem:[#allocation8] sm:$0x7]
    %v105 = vlaneseq
    %v106 = vshrl.u32 %v105, 7
    %v107 = vsub.s32 0, %v106
    %v108 = vrot.slane %v103, %v107
    %v109 = vlaneseq
    %v110 = vshrl.u32 %v109, 7
    %v111 = vsub.s32 1, %v110
    %v112 = vrot.slane %v103, %v111
    %v113 = vlaneseq
    %v114 = vshrl.u32 %v113, 7
    %v115 = vsub.s32 2, %v114
    %v116 = vrot.slane %v103, %v115
    %v122 = vcombine.high %v101, %v101
    %vm123 = vcmask 23552
    %v125 = vsel %vm123, %v93, 0
    %v128 = vsel %vm123, %v94, 0
    %v131 = vsel %vm123, %v95, 0
    %v134 = vsel %vm123, %v96, 0
    %v137 = vsel %vm123, %v97, 0
    %v140 = vsel %vm123, %v98, 0
    %v143 = vsel %vm123, %v99, 0
    %v146 = vsel %vm123, %v100, 0
    %vm148 = vcmask 1042432
    %v149 = vsel %vm148, %v101, 0
    %v151 = vsel %vm148, %v122, 0
    %v153 = vsel %vm148, %v102, 0
    %155 = vmatprep.subr.mxu0 0.0
    %156 = vmatpush1.msra.mxu0 0.0
    %157 = vmatprep.subr.mxu0 0.0
    %158 = vmatpush1.msra.mxu0 0.0
    %159 = vmatprep.subr.mxu0 0.0
    %160 = vmatpush1.msra.mxu0 0.0
    %161 = vmatprep.subr.mxu0 0.0
    %162 = vmatpush1.msra.mxu0 0.0
    %163 = vmatprep.subr.mxu0 0.0
    %164 = vmatpush1.msra.mxu0 0.0
    %165 = vmatprep.subr.mxu0 0.0
    %166 = vmatpush1.msra.mxu0 0.0
    %167 = vmatprep.subr.mxu0 0.0
    %168 = vmatpush1.msra.mxu0 0.0
    %169 = vmatprep.subr.mxu0 0.0
    %170 = vmatpush1.msra.mxu0 0.0
    %171 = vmatprep.subr.mxu0 0.0
    %172 = vmatpush1.msra.mxu0 0.0
    %173 = vmatprep.subr.mxu0 0.0
    %174 = vmatpush1.msra.mxu0 0.0
    %175 = vmatprep.subr.mxu0 0.0
    %176 = vmatpush1.msra.mxu0 0.0
    %177 = vmatprep.subr.mxu0 0.0
    %178 = vmatpush1.msra.mxu0 0.0
    %179 = vmatprep.subr.mxu0 0.0
    %180 = vmatpush1.msra.mxu0 0.0
    %181 = vmatprep.subr.mxu0 0.0
    %182 = vmatpush1.msra.mxu0 0.0
    %183 = vmatprep.subr.mxu0 0.0
    %184 = vmatpush1.msra.mxu0 0.0
    %185 = vmatprep.subr.mxu0 %v151
    %186 = vmatpush1.msra.mxu0 %v149
    %187 = vmatprep.subr.mxu0 0.0
    %188 = vmatpush2.msra.mxu0 0.0
    %189 = vmatprep.subr.mxu0 0.0
    %190 = vmatpush2.msra.mxu0 0.0
    %191 = vmatprep.subr.mxu0 0.0
    %192 = vmatpush2.msra.mxu0 0.0
    %193 = vmatprep.subr.mxu0 0.0
    %194 = vmatpush2.msra.mxu0 0.0
    %195 = vmatprep.subr.mxu0 0.0
    %196 = vmatpush2.msra.mxu0 0.0
    %197 = vmatprep.subr.mxu0 0.0
    %198 = vmatpush2.msra.mxu0 0.0
    %199 = vmatprep.subr.mxu0 0.0
    %200 = vmatpush2.msra.mxu0 0.0
    %201 = vmatprep.subr.mxu0 0.0
    %202 = vmatpush2.msra.mxu0 0.0
    %203 = vmatprep.subr.mxu0 0.0
    %204 = vmatpush2.msra.mxu0 0.0
    %205 = vmatprep.subr.mxu0 0.0
    %206 = vmatpush2.msra.mxu0 0.0
    %207 = vmatprep.subr.mxu0 0.0
    %208 = vmatpush2.msra.mxu0 0.0
    %209 = vmatprep.subr.mxu0 0.0
    %210 = vmatpush2.msra.mxu0 0.0
    %211 = vmatprep.subr.mxu0 0.0
    %212 = vmatpush2.msra.mxu0 0.0
    %213 = vmatprep.subr.mxu0 0.0
    %214 = vmatpush2.msra.mxu0 0.0
    %215 = vmatprep.subr.mxu0 0.0
    %216 = vmatpush2.msra.mxu0 0.0
    %217 = vmatprep.subr.mxu0 0.0
    %218 = vmatpush2.msra.mxu0 0.0
    %219 = vmatprep.mubr.f32.mxu0 0.0
    %220 = vmatmul.mubr.f32.gmra.mxu0 %v125
    %v221 = vpop.f32.mrf.mxu0
    %v222 = vadd.f32 %v108, %v221
    %v223 = vpop.f32.mrf.mxu0
    %v224 = vadd.f32 %v112, %v223
    %225 = vmatprep.mubr.f32.mxu0 0.0
    %226 = vmatmul.mubr.f32.gmra.mxu0 %v128
    %v227 = vpop.f32.mrf.mxu0
    %v228 = vadd.f32 %v108, %v227
    %v229 = vpop.f32.mrf.mxu0
    %v230 = vadd.f32 %v112, %v229
    %231 = vmatprep.mubr.f32.mxu0 0.0
    %232 = vmatmul.mubr.f32.gmra.mxu0 %v131
    %v233 = vpop.f32.mrf.mxu0
    %v234 = vadd.f32 %v108, %v233
    %v235 = vpop.f32.mrf.mxu0
    %v236 = vadd.f32 %v112, %v235
    %237 = vmatprep.mubr.f32.mxu0 0.0
    %238 = vmatmul.mubr.f32.gmra.mxu0 %v134
    %v239 = vpop.f32.mrf.mxu0
    %v240 = vadd.f32 %v108, %v239
    %v241 = vpop.f32.mrf.mxu0
    %v242 = vadd.f32 %v112, %v241
    %243 = vmatprep.mubr.f32.mxu0 0.0
    %244 = vmatmul.mubr.f32.gmra.mxu0 %v137
    %v245 = vpop.f32.mrf.mxu0
    %v246 = vadd.f32 %v108, %v245
    %v247 = vpop.f32.mrf.mxu0
    %v248 = vadd.f32 %v112, %v247
    %249 = vmatprep.mubr.f32.mxu0 0.0
    %250 = vmatmul.mubr.f32.gmra.mxu0 %v140
    %v251 = vpop.f32.mrf.mxu0
    %v252 = vadd.f32 %v108, %v251
    %v253 = vpop.f32.mrf.mxu0
    %v254 = vadd.f32 %v112, %v253
    %255 = vmatprep.mubr.f32.mxu0 0.0
    %256 = vmatmul.mubr.f32.gmra.mxu0 %v143
    %v257 = vpop.f32.mrf.mxu0
    %v258 = vadd.f32 %v108, %v257
    %v259 = vpop.f32.mrf.mxu0
    %v260 = vadd.f32 %v112, %v259
    %261 = vmatprep.mubr.f32.mxu0 0.0
    %262 = vmatmul.mubr.f32.gmra.mxu0 %v146
    %v263 = vpop.f32.mrf.mxu0
    %v264 = vadd.f32 %v108, %v263
    %v265 = vpop.f32.mrf.mxu0
    %v266 = vadd.f32 %v112, %v265
    %267 = vdwg.mxu0
    %268 = vmatprep.subr.mxu0 0.0
    %269 = vmatpush1.msra.mxu0 0.0
    %270 = vmatprep.subr.mxu0 0.0
    %271 = vmatpush1.msra.mxu0 0.0
    %272 = vmatprep.subr.mxu0 0.0
    %273 = vmatpush1.msra.mxu0 0.0
    %274 = vmatprep.subr.mxu0 0.0
    %275 = vmatpush1.msra.mxu0 0.0
    %276 = vmatprep.subr.mxu0 0.0
    %277 = vmatpush1.msra.mxu0 0.0
    %278 = vmatprep.subr.mxu0 0.0
    %279 = vmatpush1.msra.mxu0 0.0
    %280 = vmatprep.subr.mxu0 0.0
    %281 = vmatpush1.msra.mxu0 0.0
    %282 = vmatprep.subr.mxu0 0.0
    %283 = vmatpush1.msra.mxu0 0.0
    %284 = vmatprep.subr.mxu0 0.0
    %285 = vmatpush1.msra.mxu0 0.0
    %286 = vmatprep.subr.mxu0 0.0
    %287 = vmatpush1.msra.mxu0 0.0
    %288 = vmatprep.subr.mxu0 0.0
    %289 = vmatpush1.msra.mxu0 0.0
    %290 = vmatprep.subr.mxu0 0.0
    %291 = vmatpush1.msra.mxu0 0.0
    %292 = vmatprep.subr.mxu0 0.0
    %293 = vmatpush1.msra.mxu0 0.0
    %294 = vmatprep.subr.mxu0 0.0
    %295 = vmatpush1.msra.mxu0 0.0
    %296 = vmatprep.subr.mxu0 0.0
    %297 = vmatpush1.msra.mxu0 0.0
    %298 = vmatprep.subr.mxu0 0.0
    %299 = vmatpush1.msra.mxu0 %v153
    %300 = vmatprep.subr.mxu0 0.0
    %301 = vmatpush2.msra.mxu0 0.0
    %302 = vmatprep.subr.mxu0 0.0
    %303 = vmatpush2.msra.mxu0 0.0
    %304 = vmatprep.subr.mxu0 0.0
    %305 = vmatpush2.msra.mxu0 0.0
    %306 = vmatprep.subr.mxu0 0.0
    %307 = vmatpush2.msra.mxu0 0.0
    %308 = vmatprep.subr.mxu0 0.0
    %309 = vmatpush2.msra.mxu0 0.0
    %310 = vmatprep.subr.mxu0 0.0
    %311 = vmatpush2.msra.mxu0 0.0
    %312 = vmatprep.subr.mxu0 0.0
    %313 = vmatpush2.msra.mxu0 0.0
    %314 = vmatprep.subr.mxu0 0.0
    %315 = vmatpush2.msra.mxu0 0.0
    %316 = vmatprep.subr.mxu0 0.0
    %317 = vmatpush2.msra.mxu0 0.0
    %318 = vmatprep.subr.mxu0 0.0
    %319 = vmatpush2.msra.mxu0 0.0
    %320 = vmatprep.subr.mxu0 0.0
    %321 = vmatpush2.msra.mxu0 0.0
    %322 = vmatprep.subr.mxu0 0.0
    %323 = vmatpush2.msra.mxu0 0.0
    %324 = vmatprep.subr.mxu0 0.0
    %325 = vmatpush2.msra.mxu0 0.0
    %326 = vmatprep.subr.mxu0 0.0
    %327 = vmatpush2.msra.mxu0 0.0
    %328 = vmatprep.subr.mxu0 0.0
    %329 = vmatpush2.msra.mxu0 0.0
    %330 = vmatprep.subr.mxu0 0.0
    %331 = vmatpush2.msra.mxu0 0.0
    %332 = vmatprep.mubr.f32.mxu0 0.0
    %333 = vmatmul.mubr.f32.gmra.mxu0 %v125
    %v334 = vpop.f32.mrf.mxu0
    %v335 = vadd.f32 %v116, %v334
    %v336 = vpop.f32.mrf.mxu0
    %337 = vmatprep.mubr.f32.mxu0 0.0
    %338 = vmatmul.mubr.f32.gmra.mxu0 %v128
    %v339 = vpop.f32.mrf.mxu0
    %v340 = vadd.f32 %v116, %v339
    %v341 = vpop.f32.mrf.mxu0
    %342 = vmatprep.mubr.f32.mxu0 0.0
    %343 = vmatmul.mubr.f32.gmra.mxu0 %v131
    %v344 = vpop.f32.mrf.mxu0
    %v345 = vadd.f32 %v116, %v344
    %v346 = vpop.f32.mrf.mxu0
    %347 = vmatprep.mubr.f32.mxu0 0.0
    %348 = vmatmul.mubr.f32.gmra.mxu0 %v134
    %v349 = vpop.f32.mrf.mxu0
    %v350 = vadd.f32 %v116, %v349
    %v351 = vpop.f32.mrf.mxu0
    %352 = vmatprep.mubr.f32.mxu0 0.0
    %353 = vmatmul.mubr.f32.gmra.mxu0 %v137
    %v354 = vpop.f32.mrf.mxu0
    %v355 = vadd.f32 %v116, %v354
    %v356 = vpop.f32.mrf.mxu0
    %357 = vmatprep.mubr.f32.mxu0 0.0
    %358 = vmatmul.mubr.f32.gmra.mxu0 %v140
    %v359 = vpop.f32.mrf.mxu0
    %v360 = vadd.f32 %v116, %v359
    %v361 = vpop.f32.mrf.mxu0
    %362 = vmatprep.mubr.f32.mxu0 0.0
    %363 = vmatmul.mubr.f32.gmra.mxu0 %v143
    %v364 = vpop.f32.mrf.mxu0
    %v365 = vadd.f32 %v116, %v364
    %v366 = vpop.f32.mrf.mxu0
    %367 = vmatprep.mubr.f32.mxu0 0.0
    %368 = vmatmul.mubr.f32.gmra.mxu0 %v146
    %v369 = vpop.f32.mrf.mxu0
    %v370 = vadd.f32 %v116, %v369
    %v371 = vpop.f32.mrf.mxu0
    %372 = vdwg.mxu0
    %373 = vst [vmem:[#allocation2] sm:$0xff] %v222
    %374 = vst [vmem:[#allocation2 + $0x8] sm:$0xff] %v224
    %375 = vst [vmem:[#allocation2 + $0x10] sm:$0xff] %v335
    %376 = vst [vmem:[#allocation2 + $0x18] sm:$0xff] %v228
    %377 = vst [vmem:[#allocation2 + $0x20] sm:$0xff] %v230
    %378 = vst [vmem:[#allocation2 + $0x28] sm:$0xff] %v340
    %379 = vst [vmem:[#allocation2 + $0x30] sm:$0xff] %v234
    %380 = vst [vmem:[#allocation2 + $0x38] sm:$0xff] %v236
    %381 = vst [vmem:[#allocation2 + $0x40] sm:$0xff] %v345
    %382 = vst [vmem:[#allocation2 + $0x48] sm:$0xff] %v240
    %383 = vst [vmem:[#allocation2 + $0x50] sm:$0xff] %v242
    %384 = vst [vmem:[#allocation2 + $0x58] sm:$0xff] %v350
    %385 = vst [vmem:[#allocation2 + $0x60] sm:$0xff] %v246
    %386 = vst [vmem:[#allocation2 + $0x68] sm:$0xff] %v248
    %387 = vst [vmem:[#allocation2 + $0x70] sm:$0xff] %v355
    %388 = vst [vmem:[#allocation2 + $0x78] sm:$0xff] %v252
    %389 = vst [vmem:[#allocation2 + $0x80] sm:$0xff] %v254
    %390 = vst [vmem:[#allocation2 + $0x88] sm:$0xff] %v360
    %391 = vst [vmem:[#allocation2 + $0x90] sm:$0xff] %v258
    %392 = vst [vmem:[#allocation2 + $0x98] sm:$0xff] %v260
    %393 = vst [vmem:[#allocation2 + $0xa0] sm:$0xff] %v365
    %394 = vst [vmem:[#allocation2 + $0xa8] sm:$0xff] %v264
    %395 = vst [vmem:[#allocation2 + $0xb0] sm:$0xff] %v266
    %396 = vst [vmem:[#allocation2 + $0xb8] sm:$0xff] %v370
    %v397 = vld [vmem:[%s4] sm:$0xff]
    %v398 = vld [vmem:[%s8] sm:$0xff]
    %v399 = vld [vmem:[#allocation10] sm:$0x7]
    %v400 = vld [vmem:[#allocation2] sm:$0xff]
    %v401 = vld [vmem:[#allocation2 + $0x8] sm:$0xff]
    %v402 = vld [vmem:[#allocation2 + $0x10] sm:$0xff]
    %v403 = vld [vmem:[%s2] sm:$0xff]
    %v404 = vld [vmem:[%s2 + $0x8] sm:$0xf]
    %v405 = vld [vmem:[%s2 + $0xc] sm:$0xff]
    %v406 = vld [vmem:[%s2 + $0x14] sm:$0xf]
    %v407 = vld [vmem:[%s2 + $0x18] sm:$0xff]
    %v408 = vld [vmem:[%s2 + $0x20] sm:$0xf]
    %v409 = vld [vmem:[%s2 + $0x24] sm:$0xff]
    %v410 = vld [vmem:[%s2 + $0x2c] sm:$0xf]
    %v411 = vld [vmem:[%s2 + $0x30] sm:$0xff]
    %v412 = vld [vmem:[%s2 + $0x38] sm:$0xf]
    %v413 = vld [vmem:[%s2 + $0x3c] sm:$0xff]
    %v414 = vld [vmem:[%s2 + $0x44] sm:$0xf]
    %v415 = vld [vmem:[%s2 + $0x48] sm:$0xff]
    %v416 = vld [vmem:[%s2 + $0x50] sm:$0xf]
    %v417 = vld [vmem:[%s2 + $0x54] sm:$0xff]
    %v418 = vld [vmem:[%s2 + $0x5c] sm:$0xf]
    %v419 = vld [vmem:[%s2 + $0x60] sm:$0xff]
    %v420 = vld [vmem:[%s2 + $0x68] sm:$0xf]
    %v421 = vld [vmem:[%s2 + $0x6c] sm:$0xff]
    %v422 = vld [vmem:[%s2 + $0x74] sm:$0xf]
    %v423 = vld [vmem:[%s2 + $0x78] sm:$0xff]
    %v424 = vld [vmem:[%s2 + $0x80] sm:$0xf]
    %v425 = vld [vmem:[%s2 + $0x84] sm:$0xff]
    %v426 = vld [vmem:[%s2 + $0x8c] sm:$0xf]
    %v427 = vld [vmem:[%s2 + $0x90] sm:$0xff]
    %v428 = vld [vmem:[%s2 + $0x98] sm:$0xf]
    %v429 = vld [vmem:[%s2 + $0x9c] sm:$0xff]
    %v430 = vld [vmem:[%s2 + $0xa4] sm:$0xf]
    %v431 = vld [vmem:[%s2 + $0xa8] sm:$0xff]
    %v432 = vld [vmem:[%s2 + $0xb0] sm:$0xf]
    %v433 = vld [vmem:[%s2 + $0xb4] sm:$0xff]
    %v434 = vld [vmem:[%s2 + $0xbc] sm:$0xf]
    %v467 = vunpack.c.l.b16 %v403
    %v468 = vunpack.c.h.b16 %v403
    %v469 = vunpack.c.l.b16 %v404
    %v470 = vunpack.c.l.b16 %v405
    %v471 = vunpack.c.h.b16 %v405
    %v472 = vunpack.c.l.b16 %v406
    %v473 = vunpack.c.l.b16 %v407
    %v474 = vunpack.c.h.b16 %v407
    %v475 = vunpack.c.l.b16 %v408
    %v476 = vunpack.c.l.b16 %v409
    %v477 = vunpack.c.h.b16 %v409
    %v478 = vunpack.c.l.b16 %v410
    %v479 = vunpack.c.l.b16 %v411
    %v480 = vunpack.c.h.b16 %v411
    %v481 = vunpack.c.l.b16 %v412
    %v482 = vunpack.c.l.b16 %v413
    %v483 = vunpack.c.h.b16 %v413
    %v484 = vunpack.c.l.b16 %v414
    %v485 = vunpack.c.l.b16 %v415
    %v486 = vunpack.c.h.b16 %v415
    %v487 = vunpack.c.l.b16 %v416
    %v488 = vunpack.c.l.b16 %v417
    %v489 = vunpack.c.h.b16 %v417
    %v490 = vunpack.c.l.b16 %v418
    %v491 = vunpack.c.l.b16 %v419
    %v492 = vunpack.c.h.b16 %v419
    %v493 = vunpack.c.l.b16 %v420
    %v494 = vunpack.c.l.b16 %v421
    %v495 = vunpack.c.h.b16 %v421
    %v496 = vunpack.c.l.b16 %v422
    %v497 = vunpack.c.l.b16 %v423
    %v498 = vunpack.c.h.b16 %v423
    %v499 = vunpack.c.l.b16 %v424
    %v500 = vunpack.c.l.b16 %v425
    %v501 = vunpack.c.h.b16 %v425
    %v502 = vunpack.c.l.b16 %v426
    %v503 = vunpack.c.l.b16 %v427
    %v504 = vunpack.c.h.b16 %v427
    %v505 = vunpack.c.l.b16 %v428
    %v506 = vunpack.c.l.b16 %v429
    %v507 = vunpack.c.h.b16 %v429
    %v508 = vunpack.c.l.b16 %v430
    %v509 = vunpack.c.l.b16 %v431
    %v510 = vunpack.c.h.b16 %v431
    %v511 = vunpack.c.l.b16 %v432
    %v512 = vunpack.c.l.b16 %v433
    %v513 = vunpack.c.h.b16 %v433
    %v514 = vunpack.c.l.b16 %v434
    %v515 = vpack.c.b16 %v470, %v467
    %v516 = vpack.c.b16 %v471, %v468
    %v517 = vpack.c.b16 %v472, %v469
    %v518 = vpack.c.b16 %v476, %v473
    %v519 = vpack.c.b16 %v477, %v474
    %v520 = vpack.c.b16 %v478, %v475
    %v521 = vpack.c.b16 %v482, %v479
    %v522 = vpack.c.b16 %v483, %v480
    %v523 = vpack.c.b16 %v484, %v481
    %v524 = vpack.c.b16 %v488, %v485
    %v525 = vpack.c.b16 %v489, %v486
    %v526 = vpack.c.b16 %v490, %v487
    %v527 = vpack.c.b16 %v494, %v491
    %v528 = vpack.c.b16 %v495, %v492
    %v529 = vpack.c.b16 %v496, %v493
    %v530 = vpack.c.b16 %v500, %v497
    %v531 = vpack.c.b16 %v501, %v498
    %v532 = vpack.c.b16 %v502, %v499
    %v533 = vpack.c.b16 %v506, %v503
    %v534 = vpack.c.b16 %v507, %v504
    %v535 = vpack.c.b16 %v508, %v505
    %v536 = vpack.c.b16 %v512, %v509
    %v537 = vpack.c.b16 %v513, %v510
    %v538 = vpack.c.b16 %v514, %v511
    %563 = vmatprep.subr.bf16.mxu0 %v537
    %564 = vmatpush1.bf16.msra.mxu0 %v536
    %565 = vmatprep.subr.bf16.mxu0 %v534
    %566 = vmatpush1.bf16.msra.mxu0 %v533
    %567 = vmatprep.subr.bf16.mxu0 %v531
    %568 = vmatpush1.bf16.msra.mxu0 %v530
    %569 = vmatprep.subr.bf16.mxu0 %v528
    %570 = vmatpush1.bf16.msra.mxu0 %v527
    %571 = vmatprep.subr.bf16.mxu0 %v525
    %572 = vmatpush1.bf16.msra.mxu0 %v524
    %573 = vmatprep.subr.bf16.mxu0 %v522
    %574 = vmatpush1.bf16.msra.mxu0 %v521
    %575 = vmatprep.subr.bf16.mxu0 %v519
    %576 = vmatpush1.bf16.msra.mxu0 %v518
    %577 = vmatprep.subr.bf16.mxu0 %v516
    %578 = vmatpush1.bf16.msra.mxu0 %v515
    %579 = vmatprep.subr.bf16.mxu0 0
    %580 = vmatpush2.bf16.msra.mxu0 0
    %581 = vmatprep.subr.bf16.mxu0 0
    %582 = vmatpush2.bf16.msra.mxu0 0
    %583 = vmatprep.subr.bf16.mxu0 0
    %584 = vmatpush2.bf16.msra.mxu0 0
    %585 = vmatprep.subr.bf16.mxu0 0
    %586 = vmatpush2.bf16.msra.mxu0 0
    %587 = vmatprep.subr.bf16.mxu0 0
    %588 = vmatpush2.bf16.msra.mxu0 0
    %589 = vmatprep.subr.bf16.mxu0 0
    %590 = vmatpush2.bf16.msra.mxu0 0
    %591 = vmatprep.subr.bf16.mxu0 0
    %592 = vmatpush2.bf16.msra.mxu0 0
    %593 = vmatprep.subr.bf16.mxu0 0
    %594 = vmatpush2.bf16.msra.mxu0 0
    %595 = vmatprep.mubr.bf16.mxu0 0
    %596 = vmatmul.mubr.bf16.gmra.mxu0 0
    %v597 = vpop.f32.mrf.mxu0
    %v598 = vadd.f32 0.0, %v597
    %v599 = vpop.f32.mrf.mxu0
    %v600 = vadd.f32 0.0, %v599
    %v601 = vpop.f32.mrf.mxu0
    %v602 = vpop.f32.mrf.mxu0
    %603 = vdwg.mxu0
    %604 = vmatprep.subr.bf16.mxu0 0
    %605 = vmatpush1.bf16.msra.mxu0 %v538
    %606 = vmatprep.subr.bf16.mxu0 0
    %607 = vmatpush1.bf16.msra.mxu0 %v535
    %608 = vmatprep.subr.bf16.mxu0 0
    %609 = vmatpush1.bf16.msra.mxu0 %v532
    %610 = vmatprep.subr.bf16.mxu0 0
    %611 = vmatpush1.bf16.msra.mxu0 %v529
    %612 = vmatprep.subr.bf16.mxu0 0
    %613 = vmatpush1.bf16.msra.mxu0 %v526
    %614 = vmatprep.subr.bf16.mxu0 0
    %615 = vmatpush1.bf16.msra.mxu0 %v523
    %616 = vmatprep.subr.bf16.mxu0 0
    %617 = vmatpush1.bf16.msra.mxu0 %v520
    %618 = vmatprep.subr.bf16.mxu0 0
    %619 = vmatpush1.bf16.msra.mxu0 %v517
    %620 = vmatprep.subr.bf16.mxu0 0
    %621 = vmatpush2.bf16.msra.mxu0 0
    %622 = vmatprep.subr.bf16.mxu0 0
    %623 = vmatpush2.bf16.msra.mxu0 0
    %624 = vmatprep.subr.bf16.mxu0 0
    %625 = vmatpush2.bf16.msra.mxu0 0
    %626 = vmatprep.subr.bf16.mxu0 0
    %627 = vmatpush2.bf16.msra.mxu0 0
    %628 = vmatprep.subr.bf16.mxu0 0
    %629 = vmatpush2.bf16.msra.mxu0 0
    %630 = vmatprep.subr.bf16.mxu0 0
    %631 = vmatpush2.bf16.msra.mxu0 0
    %632 = vmatprep.subr.bf16.mxu0 0
    %633 = vmatpush2.bf16.msra.mxu0 0
    %634 = vmatprep.subr.bf16.mxu0 0
    %635 = vmatpush2.bf16.msra.mxu0 0
    %636 = vmatprep.mubr.bf16.mxu0 0
    %637 = vmatmul.mubr.bf16.gmra.mxu0 0
    %v638 = vpop.f32.mrf.mxu0
    %v639 = vadd.f32 0.0, %v638
    %v640 = vpop.f32.mrf.mxu0
    %v641 = vpop.f32.mrf.mxu0
    %v642 = vpop.f32.mrf.mxu0
    %643 = vdwg.mxu0
    %v644 = vadd.f32 %v400, %v598
    %v645 = vadd.f32 %v401, %v600
    %v646 = vxor.u32 %v644, 2147483648
    %v647 = vxor.u32 %v645, 2147483648
    %v648 = vmul.f32 %v646, 1.442695
    %v649 = vpow.pop %v648
    %v650 = vmul.f32 %v647, 1.442695
    %v651 = vpow.pop %v650
    %v652 = vadd.f32 %v649, 1.0
    %v653 = vadd.f32 %v651, 1.0
    %v654 = vrcp.pop %v652
    %v655 = vmul.f32 1.0, %v654
    %v656 = vrcp.pop %v653
    %v657 = vmul.f32 1.0, %v656
    %v658 = vadd.f32 %v639, %v397
    %v659 = vmul.f32 %v655, %v658
    %v660 = vadd.f32 %v402, %v659
    %v661 = vtanh.pop %v660
    %v662 = vsub.f32 0.0, %v661
    %v663 = vmul.f32 %v657, %v662
    %v664 = vadd.f32 %v661, %v663
    %s665 = smul.u32 4, 16
    %s666 = smul.u32 %s665, 3
    %s667 = sshll.u32 %s666, 4
    %668 = dma.done [#allocation5], %s667
    %s669 = sshll.u32 %s666, 4
    %670 = dma.done %s81, %s669
    %v671 = vld [vmem:[#allocation2 + $0x18] sm:$0xff]
    %v672 = vld [vmem:[#allocation2 + $0x20] sm:$0xff]
    %v673 = vld [vmem:[#allocation2 + $0x28] sm:$0xff]
    %v674 = vpack.c.bf16 %v664, %v664
    %v675 = vld [vmem:[%s2] sm:$0xff]
    %v676 = vld [vmem:[%s2 + $0x8] sm:$0xf]
    %v677 = vld [vmem:[%s2 + $0xc] sm:$0xff]
    %v678 = vld [vmem:[%s2 + $0x14] sm:$0xf]
    %v679 = vld [vmem:[%s2 + $0x18] sm:$0xff]
    %v680 = vld [vmem:[%s2 + $0x20] sm:$0xf]
    %v681 = vld [vmem:[%s2 + $0x24] sm:$0xff]
    %v682 = vld [vmem:[%s2 + $0x2c] sm:$0xf]
    %v683 = vld [vmem:[%s2 + $0x30] sm:$0xff]
    %v684 = vld [vmem:[%s2 + $0x38] sm:$0xf]
    %v685 = vld [vmem:[%s2 + $0x3c] sm:$0xff]
    %v686 = vld [vmem:[%s2 + $0x44] sm:$0xf]
    %v687 = vld [vmem:[%s2 + $0x48] sm:$0xff]
    %v688 = vld [vmem:[%s2 + $0x50] sm:$0xf]
    %v689 = vld [vmem:[%s2 + $0x54] sm:$0xff]
    %v690 = vld [vmem:[%s2 + $0x5c] sm:$0xf]
    %v691 = vld [vmem:[%s2 + $0x60] sm:$0xff]
    %v692 = vld [vmem:[%s2 + $0x68] sm:$0xf]
    %v693 = vld [vmem:[%s2 + $0x6c] sm:$0xff]
    %v694 = vld [vmem:[%s2 + $0x74] sm:$0xf]
    %v695 = vld [vmem:[%s2 + $0x78] sm:$0xff]
    %v696 = vld [vmem:[%s2 + $0x80] sm:$0xf]
    %v697 = vld [vmem:[%s2 + $0x84] sm:$0xff]
    %v698 = vld [vmem:[%s2 + $0x8c] sm:$0xf]
    %v699 = vld [vmem:[%s2 + $0x90] sm:$0xff]
    %v700 = vld [vmem:[%s2 + $0x98] sm:$0xf]
    %v701 = vld [vmem:[%s2 + $0x9c] sm:$0xff]
    %v702 = vld [vmem:[%s2 + $0xa4] sm:$0xf]
    %v703 = vld [vmem:[%s2 + $0xa8] sm:$0xff]
    %v704 = vld [vmem:[%s2 + $0xb0] sm:$0xf]
    %v705 = vld [vmem:[%s2 + $0xb4] sm:$0xff]
    %v706 = vld [vmem:[%s2 + $0xbc] sm:$0xf]
    %v739 = vunpack.c.l.b16 %v675
    %v740 = vunpack.c.h.b16 %v675
    %v741 = vunpack.c.l.b16 %v676
    %v742 = vunpack.c.l.b16 %v677
    %v743 = vunpack.c.h.b16 %v677
    %v744 = vunpack.c.l.b16 %v678
    %v745 = vunpack.c.l.b16 %v679
    %v746 = vunpack.c.h.b16 %v679
    %v747 = vunpack.c.l.b16 %v680
    %v748 = vunpack.c.l.b16 %v681
    %v749 = vunpack.c.h.b16 %v681
    %v750 = vunpack.c.l.b16 %v682
    %v751 = vunpack.c.l.b16 %v683
    %v752 = vunpack.c.h.b16 %v683
    %v753 = vunpack.c.l.b16 %v684
    %v754 = vunpack.c.l.b16 %v685
    %v755 = vunpack.c.h.b16 %v685
    %v756 = vunpack.c.l.b16 %v686
    %v757 = vunpack.c.l.b16 %v687
    %v758 = vunpack.c.h.b16 %v687
    %v759 = vunpack.c.l.b16 %v688
    %v760 = vunpack.c.l.b16 %v689
    %v761 = vunpack.c.h.b16 %v689
    %v762 = vunpack.c.l.b16 %v690
    %v763 = vunpack.c.l.b16 %v691
    %v764 = vunpack.c.h.b16 %v691
    %v765 = vunpack.c.l.b16 %v692
    %v766 = vunpack.c.l.b16 %v693
    %v767 = vunpack.c.h.b16 %v693
    %v768 = vunpack.c.l.b16 %v694
    %v769 = vunpack.c.l.b16 %v695
    %v770 = vunpack.c.h.b16 %v695
    %v771 = vunpack.c.l.b16 %v696
    %v772 = vunpack.c.l.b16 %v697
    %v773 = vunpack.c.h.b16 %v697
    %v774 = vunpack.c.l.b16 %v698
    %v775 = vunpack.c.l.b16 %v699
    %v776 = vunpack.c.h.b16 %v699
    %v777 = vunpack.c.l.b16 %v700
    %v778 = vunpack.c.l.b16 %v701
    %v779 = vunpack.c.h.b16 %v701
    %v780 = vunpack.c.l.b16 %v702
    %v781 = vunpack.c.l.b16 %v703
    %v782 = vunpack.c.h.b16 %v703
    %v783 = vunpack.c.l.b16 %v704
    %v784 = vunpack.c.l.b16 %v705
    %v785 = vunpack.c.h.b16 %v705
    %v786 = vunpack.c.l.b16 %v706
    %v787 = vpack.c.b16 %v742, %v739
    %v788 = vpack.c.b16 %v743, %v740
    %v789 = vpack.c.b16 %v744, %v741
    %v790 = vpack.c.b16 %v748, %v745
    %v791 = vpack.c.b16 %v749, %v746
    %v792 = vpack.c.b16 %v750, %v747
    %v793 = vpack.c.b16 %v754, %v751
    %v794 = vpack.c.b16 %v755, %v752
    %v795 = vpack.c.b16 %v756, %v753
    %v796 = vpack.c.b16 %v760, %v757
    %v797 = vpack.c.b16 %v761, %v758
    %v798 = vpack.c.b16 %v762, %v759
    %v799 = vpack.c.b16 %v766, %v763
    %v800 = vpack.c.b16 %v767, %v764
    %v801 = vpack.c.b16 %v768, %v765
    %v802 = vpack.c.b16 %v772, %v769
    %v803 = vpack.c.b16 %v773, %v770
    %v804 = vpack.c.b16 %v774, %v771
    %v805 = vpack.c.b16 %v778, %v775
    %v806 = vpack.c.b16 %v779, %v776
    %v807 = vpack.c.b16 %v780, %v777
    %v808 = vpack.c.b16 %v784, %v781
    %v809 = vpack.c.b16 %v785, %v782
    %v810 = vpack.c.b16 %v786, %v783
    %835 = vmatprep.subr.bf16.mxu0 %v809
    %836 = vmatpush1.bf16.msra.mxu0 %v808
    %837 = vmatprep.subr.bf16.mxu0 %v806
    %838 = vmatpush1.bf16.msra.mxu0 %v805
    %839 = vmatprep.subr.bf16.mxu0 %v803
    %840 = vmatpush1.bf16.msra.mxu0 %v802
    %841 = vmatprep.subr.bf16.mxu0 %v800
    %842 = vmatpush1.bf16.msra.mxu0 %v799
    %843 = vmatprep.subr.bf16.mxu0 %v797
    %844 = vmatpush1.bf16.msra.mxu0 %v796
    %845 = vmatprep.subr.bf16.mxu0 %v794
    %846 = vmatpush1.bf16.msra.mxu0 %v793
    %847 = vmatprep.subr.bf16.mxu0 %v791
    %848 = vmatpush1.bf16.msra.mxu0 %v790
    %849 = vmatprep.subr.bf16.mxu0 %v788
    %850 = vmatpush1.bf16.msra.mxu0 %v787
    %851 = vmatprep.subr.bf16.mxu0 0
    %852 = vmatpush2.bf16.msra.mxu0 0
    %853 = vmatprep.subr.bf16.mxu0 0
    %854 = vmatpush2.bf16.msra.mxu0 0
    %855 = vmatprep.subr.bf16.mxu0 0
    %856 = vmatpush2.bf16.msra.mxu0 0
    %857 = vmatprep.subr.bf16.mxu0 0
    %858 = vmatpush2.bf16.msra.mxu0 0
    %859 = vmatprep.subr.bf16.mxu0 0
    %860 = vmatpush2.bf16.msra.mxu0 0
    %861 = vmatprep.subr.bf16.mxu0 0
    %862 = vmatpush2.bf16.msra.mxu0 0
    %863 = vmatprep.subr.bf16.mxu0 0
    %864 = vmatpush2.bf16.msra.mxu0 0
    %865 = vmatprep.subr.bf16.mxu0 0
    %866 = vmatpush2.bf16.msra.mxu0 0
    %867 = vmatprep.mubr.bf16.mxu0 0
    %868 = vmatmul.mubr.bf16.gmra.mxu0 %v674
    %v869 = vpop.f32.mrf.mxu0
    %v870 = vadd.f32 0.0, %v869
    %v871 = vpop.f32.mrf.mxu0
    %v872 = vadd.f32 0.0, %v871
    %v873 = vpop.f32.mrf.mxu0
    %v874 = vpop.f32.mrf.mxu0
    %875 = vdwg.mxu0
    %876 = vmatprep.subr.bf16.mxu0 0
    %877 = vmatpush1.bf16.msra.mxu0 %v810
    %878 = vmatprep.subr.bf16.mxu0 0
    %879 = vmatpush1.bf16.msra.mxu0 %v807
    %880 = vmatprep.subr.bf16.mxu0 0
    %881 = vmatpush1.bf16.msra.mxu0 %v804
    %882 = vmatprep.subr.bf16.mxu0 0
    %883 = vmatpush1.bf16.msra.mxu0 %v801
    %884 = vmatprep.subr.bf16.mxu0 0
    %885 = vmatpush1.bf16.msra.mxu0 %v798
    %886 = vmatprep.subr.bf16.mxu0 0
    %887 = vmatpush1.bf16.msra.mxu0 %v795
    %888 = vmatprep.subr.bf16.mxu0 0
    %889 = vmatpush1.bf16.msra.mxu0 %v792
    %890 = vmatprep.subr.bf16.mxu0 0
    %891 = vmatpush1.bf16.msra.mxu0 %v789
    %892 = vmatprep.subr.bf16.mxu0 0
    %893 = vmatpush2.bf16.msra.mxu0 0
    %894 = vmatprep.subr.bf16.mxu0 0
    %895 = vmatpush2.bf16.msra.mxu0 0
    %896 = vmatprep.subr.bf16.mxu0 0
    %897 = vmatpush2.bf16.msra.mxu0 0
    %898 = vmatprep.subr.bf16.mxu0 0
    %899 = vmatpush2.bf16.msra.mxu0 0
    %900 = vmatprep.subr.bf16.mxu0 0
    %901 = vmatpush2.bf16.msra.mxu0 0
    %902 = vmatprep.subr.bf16.mxu0 0
    %903 = vmatpush2.bf16.msra.mxu0 0
    %904 = vmatprep.subr.bf16.mxu0 0
    %905 = vmatpush2.bf16.msra.mxu0 0
    %906 = vmatprep.subr.bf16.mxu0 0
    %907 = vmatpush2.bf16.msra.mxu0 0
    %908 = vmatprep.mubr.bf16.mxu0 0
    %909 = vmatmul.mubr.bf16.gmra.mxu0 %v674
    %v910 = vpop.f32.mrf.mxu0
    %v911 = vadd.f32 0.0, %v910
    %v912 = vpop.f32.mrf.mxu0
    %v913 = vpop.f32.mrf.mxu0
    %v914 = vpop.f32.mrf.mxu0
    %915 = vdwg.mxu0
    %v916 = vadd.f32 %v671, %v870
    %v917 = vadd.f32 %v672, %v872
    %v918 = vxor.u32 %v916, 2147483648
    %v919 = vxor.u32 %v917, 2147483648
    %v920 = vmul.f32 %v918, 1.442695
    %v921 = vpow.pop %v920
    %v922 = vmul.f32 %v919, 1.442695
    %v923 = vpow.pop %v922
    %v924 = vadd.f32 %v921, 1.0
    %v925 = vadd.f32 %v923, 1.0
    %v926 = vrcp.pop %v924
    %v927 = vmul.f32 1.0, %v926
    %v928 = vrcp.pop %v925
    %v929 = vmul.f32 1.0, %v928
    %v930 = vadd.f32 %v911, %v397
    %v931 = vmul.f32 %v927, %v930
    %v932 = vadd.f32 %v673, %v931
    %v933 = vtanh.pop %v932
    %v934 = vsub.f32 %v664, %v933
    %v935 = vmul.f32 %v929, %v934
    %v936 = vadd.f32 %v933, %v935
    %v937 = vld [vmem:[#allocation3] sm:$0xff]
    %v938 = vld [vmem:[#allocation3 + $0x8] sm:$0xf]
    %v939 = vld [vmem:[#allocation3 + $0xc] sm:$0xff]
    %v940 = vld [vmem:[#allocation3 + $0x14] sm:$0xf]
    %v941 = vld [vmem:[#allocation3 + $0x18] sm:$0xff]
    %v942 = vld [vmem:[#allocation3 + $0x20] sm:$0xf]
    %v943 = vld [vmem:[#allocation3 + $0x24] sm:$0xff]
    %v944 = vld [vmem:[#allocation3 + $0x2c] sm:$0xf]
    %v945 = vld [vmem:[#allocation3 + $0x30] sm:$0xff]
    %v946 = vld [vmem:[#allocation3 + $0x38] sm:$0xf]
    %v947 = vld [vmem:[#allocation3 + $0x3c] sm:$0xff]
    %v948 = vld [vmem:[#allocation3 + $0x44] sm:$0xf]
    %v949 = vld [vmem:[#allocation3 + $0x48] sm:$0xff]
    %v950 = vld [vmem:[#allocation3 + $0x50] sm:$0xf]
    %v951 = vld [vmem:[#allocation3 + $0x54] sm:$0xff]
    %v952 = vld [vmem:[#allocation3 + $0x5c] sm:$0xf]
    %v953 = vld [vmem:[#allocation3 + $0x60] sm:$0xff]
    %v954 = vld [vmem:[#allocation3 + $0x68] sm:$0xf]
    %v955 = vld [vmem:[#allocation3 + $0x6c] sm:$0xff]
    %v956 = vld [vmem:[#allocation3 + $0x74] sm:$0xf]
    %v957 = vld [vmem:[#allocation3 + $0x78] sm:$0xff]
    %v958 = vld [vmem:[#allocation3 + $0x80] sm:$0xf]
    %v959 = vld [vmem:[#allocation3 + $0x84] sm:$0xff]
    %v960 = vld [vmem:[#allocation3 + $0x8c] sm:$0xf]
    %v961 = vld [vmem:[#allocation3 + $0x90] sm:$0xff]
    %v962 = vld [vmem:[#allocation3 + $0x98] sm:$0xf]
    %v963 = vld [vmem:[#allocation3 + $0x9c] sm:$0xff]
    %v964 = vld [vmem:[#allocation3 + $0xa4] sm:$0xf]
    %v965 = vld [vmem:[#allocation3 + $0xa8] sm:$0xff]
    %v966 = vld [vmem:[#allocation3 + $0xb0] sm:$0xf]
    %v967 = vld [vmem:[#allocation3 + $0xb4] sm:$0xff]
    %v968 = vld [vmem:[#allocation3 + $0xbc] sm:$0xf]
    %v970 = vlaneseq
    %v971 = vshrl.u32 %v970, 7
    %v972 = vsub.s32 0, %v971
    %v973 = vrot.slane %v399, %v972
    %v974 = vlaneseq
    %v975 = vshrl.u32 %v974, 7
    %v976 = vsub.s32 1, %v975
    %v977 = vrot.slane %v399, %v976
    %v978 = vlaneseq
    %v979 = vshrl.u32 %v978, 7
    %v980 = vsub.s32 2, %v979
    %v981 = vrot.slane %v399, %v980
    %v1017 = vunpack.c.l.b16 %v937
    %v1018 = vunpack.c.h.b16 %v937
    %v1019 = vunpack.c.l.b16 %v938
    %v1020 = vunpack.c.l.b16 %v939
    %v1021 = vunpack.c.h.b16 %v939
    %v1022 = vunpack.c.l.b16 %v940
    %v1023 = vunpack.c.l.b16 %v941
    %v1024 = vunpack.c.h.b16 %v941
    %v1025 = vunpack.c.l.b16 %v942
    %v1026 = vunpack.c.l.b16 %v943
    %v1027 = vunpack.c.h.b16 %v943
    %v1028 = vunpack.c.l.b16 %v944
    %v1029 = vunpack.c.l.b16 %v945
    %v1030 = vunpack.c.h.b16 %v945
    %v1031 = vunpack.c.l.b16 %v946
    %v1032 = vunpack.c.l.b16 %v947
    %v1033 = vunpack.c.h.b16 %v947
    %v1034 = vunpack.c.l.b16 %v948
    %v1035 = vunpack.c.l.b16 %v949
    %v1036 = vunpack.c.h.b16 %v949
    %v1037 = vunpack.c.l.b16 %v950
    %v1038 = vunpack.c.l.b16 %v951
    %v1039 = vunpack.c.h.b16 %v951
    %v1040 = vunpack.c.l.b16 %v952
    %v1041 = vunpack.c.l.b16 %v953
    %v1042 = vunpack.c.h.b16 %v953
    %v1043 = vunpack.c.l.b16 %v954
    %v1044 = vunpack.c.l.b16 %v955
    %v1045 = vunpack.c.h.b16 %v955
    %v1046 = vunpack.c.l.b16 %v956
    %v1047 = vunpack.c.l.b16 %v957
    %v1048 = vunpack.c.h.b16 %v957
    %v1049 = vunpack.c.l.b16 %v958
    %v1050 = vunpack.c.l.b16 %v959
    %v1051 = vunpack.c.h.b16 %v959
    %v1052 = vunpack.c.l.b16 %v960
    %v1053 = vunpack.c.l.b16 %v961
    %v1054 = vunpack.c.h.b16 %v961
    %v1055 = vunpack.c.l.b16 %v962
    %v1056 = vunpack.c.l.b16 %v963
    %v1057 = vunpack.c.h.b16 %v963
    %v1058 = vunpack.c.l.b16 %v964
    %v1059 = vunpack.c.l.b16 %v965
    %v1060 = vunpack.c.h.b16 %v965
    %v1061 = vunpack.c.l.b16 %v966
    %v1062 = vunpack.c.l.b16 %v967
    %v1063 = vunpack.c.h.b16 %v967
    %v1064 = vunpack.c.l.b16 %v968
    %v1065 = vpack.c.b16 %v1020, %v1017
    %v1066 = vpack.c.b16 %v1021, %v1018
    %v1067 = vpack.c.b16 %v1022, %v1019
    %v1068 = vpack.c.b16 %v1026, %v1023
    %v1069 = vpack.c.b16 %v1027, %v1024
    %v1070 = vpack.c.b16 %v1028, %v1025
    %v1071 = vpack.c.b16 %v1032, %v1029
    %v1072 = vpack.c.b16 %v1033, %v1030
    %v1073 = vpack.c.b16 %v1034, %v1031
    %v1074 = vpack.c.b16 %v1038, %v1035
    %v1075 = vpack.c.b16 %v1039, %v1036
    %v1076 = vpack.c.b16 %v1040, %v1037
    %v1077 = vpack.c.b16 %v1044, %v1041
    %v1078 = vpack.c.b16 %v1045, %v1042
    %v1079 = vpack.c.b16 %v1046, %v1043
    %v1080 = vpack.c.b16 %v1050, %v1047
    %v1081 = vpack.c.b16 %v1051, %v1048
    %v1082 = vpack.c.b16 %v1052, %v1049
    %v1083 = vpack.c.b16 %v1056, %v1053
    %v1084 = vpack.c.b16 %v1057, %v1054
    %v1085 = vpack.c.b16 %v1058, %v1055
    %v1086 = vpack.c.b16 %v1062, %v1059
    %v1087 = vpack.c.b16 %v1063, %v1060
    %v1088 = vpack.c.b16 %v1064, %v1061
    %1113 = vmatprep.subr.bf16.mxu0 %v1087
    %1114 = vmatpush1.bf16.msra.mxu0 %v1086
    %1115 = vmatprep.subr.bf16.mxu0 %v1084
    %1116 = vmatpush1.bf16.msra.mxu0 %v1083
    %1117 = vmatprep.subr.bf16.mxu0 %v1081
    %1118 = vmatpush1.bf16.msra.mxu0 %v1080
    %1119 = vmatprep.subr.bf16.mxu0 %v1078
    %1120 = vmatpush1.bf16.msra.mxu0 %v1077
    %1121 = vmatprep.subr.bf16.mxu0 %v1075
    %1122 = vmatpush1.bf16.msra.mxu0 %v1074
    %1123 = vmatprep.subr.bf16.mxu0 %v1072
    %1124 = vmatpush1.bf16.msra.mxu0 %v1071
    %1125 = vmatprep.subr.bf16.mxu0 %v1069
    %1126 = vmatpush1.bf16.msra.mxu0 %v1068
    %1127 = vmatprep.subr.bf16.mxu0 %v1066
    %1128 = vmatpush1.bf16.msra.mxu0 %v1065
    %1129 = vmatprep.subr.bf16.mxu0 0
    %1130 = vmatpush2.bf16.msra.mxu0 0
    %1131 = vmatprep.subr.bf16.mxu0 0
    %1132 = vmatpush2.bf16.msra.mxu0 0
    %1133 = vmatprep.subr.bf16.mxu0 0
    %1134 = vmatpush2.bf16.msra.mxu0 0
    %1135 = vmatprep.subr.bf16.mxu0 0
    %1136 = vmatpush2.bf16.msra.mxu0 0
    %1137 = vmatprep.subr.bf16.mxu0 0
    %1138 = vmatpush2.bf16.msra.mxu0 0
    %1139 = vmatprep.subr.bf16.mxu0 0
    %1140 = vmatpush2.bf16.msra.mxu0 0
    %1141 = vmatprep.subr.bf16.mxu0 0
    %1142 = vmatpush2.bf16.msra.mxu0 0
    %1143 = vmatprep.subr.bf16.mxu0 0
    %1144 = vmatpush2.bf16.msra.mxu0 0
    %1145 = vmatprep.mubr.bf16.mxu0 0
    %1146 = vmatmul.mubr.bf16.gmra.mxu0 %v674
    %v1147 = vpop.f32.mrf.mxu0
    %v1148 = vadd.f32 %v973, %v1147
    %v1149 = vpop.f32.mrf.mxu0
    %v1150 = vadd.f32 %v977, %v1149
    %v1151 = vpop.f32.mrf.mxu0
    %v1152 = vpop.f32.mrf.mxu0
    %1153 = vdwg.mxu0
    %1154 = vmatprep.subr.bf16.mxu0 0
    %1155 = vmatpush1.bf16.msra.mxu0 %v1088
    %1156 = vmatprep.subr.bf16.mxu0 0
    %1157 = vmatpush1.bf16.msra.mxu0 %v1085
    %1158 = vmatprep.subr.bf16.mxu0 0
    %1159 = vmatpush1.bf16.msra.mxu0 %v1082
    %1160 = vmatprep.subr.bf16.mxu0 0
    %1161 = vmatpush1.bf16.msra.mxu0 %v1079
    %1162 = vmatprep.subr.bf16.mxu0 0
    %1163 = vmatpush1.bf16.msra.mxu0 %v1076
    %1164 = vmatprep.subr.bf16.mxu0 0
    %1165 = vmatpush1.bf16.msra.mxu0 %v1073
    %1166 = vmatprep.subr.bf16.mxu0 0
    %1167 = vmatpush1.bf16.msra.mxu0 %v1070
    %1168 = vmatprep.subr.bf16.mxu0 0
    %1169 = vmatpush1.bf16.msra.mxu0 %v1067
    %1170 = vmatprep.subr.bf16.mxu0 0
    %1171 = vmatpush2.bf16.msra.mxu0 0
    %1172 = vmatprep.subr.bf16.mxu0 0
    %1173 = vmatpush2.bf16.msra.mxu0 0
    %1174 = vmatprep.subr.bf16.mxu0 0
    %1175 = vmatpush2.bf16.msra.mxu0 0
    %1176 = vmatprep.subr.bf16.mxu0 0
    %1177 = vmatpush2.bf16.msra.mxu0 0
    %1178 = vmatprep.subr.bf16.mxu0 0
    %1179 = vmatpush2.bf16.msra.mxu0 0
    %1180 = vmatprep.subr.bf16.mxu0 0
    %1181 = vmatpush2.bf16.msra.mxu0 0
    %1182 = vmatprep.subr.bf16.mxu0 0
    %1183 = vmatpush2.bf16.msra.mxu0 0
    %1184 = vmatprep.subr.bf16.mxu0 0
    %1185 = vmatpush2.bf16.msra.mxu0 0
    %1186 = vmatprep.mubr.bf16.mxu0 0
    %1187 = vmatmul.mubr.bf16.gmra.mxu0 %v674
    %v1188 = vpop.f32.mrf.mxu0
    %v1189 = vadd.f32 %v981, %v1188
    %v1190 = vpop.f32.mrf.mxu0
    %v1191 = vpop.f32.mrf.mxu0
    %v1192 = vpop.f32.mrf.mxu0
    %1193 = vdwg.mxu0
    %v1194 = vld [vmem:[#allocation4] sm:$0xff]
    %v1195 = vld [vmem:[#allocation4 + $0x8] sm:$0xf]
    %v1196 = vld [vmem:[#allocation4 + $0xc] sm:$0xff]
    %v1197 = vld [vmem:[#allocation4 + $0x14] sm:$0xf]
    %v1198 = vld [vmem:[#allocation4 + $0x18] sm:$0xff]
    %v1199 = vld [vmem:[#allocation4 + $0x20] sm:$0xf]
    %v1200 = vld [vmem:[#allocation4 + $0x24] sm:$0xff]
    %v1201 = vld [vmem:[#allocation4 + $0x2c] sm:$0xf]
    %v1202 = vld [vmem:[#allocation4 + $0x30] sm:$0xff]
    %v1203 = vld [vmem:[#allocation4 + $0x38] sm:$0xf]
    %v1204 = vld [vmem:[#allocation4 + $0x3c] sm:$0xff]
    %v1205 = vld [vmem:[#allocation4 + $0x44] sm:$0xf]
    %v1206 = vld [vmem:[#allocation4 + $0x48] sm:$0xff]
    %v1207 = vld [vmem:[#allocation4 + $0x50] sm:$0xf]
    %v1208 = vld [vmem:[#allocation4 + $0x54] sm:$0xff]
    %v1209 = vld [vmem:[#allocation4 + $0x5c] sm:$0xf]
    %v1210 = vld [vmem:[#allocation4 + $0x60] sm:$0xff]
    %v1211 = vld [vmem:[#allocation4 + $0x68] sm:$0xf]
    %v1212 = vld [vmem:[#allocation4 + $0x6c] sm:$0xff]
    %v1213 = vld [vmem:[#allocation4 + $0x74] sm:$0xf]
    %v1214 = vld [vmem:[#allocation4 + $0x78] sm:$0xff]
    %v1215 = vld [vmem:[#allocation4 + $0x80] sm:$0xf]
    %v1216 = vld [vmem:[#allocation4 + $0x84] sm:$0xff]
    %v1217 = vld [vmem:[#allocation4 + $0x8c] sm:$0xf]
    %v1218 = vld [vmem:[#allocation4 + $0x90] sm:$0xff]
    %v1219 = vld [vmem:[#allocation4 + $0x98] sm:$0xf]
    %v1220 = vld [vmem:[#allocation4 + $0x9c] sm:$0xff]
    %v1221 = vld [vmem:[#allocation4 + $0xa4] sm:$0xf]
    %v1222 = vld [vmem:[#allocation4 + $0xa8] sm:$0xff]
    %v1223 = vld [vmem:[#allocation4 + $0xb0] sm:$0xf]
    %v1224 = vld [vmem:[#allocation4 + $0xb4] sm:$0xff]
    %v1225 = vld [vmem:[#allocation4 + $0xbc] sm:$0xf]
    %v1258 = vunpack.c.l.b16 %v1194
    %v1259 = vunpack.c.h.b16 %v1194
    %v1260 = vunpack.c.l.b16 %v1195
    %v1261 = vunpack.c.l.b16 %v1196
    %v1262 = vunpack.c.h.b16 %v1196
    %v1263 = vunpack.c.l.b16 %v1197
    %v1264 = vunpack.c.l.b16 %v1198
    %v1265 = vunpack.c.h.b16 %v1198
    %v1266 = vunpack.c.l.b16 %v1199
    %v1267 = vunpack.c.l.b16 %v1200
    %v1268 = vunpack.c.h.b16 %v1200
    %v1269 = vunpack.c.l.b16 %v1201
    %v1270 = vunpack.c.l.b16 %v1202
    %v1271 = vunpack.c.h.b16 %v1202
    %v1272 = vunpack.c.l.b16 %v1203
    %v1273 = vunpack.c.l.b16 %v1204
    %v1274 = vunpack.c.h.b16 %v1204
    %v1275 = vunpack.c.l.b16 %v1205
    %v1276 = vunpack.c.l.b16 %v1206
    %v1277 = vunpack.c.h.b16 %v1206
    %v1278 = vunpack.c.l.b16 %v1207
    %v1279 = vunpack.c.l.b16 %v1208
    %v1280 = vunpack.c.h.b16 %v1208
    %v1281 = vunpack.c.l.b16 %v1209
    %v1282 = vunpack.c.l.b16 %v1210
    %v1283 = vunpack.c.h.b16 %v1210
    %v1284 = vunpack.c.l.b16 %v1211
    %v1285 = vunpack.c.l.b16 %v1212
    %v1286 = vunpack.c.h.b16 %v1212
    %v1287 = vunpack.c.l.b16 %v1213
    %v1288 = vunpack.c.l.b16 %v1214
    %v1289 = vunpack.c.h.b16 %v1214
    %v1290 = vunpack.c.l.b16 %v1215
    %v1291 = vunpack.c.l.b16 %v1216
    %v1292 = vunpack.c.h.b16 %v1216
    %v1293 = vunpack.c.l.b16 %v1217
    %v1294 = vunpack.c.l.b16 %v1218
    %v1295 = vunpack.c.h.b16 %v1218
    %v1296 = vunpack.c.l.b16 %v1219
    %v1297 = vunpack.c.l.b16 %v1220
    %v1298 = vunpack.c.h.b16 %v1220
    %v1299 = vunpack.c.l.b16 %v1221
    %v1300 = vunpack.c.l.b16 %v1222
    %v1301 = vunpack.c.h.b16 %v1222
    %v1302 = vunpack.c.l.b16 %v1223
    %v1303 = vunpack.c.l.b16 %v1224
    %v1304 = vunpack.c.h.b16 %v1224
    %v1305 = vunpack.c.l.b16 %v1225
    %v1306 = vpack.c.b16 %v1261, %v1258
    %v1307 = vpack.c.b16 %v1262, %v1259
    %v1308 = vpack.c.b16 %v1263, %v1260
    %v1309 = vpack.c.b16 %v1267, %v1264
    %v1310 = vpack.c.b16 %v1268, %v1265
    %v1311 = vpack.c.b16 %v1269, %v1266
    %v1312 = vpack.c.b16 %v1273, %v1270
    %v1313 = vpack.c.b16 %v1274, %v1271
    %v1314 = vpack.c.b16 %v1275, %v1272
    %v1315 = vpack.c.b16 %v1279, %v1276
    %v1316 = vpack.c.b16 %v1280, %v1277
    %v1317 = vpack.c.b16 %v1281, %v1278
    %v1318 = vpack.c.b16 %v1285, %v1282
    %v1319 = vpack.c.b16 %v1286, %v1283
    %v1320 = vpack.c.b16 %v1287, %v1284
    %v1321 = vpack.c.b16 %v1291, %v1288
    %v1322 = vpack.c.b16 %v1292, %v1289
    %v1323 = vpack.c.b16 %v1293, %v1290
    %v1324 = vpack.c.b16 %v1297, %v1294
    %v1325 = vpack.c.b16 %v1298, %v1295
    %v1326 = vpack.c.b16 %v1299, %v1296
    %v1327 = vpack.c.b16 %v1303, %v1300
    %v1328 = vpack.c.b16 %v1304, %v1301
    %v1329 = vpack.c.b16 %v1305, %v1302
    %1354 = vmatprep.subr.bf16.mxu0 %v1328
    %1355 = vmatpush1.bf16.msra.mxu0 %v1327
    %1356 = vmatprep.subr.bf16.mxu0 %v1325
    %1357 = vmatpush1.bf16.msra.mxu0 %v1324
    %1358 = vmatprep.subr.bf16.mxu0 %v1322
    %1359 = vmatpush1.bf16.msra.mxu0 %v1321
    %1360 = vmatprep.subr.bf16.mxu0 %v1319
    %1361 = vmatpush1.bf16.msra.mxu0 %v1318
    %1362 = vmatprep.subr.bf16.mxu0 %v1316
    %1363 = vmatpush1.bf16.msra.mxu0 %v1315
    %1364 = vmatprep.subr.bf16.mxu0 %v1313
    %1365 = vmatpush1.bf16.msra.mxu0 %v1312
    %1366 = vmatprep.subr.bf16.mxu0 %v1310
    %1367 = vmatpush1.bf16.msra.mxu0 %v1309
    %1368 = vmatprep.subr.bf16.mxu0 %v1307
    %1369 = vmatpush1.bf16.msra.mxu0 %v1306
    %1370 = vmatprep.subr.bf16.mxu0 0
    %1371 = vmatpush2.bf16.msra.mxu0 0
    %1372 = vmatprep.subr.bf16.mxu0 0
    %1373 = vmatpush2.bf16.msra.mxu0 0
    %1374 = vmatprep.subr.bf16.mxu0 0
    %1375 = vmatpush2.bf16.msra.mxu0 0
    %1376 = vmatprep.subr.bf16.mxu0 0
    %1377 = vmatpush2.bf16.msra.mxu0 0
    %1378 = vmatprep.subr.bf16.mxu0 0
    %1379 = vmatpush2.bf16.msra.mxu0 0
    %1380 = vmatprep.subr.bf16.mxu0 0
    %1381 = vmatpush2.bf16.msra.mxu0 0
    %1382 = vmatprep.subr.bf16.mxu0 0
    %1383 = vmatpush2.bf16.msra.mxu0 0
    %1384 = vmatprep.subr.bf16.mxu0 0
    %1385 = vmatpush2.bf16.msra.mxu0 0
    %1386 = vmatprep.mubr.bf16.mxu0 0
    %1387 = vmatmul.mubr.bf16.gmra.mxu0 0
    %v1388 = vpop.f32.mrf.mxu0
    %v1389 = vadd.f32 0.0, %v1388
    %v1390 = vpop.f32.mrf.mxu0
    %v1391 = vadd.f32 0.0, %v1390
    %v1392 = vpop.f32.mrf.mxu0
    %v1393 = vpop.f32.mrf.mxu0
    %1394 = vdwg.mxu0
    %1395 = vmatprep.subr.bf16.mxu0 0
    %1396 = vmatpush1.bf16.msra.mxu0 %v1329
    %1397 = vmatprep.subr.bf16.mxu0 0
    %1398 = vmatpush1.bf16.msra.mxu0 %v1326
    %1399 = vmatprep.subr.bf16.mxu0 0
    %1400 = vmatpush1.bf16.msra.mxu0 %v1323
    %1401 = vmatprep.subr.bf16.mxu0 0
    %1402 = vmatpush1.bf16.msra.mxu0 %v1320
    %1403 = vmatprep.subr.bf16.mxu0 0
    %1404 = vmatpush1.bf16.msra.mxu0 %v1317
    %1405 = vmatprep.subr.bf16.mxu0 0
    %1406 = vmatpush1.bf16.msra.mxu0 %v1314
    %1407 = vmatprep.subr.bf16.mxu0 0
    %1408 = vmatpush1.bf16.msra.mxu0 %v1311
    %1409 = vmatprep.subr.bf16.mxu0 0
    %1410 = vmatpush1.bf16.msra.mxu0 %v1308
    %1411 = vmatprep.subr.bf16.mxu0 0
    %1412 = vmatpush2.bf16.msra.mxu0 0
    %1413 = vmatprep.subr.bf16.mxu0 0
    %1414 = vmatpush2.bf16.msra.mxu0 0
    %1415 = vmatprep.subr.bf16.mxu0 0
    %1416 = vmatpush2.bf16.msra.mxu0 0
    %1417 = vmatprep.subr.bf16.mxu0 0
    %1418 = vmatpush2.bf16.msra.mxu0 0
    %1419 = vmatprep.subr.bf16.mxu0 0
    %1420 = vmatpush2.bf16.msra.mxu0 0
    %1421 = vmatprep.subr.bf16.mxu0 0
    %1422 = vmatpush2.bf16.msra.mxu0 0
    %1423 = vmatprep.subr.bf16.mxu0 0
    %1424 = vmatpush2.bf16.msra.mxu0 0
    %1425 = vmatprep.subr.bf16.mxu0 0
    %1426 = vmatpush2.bf16.msra.mxu0 0
    %1427 = vmatprep.mubr.bf16.mxu0 0
    %1428 = vmatmul.mubr.bf16.gmra.mxu0 0
    %v1429 = vpop.f32.mrf.mxu0
    %v1430 = vadd.f32 0.0, %v1429
    %v1431 = vpop.f32.mrf.mxu0
    %v1432 = vpop.f32.mrf.mxu0
    %v1433 = vpop.f32.mrf.mxu0
    %1434 = vdwg.mxu0
    %v1435 = vadd.f32 %v1148, %v1389
    %v1436 = vadd.f32 %v1150, %v1391
    %v1437 = vxor.u32 %v1435, 2147483648
    %v1438 = vxor.u32 %v1436, 2147483648
    %v1439 = vmul.f32 %v1437, 1.442695
    %v1440 = vpow.pop %v1439
    %v1441 = vmul.f32 %v1438, 1.442695
    %v1442 = vpow.pop %v1441
    %v1443 = vadd.f32 %v1440, 1.0
    %v1444 = vadd.f32 %v1442, 1.0
    %v1445 = vrcp.pop %v1443
    %v1446 = vmul.f32 1.0, %v1445
    %v1447 = vrcp.pop %v1444
    %v1448 = vmul.f32 1.0, %v1447
    %v1449 = vadd.f32 %v1430, %v398
    %v1450 = vmul.f32 %v1446, %v1449
    %v1451 = vadd.f32 %v1189, %v1450
    %v1452 = vtanh.pop %v1451
    %v1453 = vsub.f32 0.0, %v1452
    %v1454 = vmul.f32 %v1448, %v1453
    %v1455 = vadd.f32 %v1452, %v1454
    %v1456 = vld [vmem:[#allocation2 + $0x30] sm:$0xff]
    %v1457 = vld [vmem:[#allocation2 + $0x38] sm:$0xff]
    %v1458 = vld [vmem:[#allocation2 + $0x40] sm:$0xff]
    %v1459 = vpack.c.bf16 %v936, %v936
    %1460 = vmatprep.subr.bf16.mxu0 %v809
    %1461 = vmatpush1.bf16.msra.mxu0 %v808
    %1462 = vmatprep.subr.bf16.mxu0 %v806
    %1463 = vmatpush1.bf16.msra.mxu0 %v805
    %1464 = vmatprep.subr.bf16.mxu0 %v803
    %1465 = vmatpush1.bf16.msra.mxu0 %v802
    %1466 = vmatprep.subr.bf16.mxu0 %v800
    %1467 = vmatpush1.bf16.msra.mxu0 %v799
    %1468 = vmatprep.subr.bf16.mxu0 %v797
    %1469 = vmatpush1.bf16.msra.mxu0 %v796
    %1470 = vmatprep.subr.bf16.mxu0 %v794
    %1471 = vmatpush1.bf16.msra.mxu0 %v793
    %1472 = vmatprep.subr.bf16.mxu0 %v791
    %1473 = vmatpush1.bf16.msra.mxu0 %v790
    %1474 = vmatprep.subr.bf16.mxu0 %v788
    %1475 = vmatpush1.bf16.msra.mxu0 %v787
    %1476 = vmatprep.subr.bf16.mxu0 0
    %1477 = vmatpush2.bf16.msra.mxu0 0
    %1478 = vmatprep.subr.bf16.mxu0 0
    %1479 = vmatpush2.bf16.msra.mxu0 0
    %1480 = vmatprep.subr.bf16.mxu0 0
    %1481 = vmatpush2.bf16.msra.mxu0 0
    %1482 = vmatprep.subr.bf16.mxu0 0
    %1483 = vmatpush2.bf16.msra.mxu0 0
    %1484 = vmatprep.subr.bf16.mxu0 0
    %1485 = vmatpush2.bf16.msra.mxu0 0
    %1486 = vmatprep.subr.bf16.mxu0 0
    %1487 = vmatpush2.bf16.msra.mxu0 0
    %1488 = vmatprep.subr.bf16.mxu0 0
    %1489 = vmatpush2.bf16.msra.mxu0 0
    %1490 = vmatprep.subr.bf16.mxu0 0
    %1491 = vmatpush2.bf16.msra.mxu0 0
    %1492 = vmatprep.mubr.bf16.mxu0 0
    %1493 = vmatmul.mubr.bf16.gmra.mxu0 %v1459
    %v1494 = vpop.f32.mrf.mxu0
    %v1495 = vadd.f32 0.0, %v1494
    %v1496 = vpop.f32.mrf.mxu0
    %v1497 = vadd.f32 0.0, %v1496
    %v1498 = vpop.f32.mrf.mxu0
    %v1499 = vpop.f32.mrf.mxu0
    %1500 = vdwg.mxu0
    %1501 = vmatprep.subr.bf16.mxu0 0
    %1502 = vmatpush1.bf16.msra.mxu0 %v810
    %1503 = vmatprep.subr.bf16.mxu0 0
    %1504 = vmatpush1.bf16.msra.mxu0 %v807
    %1505 = vmatprep.subr.bf16.mxu0 0
    %1506 = vmatpush1.bf16.msra.mxu0 %v804
    %1507 = vmatprep.subr.bf16.mxu0 0
    %1508 = vmatpush1.bf16.msra.mxu0 %v801
    %1509 = vmatprep.subr.bf16.mxu0 0
    %1510 = vmatpush1.bf16.msra.mxu0 %v798
    %1511 = vmatprep.subr.bf16.mxu0 0
    %1512 = vmatpush1.bf16.msra.mxu0 %v795
    %1513 = vmatprep.subr.bf16.mxu0 0
    %1514 = vmatpush1.bf16.msra.mxu0 %v792
    %1515 = vmatprep.subr.bf16.mxu0 0
    %1516 = vmatpush1.bf16.msra.mxu0 %v789
    %1517 = vmatprep.subr.bf16.mxu0 0
    %1518 = vmatpush2.bf16.msra.mxu0 0
    %1519 = vmatprep.subr.bf16.mxu0 0
    %1520 = vmatpush2.bf16.msra.mxu0 0
    %1521 = vmatprep.subr.bf16.mxu0 0
    %1522 = vmatpush2.bf16.msra.mxu0 0
    %1523 = vmatprep.subr.bf16.mxu0 0
    %1524 = vmatpush2.bf16.msra.mxu0 0
    %1525 = vmatprep.subr.bf16.mxu0 0
    %1526 = vmatpush2.bf16.msra.mxu0 0
    %1527 = vmatprep.subr.bf16.mxu0 0
    %1528 = vmatpush2.bf16.msra.mxu0 0
    %1529 = vmatprep.subr.bf16.mxu0 0
    %1530 = vmatpush2.bf16.msra.mxu0 0
    %1531 = vmatprep.subr.bf16.mxu0 0
    %1532 = vmatpush2.bf16.msra.mxu0 0
    %1533 = vmatprep.mubr.bf16.mxu0 0
    %1534 = vmatmul.mubr.bf16.gmra.mxu0 %v1459
    %v1535 = vpop.f32.mrf.mxu0
    %v1536 = vadd.f32 0.0, %v1535
    %v1537 = vpop.f32.mrf.mxu0
    %v1538 = vpop.f32.mrf.mxu0
    %v1539 = vpop.f32.mrf.mxu0
    %1540 = vdwg.mxu0
    %v1541 = vadd.f32 %v1456, %v1495
    %v1542 = vadd.f32 %v1457, %v1497
    %v1543 = vxor.u32 %v1541, 2147483648
    %v1544 = vxor.u32 %v1542, 2147483648
    %v1545 = vmul.f32 %v1543, 1.442695
    %v1546 = vpow.pop %v1545
    %v1547 = vmul.f32 %v1544, 1.442695
    %v1548 = vpow.pop %v1547
    %v1549 = vadd.f32 %v1546, 1.0
    %v1550 = vadd.f32 %v1548, 1.0
    %v1551 = vrcp.pop %v1549
    %v1552 = vmul.f32 1.0, %v1551
    %v1553 = vrcp.pop %v1550
    %v1554 = vmul.f32 1.0, %v1553
    %v1555 = vadd.f32 %v1536, %v397
    %v1556 = vmul.f32 %v1552, %v1555
    %v1557 = vadd.f32 %v1458, %v1556
    %v1558 = vtanh.pop %v1557
    %v1559 = vsub.f32 %v936, %v1558
    %v1560 = vmul.f32 %v1554, %v1559
    %v1561 = vadd.f32 %v1558, %v1560
    %1562 = vmatprep.subr.bf16.mxu0 %v1087
    %1563 = vmatpush1.bf16.msra.mxu0 %v1086
    %1564 = vmatprep.subr.bf16.mxu0 %v1084
    %1565 = vmatpush1.bf16.msra.mxu0 %v1083
    %1566 = vmatprep.subr.bf16.mxu0 %v1081
    %1567 = vmatpush1.bf16.msra.mxu0 %v1080
    %1568 = vmatprep.subr.bf16.mxu0 %v1078
    %1569 = vmatpush1.bf16.msra.mxu0 %v1077
    %1570 = vmatprep.subr.bf16.mxu0 %v1075
    %1571 = vmatpush1.bf16.msra.mxu0 %v1074
    %1572 = vmatprep.subr.bf16.mxu0 %v1072
    %1573 = vmatpush1.bf16.msra.mxu0 %v1071
    %1574 = vmatprep.subr.bf16.mxu0 %v1069
    %1575 = vmatpush1.bf16.msra.mxu0 %v1068
    %1576 = vmatprep.subr.bf16.mxu0 %v1066
    %1577 = vmatpush1.bf16.msra.mxu0 %v1065
    %1578 = vmatprep.subr.bf16.mxu0 0
    %1579 = vmatpush2.bf16.msra.mxu0 0
    %1580 = vmatprep.subr.bf16.mxu0 0
    %1581 = vmatpush2.bf16.msra.mxu0 0
    %1582 = vmatprep.subr.bf16.mxu0 0
    %1583 = vmatpush2.bf16.msra.mxu0 0
    %1584 = vmatprep.subr.bf16.mxu0 0
    %1585 = vmatpush2.bf16.msra.mxu0 0
    %1586 = vmatprep.subr.bf16.mxu0 0
    %1587 = vmatpush2.bf16.msra.mxu0 0
    %1588 = vmatprep.subr.bf16.mxu0 0
    %1589 = vmatpush2.bf16.msra.mxu0 0
    %1590 = vmatprep.subr.bf16.mxu0 0
    %1591 = vmatpush2.bf16.msra.mxu0 0
    %1592 = vmatprep.subr.bf16.mxu0 0
    %1593 = vmatpush2.bf16.msra.mxu0 0
    %1594 = vmatprep.mubr.bf16.mxu0 0
    %1595 = vmatmul.mubr.bf16.gmra.mxu0 %v1459
    %v1596 = vpop.f32.mrf.mxu0
    %v1597 = vadd.f32 %v973, %v1596
    %v1598 = vpop.f32.mrf.mxu0
    %v1599 = vadd.f32 %v977, %v1598
    %v1600 = vpop.f32.mrf.mxu0
    %v1601 = vpop.f32.mrf.mxu0
    %1602 = vdwg.mxu0
    %1603 = vmatprep.subr.bf16.mxu0 0
    %1604 = vmatpush1.bf16.msra.mxu0 %v1088
    %1605 = vmatprep.subr.bf16.mxu0 0
    %1606 = vmatpush1.bf16.msra.mxu0 %v1085
    %1607 = vmatprep.subr.bf16.mxu0 0
    %1608 = vmatpush1.bf16.msra.mxu0 %v1082
    %1609 = vmatprep.subr.bf16.mxu0 0
    %1610 = vmatpush1.bf16.msra.mxu0 %v1079
    %1611 = vmatprep.subr.bf16.mxu0 0
    %1612 = vmatpush1.bf16.msra.mxu0 %v1076
    %1613 = vmatprep.subr.bf16.mxu0 0
    %1614 = vmatpush1.bf16.msra.mxu0 %v1073
    %1615 = vmatprep.subr.bf16.mxu0 0
    %1616 = vmatpush1.bf16.msra.mxu0 %v1070
    %1617 = vmatprep.subr.bf16.mxu0 0
    %1618 = vmatpush1.bf16.msra.mxu0 %v1067
    %1619 = vmatprep.subr.bf16.mxu0 0
    %1620 = vmatpush2.bf16.msra.mxu0 0
    %1621 = vmatprep.subr.bf16.mxu0 0
    %1622 = vmatpush2.bf16.msra.mxu0 0
    %1623 = vmatprep.subr.bf16.mxu0 0
    %1624 = vmatpush2.bf16.msra.mxu0 0
    %1625 = vmatprep.subr.bf16.mxu0 0
    %1626 = vmatpush2.bf16.msra.mxu0 0
    %1627 = vmatprep.subr.bf16.mxu0 0
    %1628 = vmatpush2.bf16.msra.mxu0 0
    %1629 = vmatprep.subr.bf16.mxu0 0
    %1630 = vmatpush2.bf16.msra.mxu0 0
    %1631 = vmatprep.subr.bf16.mxu0 0
    %1632 = vmatpush2.bf16.msra.mxu0 0
    %1633 = vmatprep.subr.bf16.mxu0 0
    %1634 = vmatpush2.bf16.msra.mxu0 0
    %1635 = vmatprep.mubr.bf16.mxu0 0
    %1636 = vmatmul.mubr.bf16.gmra.mxu0 %v1459
    %v1637 = vpop.f32.mrf.mxu0
    %v1638 = vadd.f32 %v981, %v1637
    %v1639 = vpop.f32.mrf.mxu0
    %v1640 = vpop.f32.mrf.mxu0
    %v1641 = vpop.f32.mrf.mxu0
    %1642 = vdwg.mxu0
    %v1643 = vpack.c.bf16 %v1455, %v1455
    %1644 = vmatprep.subr.bf16.mxu0 %v1328
    %1645 = vmatpush1.bf16.msra.mxu0 %v1327
    %1646 = vmatprep.subr.bf16.mxu0 %v1325
    %1647 = vmatpush1.bf16.msra.mxu0 %v1324
    %1648 = vmatprep.subr.bf16.mxu0 %v1322
    %1649 = vmatpush1.bf16.msra.mxu0 %v1321
    %1650 = vmatprep.subr.bf16.mxu0 %v1319
    %1651 = vmatpush1.bf16.msra.mxu0 %v1318
    %1652 = vmatprep.subr.bf16.mxu0 %v1316
    %1653 = vmatpush1.bf16.msra.mxu0 %v1315
    %1654 = vmatprep.subr.bf16.mxu0 %v1313
    %1655 = vmatpush1.bf16.msra.mxu0 %v1312
    %1656 = vmatprep.subr.bf16.mxu0 %v1310
    %1657 = vmatpush1.bf16.msra.mxu0 %v1309
    %1658 = vmatprep.subr.bf16.mxu0 %v1307
    %1659 = vmatpush1.bf16.msra.mxu0 %v1306
    %1660 = vmatprep.subr.bf16.mxu0 0
    %1661 = vmatpush2.bf16.msra.mxu0 0
    %1662 = vmatprep.subr.bf16.mxu0 0
    %1663 = vmatpush2.bf16.msra.mxu0 0
    %1664 = vmatprep.subr.bf16.mxu0 0
    %1665 = vmatpush2.bf16.msra.mxu0 0
    %1666 = vmatprep.subr.bf16.mxu0 0
    %1667 = vmatpush2.bf16.msra.mxu0 0
    %1668 = vmatprep.subr.bf16.mxu0 0
    %1669 = vmatpush2.bf16.msra.mxu0 0
    %1670 = vmatprep.subr.bf16.mxu0 0
    %1671 = vmatpush2.bf16.msra.mxu0 0
    %1672 = vmatprep.subr.bf16.mxu0 0
    %1673 = vmatpush2.bf16.msra.mxu0 0
    %1674 = vmatprep.subr.bf16.mxu0 0
    %1675 = vmatpush2.bf16.msra.mxu0 0
    %1676 = vmatprep.mubr.bf16.mxu0 0
    %1677 = vmatmul.mubr.bf16.gmra.mxu0 %v1643
    %v1678 = vpop.f32.mrf.mxu0
    %v1679 = vadd.f32 0.0, %v1678
    %v1680 = vpop.f32.mrf.mxu0
    %v1681 = vadd.f32 0.0, %v1680
    %v1682 = vpop.f32.mrf.mxu0
    %v1683 = vpop.f32.mrf.mxu0
    %1684 = vdwg.mxu0
    %1685 = vmatprep.subr.bf16.mxu0 0
    %1686 = vmatpush1.bf16.msra.mxu0 %v1329
    %1687 = vmatprep.subr.bf16.mxu0 0
    %1688 = vmatpush1.bf16.msra.mxu0 %v1326
    %1689 = vmatprep.subr.bf16.mxu0 0
    %1690 = vmatpush1.bf16.msra.mxu0 %v1323
    %1691 = vmatprep.subr.bf16.mxu0 0
    %1692 = vmatpush1.bf16.msra.mxu0 %v1320
    %1693 = vmatprep.subr.bf16.mxu0 0
    %1694 = vmatpush1.bf16.msra.mxu0 %v1317
    %1695 = vmatprep.subr.bf16.mxu0 0
    %1696 = vmatpush1.bf16.msra.mxu0 %v1314
    %1697 = vmatprep.subr.bf16.mxu0 0
    %1698 = vmatpush1.bf16.msra.mxu0 %v1311
    %1699 = vmatprep.subr.bf16.mxu0 0
    %1700 = vmatpush1.bf16.msra.mxu0 %v1308
    %1701 = vmatprep.subr.bf16.mxu0 0
    %1702 = vmatpush2.bf16.msra.mxu0 0
    %1703 = vmatprep.subr.bf16.mxu0 0
    %1704 = vmatpush2.bf16.msra.mxu0 0
    %1705 = vmatprep.subr.bf16.mxu0 0
    %1706 = vmatpush2.bf16.msra.mxu0 0
    %1707 = vmatprep.subr.bf16.mxu0 0
    %1708 = vmatpush2.bf16.msra.mxu0 0
    %1709 = vmatprep.subr.bf16.mxu0 0
    %1710 = vmatpush2.bf16.msra.mxu0 0
    %1711 = vmatprep.subr.bf16.mxu0 0
    %1712 = vmatpush2.bf16.msra.mxu0 0
    %1713 = vmatprep.subr.bf16.mxu0 0
    %1714 = vmatpush2.bf16.msra.mxu0 0
    %1715 = vmatprep.subr.bf16.mxu0 0
    %1716 = vmatpush2.bf16.msra.mxu0 0
    %1717 = vmatprep.mubr.bf16.mxu0 0
    %1718 = vmatmul.mubr.bf16.gmra.mxu0 %v1643
    %v1719 = vpop.f32.mrf.mxu0
    %v1720 = vadd.f32 0.0, %v1719
    %v1721 = vpop.f32.mrf.mxu0
    %v1722 = vpop.f32.mrf.mxu0
    %v1723 = vpop.f32.mrf.mxu0
    %1724 = vdwg.mxu0
    %v1725 = vadd.f32 %v1597, %v1679
    %v1726 = vadd.f32 %v1599, %v1681
    %v1727 = vxor.u32 %v1725, 2147483648
    %v1728 = vxor.u32 %v1726, 2147483648
    %v1729 = vmul.f32 %v1727, 1.442695
    %v1730 = vpow.pop %v1729
    %v1731 = vmul.f32 %v1728, 1.442695
    %v1732 = vpow.pop %v1731
    %v1733 = vadd.f32 %v1730, 1.0
    %v1734 = vadd.f32 %v1732, 1.0
    %v1735 = vrcp.pop %v1733
    %v1736 = vmul.f32 1.0, %v1735
    %v1737 = vrcp.pop %v1734
    %v1738 = vmul.f32 1.0, %v1737
    %v1739 = vadd.f32 %v1720, %v398
    %v1740 = vmul.f32 %v1736, %v1739
    %v1741 = vadd.f32 %v1638, %v1740
    %v1742 = vtanh.pop %v1741
    %v1743 = vsub.f32 %v1455, %v1742
    %v1744 = vmul.f32 %v1738, %v1743
    %v1745 = vadd.f32 %v1742, %v1744
    %v1746 = vld [vmem:[#allocation2 + $0x48] sm:$0xff]
    %v1747 = vld [vmem:[#allocation2 + $0x50] sm:$0xff]
    %v1748 = vld [vmem:[#allocation2 + $0x58] sm:$0xff]
    %v1749 = vpack.c.bf16 %v1561, %v1561
    %1750 = vmatprep.subr.bf16.mxu0 %v809
    %1751 = vmatpush1.bf16.msra.mxu0 %v808
    %1752 = vmatprep.subr.bf16.mxu0 %v806
    %1753 = vmatpush1.bf16.msra.mxu0 %v805
    %1754 = vmatprep.subr.bf16.mxu0 %v803
    %1755 = vmatpush1.bf16.msra.mxu0 %v802
    %1756 = vmatprep.subr.bf16.mxu0 %v800
    %1757 = vmatpush1.bf16.msra.mxu0 %v799
    %1758 = vmatprep.subr.bf16.mxu0 %v797
    %1759 = vmatpush1.bf16.msra.mxu0 %v796
    %1760 = vmatprep.subr.bf16.mxu0 %v794
    %1761 = vmatpush1.bf16.msra.mxu0 %v793
    %1762 = vmatprep.subr.bf16.mxu0 %v791
    %1763 = vmatpush1.bf16.msra.mxu0 %v790
    %1764 = vmatprep.subr.bf16.mxu0 %v788
    %1765 = vmatpush1.bf16.msra.mxu0 %v787
    %1766 = vmatprep.subr.bf16.mxu0 0
    %1767 = vmatpush2.bf16.msra.mxu0 0
    %1768 = vmatprep.subr.bf16.mxu0 0
    %1769 = vmatpush2.bf16.msra.mxu0 0
    %1770 = vmatprep.subr.bf16.mxu0 0
    %1771 = vmatpush2.bf16.msra.mxu0 0
    %1772 = vmatprep.subr.bf16.mxu0 0
    %1773 = vmatpush2.bf16.msra.mxu0 0
    %1774 = vmatprep.subr.bf16.mxu0 0
    %1775 = vmatpush2.bf16.msra.mxu0 0
    %1776 = vmatprep.subr.bf16.mxu0 0
    %1777 = vmatpush2.bf16.msra.mxu0 0
    %1778 = vmatprep.subr.bf16.mxu0 0
    %1779 = vmatpush2.bf16.msra.mxu0 0
    %1780 = vmatprep.subr.bf16.mxu0 0
    %1781 = vmatpush2.bf16.msra.mxu0 0
    %1782 = vmatprep.mubr.bf16.mxu0 0
    %1783 = vmatmul.mubr.bf16.gmra.mxu0 %v1749
    %v1784 = vpop.f32.mrf.mxu0
    %v1785 = vadd.f32 0.0, %v1784
    %v1786 = vpop.f32.mrf.mxu0
    %v1787 = vadd.f32 0.0, %v1786
    %v1788 = vpop.f32.mrf.mxu0
    %v1789 = vpop.f32.mrf.mxu0
    %1790 = vdwg.mxu0
    %1791 = vmatprep.subr.bf16.mxu0 0
    %1792 = vmatpush1.bf16.msra.mxu0 %v810
    %1793 = vmatprep.subr.bf16.mxu0 0
    %1794 = vmatpush1.bf16.msra.mxu0 %v807
    %1795 = vmatprep.subr.bf16.mxu0 0
    %1796 = vmatpush1.bf16.msra.mxu0 %v804
    %1797 = vmatprep.subr.bf16.mxu0 0
    %1798 = vmatpush1.bf16.msra.mxu0 %v801
    %1799 = vmatprep.subr.bf16.mxu0 0
    %1800 = vmatpush1.bf16.msra.mxu0 %v798
    %1801 = vmatprep.subr.bf16.mxu0 0
    %1802 = vmatpush1.bf16.msra.mxu0 %v795
    %1803 = vmatprep.subr.bf16.mxu0 0
    %1804 = vmatpush1.bf16.msra.mxu0 %v792
    %1805 = vmatprep.subr.bf16.mxu0 0
    %1806 = vmatpush1.bf16.msra.mxu0 %v789
    %1807 = vmatprep.subr.bf16.mxu0 0
    %1808 = vmatpush2.bf16.msra.mxu0 0
    %1809 = vmatprep.subr.bf16.mxu0 0
    %1810 = vmatpush2.bf16.msra.mxu0 0
    %1811 = vmatprep.subr.bf16.mxu0 0
    %1812 = vmatpush2.bf16.msra.mxu0 0
    %1813 = vmatprep.subr.bf16.mxu0 0
    %1814 = vmatpush2.bf16.msra.mxu0 0
    %1815 = vmatprep.subr.bf16.mxu0 0
    %1816 = vmatpush2.bf16.msra.mxu0 0
    %1817 = vmatprep.subr.bf16.mxu0 0
    %1818 = vmatpush2.bf16.msra.mxu0 0
    %1819 = vmatprep.subr.bf16.mxu0 0
    %1820 = vmatpush2.bf16.msra.mxu0 0
    %1821 = vmatprep.subr.bf16.mxu0 0
    %1822 = vmatpush2.bf16.msra.mxu0 0
    %1823 = vmatprep.mubr.bf16.mxu0 0
    %1824 = vmatmul.mubr.bf16.gmra.mxu0 %v1749
    %v1825 = vpop.f32.mrf.mxu0
    %v1826 = vadd.f32 0.0, %v1825
    %v1827 = vpop.f32.mrf.mxu0
    %v1828 = vpop.f32.mrf.mxu0
    %v1829 = vpop.f32.mrf.mxu0
    %1830 = vdwg.mxu0
    %v1831 = vadd.f32 %v1746, %v1785
    %v1832 = vadd.f32 %v1747, %v1787
    %v1833 = vxor.u32 %v1831, 2147483648
    %v1834 = vxor.u32 %v1832, 2147483648
    %v1835 = vmul.f32 %v1833, 1.442695
    %v1836 = vpow.pop %v1835
    %v1837 = vmul.f32 %v1834, 1.442695
    %v1838 = vpow.pop %v1837
    %v1839 = vadd.f32 %v1836, 1.0
    %v1840 = vadd.f32 %v1838, 1.0
    %v1841 = vrcp.pop %v1839
    %v1842 = vmul.f32 1.0, %v1841
    %v1843 = vrcp.pop %v1840
    %v1844 = vmul.f32 1.0, %v1843
    %v1845 = vadd.f32 %v1826, %v397
    %v1846 = vmul.f32 %v1842, %v1845
    %v1847 = vadd.f32 %v1748, %v1846
    %v1848 = vtanh.pop %v1847
    %v1849 = vsub.f32 %v1561, %v1848
    %v1850 = vmul.f32 %v1844, %v1849
    %v1851 = vadd.f32 %v1848, %v1850
    %1852 = vmatprep.subr.bf16.mxu0 %v1087
    %1853 = vmatpush1.bf16.msra.mxu0 %v1086
    %1854 = vmatprep.subr.bf16.mxu0 %v1084
    %1855 = vmatpush1.bf16.msra.mxu0 %v1083
    %1856 = vmatprep.subr.bf16.mxu0 %v1081
    %1857 = vmatpush1.bf16.msra.mxu0 %v1080
    %1858 = vmatprep.subr.bf16.mxu0 %v1078
    %1859 = vmatpush1.bf16.msra.mxu0 %v1077
    %1860 = vmatprep.subr.bf16.mxu0 %v1075
    %1861 = vmatpush1.bf16.msra.mxu0 %v1074
    %1862 = vmatprep.subr.bf16.mxu0 %v1072
    %1863 = vmatpush1.bf16.msra.mxu0 %v1071
    %1864 = vmatprep.subr.bf16.mxu0 %v1069
    %1865 = vmatpush1.bf16.msra.mxu0 %v1068
    %1866 = vmatprep.subr.bf16.mxu0 %v1066
    %1867 = vmatpush1.bf16.msra.mxu0 %v1065
    %1868 = vmatprep.subr.bf16.mxu0 0
    %1869 = vmatpush2.bf16.msra.mxu0 0
    %1870 = vmatprep.subr.bf16.mxu0 0
    %1871 = vmatpush2.bf16.msra.mxu0 0
    %1872 = vmatprep.subr.bf16.mxu0 0
    %1873 = vmatpush2.bf16.msra.mxu0 0
    %1874 = vmatprep.subr.bf16.mxu0 0
    %1875 = vmatpush2.bf16.msra.mxu0 0
    %1876 = vmatprep.subr.bf16.mxu0 0
    %1877 = vmatpush2.bf16.msra.mxu0 0
    %1878 = vmatprep.subr.bf16.mxu0 0
    %1879 = vmatpush2.bf16.msra.mxu0 0
    %1880 = vmatprep.subr.bf16.mxu0 0
    %1881 = vmatpush2.bf16.msra.mxu0 0
    %1882 = vmatprep.subr.bf16.mxu0 0
    %1883 = vmatpush2.bf16.msra.mxu0 0
    %1884 = vmatprep.mubr.bf16.mxu0 0
    %1885 = vmatmul.mubr.bf16.gmra.mxu0 %v1749
    %v1886 = vpop.f32.mrf.mxu0
    %v1887 = vadd.f32 %v973, %v1886
    %v1888 = vpop.f32.mrf.mxu0
    %v1889 = vadd.f32 %v977, %v1888
    %v1890 = vpop.f32.mrf.mxu0
    %v1891 = vpop.f32.mrf.mxu0
    %1892 = vdwg.mxu0
    %1893 = vmatprep.subr.bf16.mxu0 0
    %1894 = vmatpush1.bf16.msra.mxu0 %v1088
    %1895 = vmatprep.subr.bf16.mxu0 0
    %1896 = vmatpush1.bf16.msra.mxu0 %v1085
    %1897 = vmatprep.subr.bf16.mxu0 0
    %1898 = vmatpush1.bf16.msra.mxu0 %v1082
    %1899 = vmatprep.subr.bf16.mxu0 0
    %1900 = vmatpush1.bf16.msra.mxu0 %v1079
    %1901 = vmatprep.subr.bf16.mxu0 0
    %1902 = vmatpush1.bf16.msra.mxu0 %v1076
    %1903 = vmatprep.subr.bf16.mxu0 0
    %1904 = vmatpush1.bf16.msra.mxu0 %v1073
    %1905 = vmatprep.subr.bf16.mxu0 0
    %1906 = vmatpush1.bf16.msra.mxu0 %v1070
    %1907 = vmatprep.subr.bf16.mxu0 0
    %1908 = vmatpush1.bf16.msra.mxu0 %v1067
    %1909 = vmatprep.subr.bf16.mxu0 0
    %1910 = vmatpush2.bf16.msra.mxu0 0
    %1911 = vmatprep.subr.bf16.mxu0 0
    %1912 = vmatpush2.bf16.msra.mxu0 0
    %1913 = vmatprep.subr.bf16.mxu0 0
    %1914 = vmatpush2.bf16.msra.mxu0 0
    %1915 = vmatprep.subr.bf16.mxu0 0
    %1916 = vmatpush2.bf16.msra.mxu0 0
    %1917 = vmatprep.subr.bf16.mxu0 0
    %1918 = vmatpush2.bf16.msra.mxu0 0
    %1919 = vmatprep.subr.bf16.mxu0 0
    %1920 = vmatpush2.bf16.msra.mxu0 0
    %1921 = vmatprep.subr.bf16.mxu0 0
    %1922 = vmatpush2.bf16.msra.mxu0 0
    %1923 = vmatprep.subr.bf16.mxu0 0
    %1924 = vmatpush2.bf16.msra.mxu0 0
    %1925 = vmatprep.mubr.bf16.mxu0 0
    %1926 = vmatmul.mubr.bf16.gmra.mxu0 %v1749
    %v1927 = vpop.f32.mrf.mxu0
    %v1928 = vadd.f32 %v981, %v1927
    %v1929 = vpop.f32.mrf.mxu0
    %v1930 = vpop.f32.mrf.mxu0
    %v1931 = vpop.f32.mrf.mxu0
    %1932 = vdwg.mxu0
    %v1933 = vpack.c.bf16 %v1745, %v1745
    %1934 = vmatprep.subr.bf16.mxu0 %v1328
    %1935 = vmatpush1.bf16.msra.mxu0 %v1327
    %1936 = vmatprep.subr.bf16.mxu0 %v1325
    %1937 = vmatpush1.bf16.msra.mxu0 %v1324
    %1938 = vmatprep.subr.bf16.mxu0 %v1322
    %1939 = vmatpush1.bf16.msra.mxu0 %v1321
    %1940 = vmatprep.subr.bf16.mxu0 %v1319
    %1941 = vmatpush1.bf16.msra.mxu0 %v1318
    %1942 = vmatprep.subr.bf16.mxu0 %v1316
    %1943 = vmatpush1.bf16.msra.mxu0 %v1315
    %1944 = vmatprep.subr.bf16.mxu0 %v1313
    %1945 = vmatpush1.bf16.msra.mxu0 %v1312
    %1946 = vmatprep.subr.bf16.mxu0 %v1310
    %1947 = vmatpush1.bf16.msra.mxu0 %v1309
    %1948 = vmatprep.subr.bf16.mxu0 %v1307
    %1949 = vmatpush1.bf16.msra.mxu0 %v1306
    %1950 = vmatprep.subr.bf16.mxu0 0
    %1951 = vmatpush2.bf16.msra.mxu0 0
    %1952 = vmatprep.subr.bf16.mxu0 0
    %1953 = vmatpush2.bf16.msra.mxu0 0
    %1954 = vmatprep.subr.bf16.mxu0 0
    %1955 = vmatpush2.bf16.msra.mxu0 0
    %1956 = vmatprep.subr.bf16.mxu0 0
    %1957 = vmatpush2.bf16.msra.mxu0 0
    %1958 = vmatprep.subr.bf16.mxu0 0
    %1959 = vmatpush2.bf16.msra.mxu0 0
    %1960 = vmatprep.subr.bf16.mxu0 0
    %1961 = vmatpush2.bf16.msra.mxu0 0
    %1962 = vmatprep.subr.bf16.mxu0 0
    %1963 = vmatpush2.bf16.msra.mxu0 0
    %1964 = vmatprep.subr.bf16.mxu0 0
    %1965 = vmatpush2.bf16.msra.mxu0 0
    %1966 = vmatprep.mubr.bf16.mxu0 0
    %1967 = vmatmul.mubr.bf16.gmra.mxu0 %v1933
    %v1968 = vpop.f32.mrf.mxu0
    %v1969 = vadd.f32 0.0, %v1968
    %v1970 = vpop.f32.mrf.mxu0
    %v1971 = vadd.f32 0.0, %v1970
    %v1972 = vpop.f32.mrf.mxu0
    %v1973 = vpop.f32.mrf.mxu0
    %1974 = vdwg.mxu0
    %1975 = vmatprep.subr.bf16.mxu0 0
    %1976 = vmatpush1.bf16.msra.mxu0 %v1329
    %1977 = vmatprep.subr.bf16.mxu0 0
    %1978 = vmatpush1.bf16.msra.mxu0 %v1326
    %1979 = vmatprep.subr.bf16.mxu0 0
    %1980 = vmatpush1.bf16.msra.mxu0 %v1323
    %1981 = vmatprep.subr.bf16.mxu0 0
    %1982 = vmatpush1.bf16.msra.mxu0 %v1320
    %1983 = vmatprep.subr.bf16.mxu0 0
    %1984 = vmatpush1.bf16.msra.mxu0 %v1317
    %1985 = vmatprep.subr.bf16.mxu0 0
    %1986 = vmatpush1.bf16.msra.mxu0 %v1314
    %1987 = vmatprep.subr.bf16.mxu0 0
    %1988 = vmatpush1.bf16.msra.mxu0 %v1311
    %1989 = vmatprep.subr.bf16.mxu0 0
    %1990 = vmatpush1.bf16.msra.mxu0 %v1308
    %1991 = vmatprep.subr.bf16.mxu0 0
    %1992 = vmatpush2.bf16.msra.mxu0 0
    %1993 = vmatprep.subr.bf16.mxu0 0
    %1994 = vmatpush2.bf16.msra.mxu0 0
    %1995 = vmatprep.subr.bf16.mxu0 0
    %1996 = vmatpush2.bf16.msra.mxu0 0
    %1997 = vmatprep.subr.bf16.mxu0 0
    %1998 = vmatpush2.bf16.msra.mxu0 0
    %1999 = vmatprep.subr.bf16.mxu0 0
    %2000 = vmatpush2.bf16.msra.mxu0 0
    %2001 = vmatprep.subr.bf16.mxu0 0
    %2002 = vmatpush2.bf16.msra.mxu0 0
    %2003 = vmatprep.subr.bf16.mxu0 0
    %2004 = vmatpush2.bf16.msra.mxu0 0
    %2005 = vmatprep.subr.bf16.mxu0 0
    %2006 = vmatpush2.bf16.msra.mxu0 0
    %2007 = vmatprep.mubr.bf16.mxu0 0
    %2008 = vmatmul.mubr.bf16.gmra.mxu0 %v1933
    %v2009 = vpop.f32.mrf.mxu0
    %v2010 = vadd.f32 0.0, %v2009
    %v2011 = vpop.f32.mrf.mxu0
    %v2012 = vpop.f32.mrf.mxu0
    %v2013 = vpop.f32.mrf.mxu0
    %2014 = vdwg.mxu0
    %v2015 = vadd.f32 %v1887, %v1969
    %v2016 = vadd.f32 %v1889, %v1971
    %v2017 = vxor.u32 %v2015, 2147483648
    %v2018 = vxor.u32 %v2016, 2147483648
    %v2019 = vmul.f32 %v2017, 1.442695
    %v2020 = vpow.pop %v2019
    %v2021 = vmul.f32 %v2018, 1.442695
    %v2022 = vpow.pop %v2021
    %v2023 = vadd.f32 %v2020, 1.0
    %v2024 = vadd.f32 %v2022, 1.0
    %v2025 = vrcp.pop %v2023
    %v2026 = vmul.f32 1.0, %v2025
    %v2027 = vrcp.pop %v2024
    %v2028 = vmul.f32 1.0, %v2027
    %v2029 = vadd.f32 %v2010, %v398
    %v2030 = vmul.f32 %v2026, %v2029
    %v2031 = vadd.f32 %v1928, %v2030
    %v2032 = vtanh.pop %v2031
    %v2033 = vsub.f32 %v1745, %v2032
    %v2034 = vmul.f32 %v2028, %v2033
    %v2035 = vadd.f32 %v2032, %v2034
    %v2036 = vld [vmem:[#allocation2 + $0x60] sm:$0xff]
    %v2037 = vld [vmem:[#allocation2 + $0x68] sm:$0xff]
    %v2038 = vld [vmem:[#allocation2 + $0x70] sm:$0xff]
    %v2039 = vpack.c.bf16 %v1851, %v1851
    %2040 = vmatprep.subr.bf16.mxu0 %v809
    %2041 = vmatpush1.bf16.msra.mxu0 %v808
    %2042 = vmatprep.subr.bf16.mxu0 %v806
    %2043 = vmatpush1.bf16.msra.mxu0 %v805
    %2044 = vmatprep.subr.bf16.mxu0 %v803
    %2045 = vmatpush1.bf16.msra.mxu0 %v802
    %2046 = vmatprep.subr.bf16.mxu0 %v800
    %2047 = vmatpush1.bf16.msra.mxu0 %v799
    %2048 = vmatprep.subr.bf16.mxu0 %v797
    %2049 = vmatpush1.bf16.msra.mxu0 %v796
    %2050 = vmatprep.subr.bf16.mxu0 %v794
    %2051 = vmatpush1.bf16.msra.mxu0 %v793
    %2052 = vmatprep.subr.bf16.mxu0 %v791
    %2053 = vmatpush1.bf16.msra.mxu0 %v790
    %2054 = vmatprep.subr.bf16.mxu0 %v788
    %2055 = vmatpush1.bf16.msra.mxu0 %v787
    %2056 = vmatprep.subr.bf16.mxu0 0
    %2057 = vmatpush2.bf16.msra.mxu0 0
    %2058 = vmatprep.subr.bf16.mxu0 0
    %2059 = vmatpush2.bf16.msra.mxu0 0
    %2060 = vmatprep.subr.bf16.mxu0 0
    %2061 = vmatpush2.bf16.msra.mxu0 0
    %2062 = vmatprep.subr.bf16.mxu0 0
    %2063 = vmatpush2.bf16.msra.mxu0 0
    %2064 = vmatprep.subr.bf16.mxu0 0
    %2065 = vmatpush2.bf16.msra.mxu0 0
    %2066 = vmatprep.subr.bf16.mxu0 0
    %2067 = vmatpush2.bf16.msra.mxu0 0
    %2068 = vmatprep.subr.bf16.mxu0 0
    %2069 = vmatpush2.bf16.msra.mxu0 0
    %2070 = vmatprep.subr.bf16.mxu0 0
    %2071 = vmatpush2.bf16.msra.mxu0 0
    %2072 = vmatprep.mubr.bf16.mxu0 0
    %2073 = vmatmul.mubr.bf16.gmra.mxu0 %v2039
    %v2074 = vpop.f32.mrf.mxu0
    %v2075 = vadd.f32 0.0, %v2074
    %v2076 = vpop.f32.mrf.mxu0
    %v2077 = vadd.f32 0.0, %v2076
    %v2078 = vpop.f32.mrf.mxu0
    %v2079 = vpop.f32.mrf.mxu0
    %2080 = vdwg.mxu0
    %2081 = vmatprep.subr.bf16.mxu0 0
    %2082 = vmatpush1.bf16.msra.mxu0 %v810
    %2083 = vmatprep.subr.bf16.mxu0 0
    %2084 = vmatpush1.bf16.msra.mxu0 %v807
    %2085 = vmatprep.subr.bf16.mxu0 0
    %2086 = vmatpush1.bf16.msra.mxu0 %v804
    %2087 = vmatprep.subr.bf16.mxu0 0
    %2088 = vmatpush1.bf16.msra.mxu0 %v801
    %2089 = vmatprep.subr.bf16.mxu0 0
    %2090 = vmatpush1.bf16.msra.mxu0 %v798
    %2091 = vmatprep.subr.bf16.mxu0 0
    %2092 = vmatpush1.bf16.msra.mxu0 %v795
    %2093 = vmatprep.subr.bf16.mxu0 0
    %2094 = vmatpush1.bf16.msra.mxu0 %v792
    %2095 = vmatprep.subr.bf16.mxu0 0
    %2096 = vmatpush1.bf16.msra.mxu0 %v789
    %2097 = vmatprep.subr.bf16.mxu0 0
    %2098 = vmatpush2.bf16.msra.mxu0 0
    %2099 = vmatprep.subr.bf16.mxu0 0
    %2100 = vmatpush2.bf16.msra.mxu0 0
    %2101 = vmatprep.subr.bf16.mxu0 0
    %2102 = vmatpush2.bf16.msra.mxu0 0
    %2103 = vmatprep.subr.bf16.mxu0 0
    %2104 = vmatpush2.bf16.msra.mxu0 0
    %2105 = vmatprep.subr.bf16.mxu0 0
    %2106 = vmatpush2.bf16.msra.mxu0 0
    %2107 = vmatprep.subr.bf16.mxu0 0
    %2108 = vmatpush2.bf16.msra.mxu0 0
    %2109 = vmatprep.subr.bf16.mxu0 0
    %2110 = vmatpush2.bf16.msra.mxu0 0
    %2111 = vmatprep.subr.bf16.mxu0 0
    %2112 = vmatpush2.bf16.msra.mxu0 0
    %2113 = vmatprep.mubr.bf16.mxu0 0
    %2114 = vmatmul.mubr.bf16.gmra.mxu0 %v2039
    %v2115 = vpop.f32.mrf.mxu0
    %v2116 = vadd.f32 0.0, %v2115
    %v2117 = vpop.f32.mrf.mxu0
    %v2118 = vpop.f32.mrf.mxu0
    %v2119 = vpop.f32.mrf.mxu0
    %2120 = vdwg.mxu0
    %v2121 = vadd.f32 %v2036, %v2075
    %v2122 = vadd.f32 %v2037, %v2077
    %v2123 = vxor.u32 %v2121, 2147483648
    %v2124 = vxor.u32 %v2122, 2147483648
    %v2125 = vmul.f32 %v2123, 1.442695
    %v2126 = vpow.pop %v2125
    %v2127 = vmul.f32 %v2124, 1.442695
    %v2128 = vpow.pop %v2127
    %v2129 = vadd.f32 %v2126, 1.0
    %v2130 = vadd.f32 %v2128, 1.0
    %v2131 = vrcp.pop %v2129
    %v2132 = vmul.f32 1.0, %v2131
    %v2133 = vrcp.pop %v2130
    %v2134 = vmul.f32 1.0, %v2133
    %v2135 = vadd.f32 %v2116, %v397
    %v2136 = vmul.f32 %v2132, %v2135
    %v2137 = vadd.f32 %v2038, %v2136
    %v2138 = vtanh.pop %v2137
    %v2139 = vsub.f32 %v1851, %v2138
    %v2140 = vmul.f32 %v2134, %v2139
    %v2141 = vadd.f32 %v2138, %v2140
    %2142 = vmatprep.subr.bf16.mxu0 %v1087
    %2143 = vmatpush1.bf16.msra.mxu0 %v1086
    %2144 = vmatprep.subr.bf16.mxu0 %v1084
    %2145 = vmatpush1.bf16.msra.mxu0 %v1083
    %2146 = vmatprep.subr.bf16.mxu0 %v1081
    %2147 = vmatpush1.bf16.msra.mxu0 %v1080
    %2148 = vmatprep.subr.bf16.mxu0 %v1078
    %2149 = vmatpush1.bf16.msra.mxu0 %v1077
    %2150 = vmatprep.subr.bf16.mxu0 %v1075
    %2151 = vmatpush1.bf16.msra.mxu0 %v1074
    %2152 = vmatprep.subr.bf16.mxu0 %v1072
    %2153 = vmatpush1.bf16.msra.mxu0 %v1071
    %2154 = vmatprep.subr.bf16.mxu0 %v1069
    %2155 = vmatpush1.bf16.msra.mxu0 %v1068
    %2156 = vmatprep.subr.bf16.mxu0 %v1066
    %2157 = vmatpush1.bf16.msra.mxu0 %v1065
    %2158 = vmatprep.subr.bf16.mxu0 0
    %2159 = vmatpush2.bf16.msra.mxu0 0
    %2160 = vmatprep.subr.bf16.mxu0 0
    %2161 = vmatpush2.bf16.msra.mxu0 0
    %2162 = vmatprep.subr.bf16.mxu0 0
    %2163 = vmatpush2.bf16.msra.mxu0 0
    %2164 = vmatprep.subr.bf16.mxu0 0
    %2165 = vmatpush2.bf16.msra.mxu0 0
    %2166 = vmatprep.subr.bf16.mxu0 0
    %2167 = vmatpush2.bf16.msra.mxu0 0
    %2168 = vmatprep.subr.bf16.mxu0 0
    %2169 = vmatpush2.bf16.msra.mxu0 0
    %2170 = vmatprep.subr.bf16.mxu0 0
    %2171 = vmatpush2.bf16.msra.mxu0 0
    %2172 = vmatprep.subr.bf16.mxu0 0
    %2173 = vmatpush2.bf16.msra.mxu0 0
    %2174 = vmatprep.mubr.bf16.mxu0 0
    %2175 = vmatmul.mubr.bf16.gmra.mxu0 %v2039
    %v2176 = vpop.f32.mrf.mxu0
    %v2177 = vadd.f32 %v973, %v2176
    %v2178 = vpop.f32.mrf.mxu0
    %v2179 = vadd.f32 %v977, %v2178
    %v2180 = vpop.f32.mrf.mxu0
    %v2181 = vpop.f32.mrf.mxu0
    %2182 = vdwg.mxu0
    %2183 = vmatprep.subr.bf16.mxu0 0
    %2184 = vmatpush1.bf16.msra.mxu0 %v1088
    %2185 = vmatprep.subr.bf16.mxu0 0
    %2186 = vmatpush1.bf16.msra.mxu0 %v1085
    %2187 = vmatprep.subr.bf16.mxu0 0
    %2188 = vmatpush1.bf16.msra.mxu0 %v1082
    %2189 = vmatprep.subr.bf16.mxu0 0
    %2190 = vmatpush1.bf16.msra.mxu0 %v1079
    %2191 = vmatprep.subr.bf16.mxu0 0
    %2192 = vmatpush1.bf16.msra.mxu0 %v1076
    %2193 = vmatprep.subr.bf16.mxu0 0
    %2194 = vmatpush1.bf16.msra.mxu0 %v1073
    %2195 = vmatprep.subr.bf16.mxu0 0
    %2196 = vmatpush1.bf16.msra.mxu0 %v1070
    %2197 = vmatprep.subr.bf16.mxu0 0
    %2198 = vmatpush1.bf16.msra.mxu0 %v1067
    %2199 = vmatprep.subr.bf16.mxu0 0
    %2200 = vmatpush2.bf16.msra.mxu0 0
    %2201 = vmatprep.subr.bf16.mxu0 0
    %2202 = vmatpush2.bf16.msra.mxu0 0
    %2203 = vmatprep.subr.bf16.mxu0 0
    %2204 = vmatpush2.bf16.msra.mxu0 0
    %2205 = vmatprep.subr.bf16.mxu0 0
    %2206 = vmatpush2.bf16.msra.mxu0 0
    %2207 = vmatprep.subr.bf16.mxu0 0
    %2208 = vmatpush2.bf16.msra.mxu0 0
    %2209 = vmatprep.subr.bf16.mxu0 0
    %2210 = vmatpush2.bf16.msra.mxu0 0
    %2211 = vmatprep.subr.bf16.mxu0 0
    %2212 = vmatpush2.bf16.msra.mxu0 0
    %2213 = vmatprep.subr.bf16.mxu0 0
    %2214 = vmatpush2.bf16.msra.mxu0 0
    %2215 = vmatprep.mubr.bf16.mxu0 0
    %2216 = vmatmul.mubr.bf16.gmra.mxu0 %v2039
    %v2217 = vpop.f32.mrf.mxu0
    %v2218 = vadd.f32 %v981, %v2217
    %v2219 = vpop.f32.mrf.mxu0
    %v2220 = vpop.f32.mrf.mxu0
    %v2221 = vpop.f32.mrf.mxu0
    %2222 = vdwg.mxu0
    %v2223 = vpack.c.bf16 %v2035, %v2035
    %2224 = vmatprep.subr.bf16.mxu0 %v1328
    %2225 = vmatpush1.bf16.msra.mxu0 %v1327
    %2226 = vmatprep.subr.bf16.mxu0 %v1325
    %2227 = vmatpush1.bf16.msra.mxu0 %v1324
    %2228 = vmatprep.subr.bf16.mxu0 %v1322
    %2229 = vmatpush1.bf16.msra.mxu0 %v1321
    %2230 = vmatprep.subr.bf16.mxu0 %v1319
    %2231 = vmatpush1.bf16.msra.mxu0 %v1318
    %2232 = vmatprep.subr.bf16.mxu0 %v1316
    %2233 = vmatpush1.bf16.msra.mxu0 %v1315
    %2234 = vmatprep.subr.bf16.mxu0 %v1313
    %2235 = vmatpush1.bf16.msra.mxu0 %v1312
    %2236 = vmatprep.subr.bf16.mxu0 %v1310
    %2237 = vmatpush1.bf16.msra.mxu0 %v1309
    %2238 = vmatprep.subr.bf16.mxu0 %v1307
    %2239 = vmatpush1.bf16.msra.mxu0 %v1306
    %2240 = vmatprep.subr.bf16.mxu0 0
    %2241 = vmatpush2.bf16.msra.mxu0 0
    %2242 = vmatprep.subr.bf16.mxu0 0
    %2243 = vmatpush2.bf16.msra.mxu0 0
    %2244 = vmatprep.subr.bf16.mxu0 0
    %2245 = vmatpush2.bf16.msra.mxu0 0
    %2246 = vmatprep.subr.bf16.mxu0 0
    %2247 = vmatpush2.bf16.msra.mxu0 0
    %2248 = vmatprep.subr.bf16.mxu0 0
    %2249 = vmatpush2.bf16.msra.mxu0 0
    %2250 = vmatprep.subr.bf16.mxu0 0
    %2251 = vmatpush2.bf16.msra.mxu0 0
    %2252 = vmatprep.subr.bf16.mxu0 0
    %2253 = vmatpush2.bf16.msra.mxu0 0
    %2254 = vmatprep.subr.bf16.mxu0 0
    %2255 = vmatpush2.bf16.msra.mxu0 0
    %2256 = vmatprep.mubr.bf16.mxu0 0
    %2257 = vmatmul.mubr.bf16.gmra.mxu0 %v2223
    %v2258 = vpop.f32.mrf.mxu0
    %v2259 = vadd.f32 0.0, %v2258
    %v2260 = vpop.f32.mrf.mxu0
    %v2261 = vadd.f32 0.0, %v2260
    %v2262 = vpop.f32.mrf.mxu0
    %v2263 = vpop.f32.mrf.mxu0
    %2264 = vdwg.mxu0
    %2265 = vmatprep.subr.bf16.mxu0 0
    %2266 = vmatpush1.bf16.msra.mxu0 %v1329
    %2267 = vmatprep.subr.bf16.mxu0 0
    %2268 = vmatpush1.bf16.msra.mxu0 %v1326
    %2269 = vmatprep.subr.bf16.mxu0 0
    %2270 = vmatpush1.bf16.msra.mxu0 %v1323
    %2271 = vmatprep.subr.bf16.mxu0 0
    %2272 = vmatpush1.bf16.msra.mxu0 %v1320
    %2273 = vmatprep.subr.bf16.mxu0 0
    %2274 = vmatpush1.bf16.msra.mxu0 %v1317
    %2275 = vmatprep.subr.bf16.mxu0 0
    %2276 = vmatpush1.bf16.msra.mxu0 %v1314
    %2277 = vmatprep.subr.bf16.mxu0 0
    %2278 = vmatpush1.bf16.msra.mxu0 %v1311
    %2279 = vmatprep.subr.bf16.mxu0 0
    %2280 = vmatpush1.bf16.msra.mxu0 %v1308
    %2281 = vmatprep.subr.bf16.mxu0 0
    %2282 = vmatpush2.bf16.msra.mxu0 0
    %2283 = vmatprep.subr.bf16.mxu0 0
    %2284 = vmatpush2.bf16.msra.mxu0 0
    %2285 = vmatprep.subr.bf16.mxu0 0
    %2286 = vmatpush2.bf16.msra.mxu0 0
    %2287 = vmatprep.subr.bf16.mxu0 0
    %2288 = vmatpush2.bf16.msra.mxu0 0
    %2289 = vmatprep.subr.bf16.mxu0 0
    %2290 = vmatpush2.bf16.msra.mxu0 0
    %2291 = vmatprep.subr.bf16.mxu0 0
    %2292 = vmatpush2.bf16.msra.mxu0 0
    %2293 = vmatprep.subr.bf16.mxu0 0
    %2294 = vmatpush2.bf16.msra.mxu0 0
    %2295 = vmatprep.subr.bf16.mxu0 0
    %2296 = vmatpush2.bf16.msra.mxu0 0
    %2297 = vmatprep.mubr.bf16.mxu0 0
    %2298 = vmatmul.mubr.bf16.gmra.mxu0 %v2223
    %v2299 = vpop.f32.mrf.mxu0
    %v2300 = vadd.f32 0.0, %v2299
    %v2301 = vpop.f32.mrf.mxu0
    %v2302 = vpop.f32.mrf.mxu0
    %v2303 = vpop.f32.mrf.mxu0
    %2304 = vdwg.mxu0
    %v2305 = vadd.f32 %v2177, %v2259
    %v2306 = vadd.f32 %v2179, %v2261
    %v2307 = vxor.u32 %v2305, 2147483648
    %v2308 = vxor.u32 %v2306, 2147483648
    %v2309 = vmul.f32 %v2307, 1.442695
    %v2310 = vpow.pop %v2309
    %v2311 = vmul.f32 %v2308, 1.442695
    %v2312 = vpow.pop %v2311
    %v2313 = vadd.f32 %v2310, 1.0
    %v2314 = vadd.f32 %v2312, 1.0
    %v2315 = vrcp.pop %v2313
    %v2316 = vmul.f32 1.0, %v2315
    %v2317 = vrcp.pop %v2314
    %v2318 = vmul.f32 1.0, %v2317
    %v2319 = vadd.f32 %v2300, %v398
    %v2320 = vmul.f32 %v2316, %v2319
    %v2321 = vadd.f32 %v2218, %v2320
    %v2322 = vtanh.pop %v2321
    %v2323 = vsub.f32 %v2035, %v2322
    %v2324 = vmul.f32 %v2318, %v2323
    %v2325 = vadd.f32 %v2322, %v2324
    %v2326 = vld [vmem:[#allocation2 + $0x78] sm:$0xff]
    %v2327 = vld [vmem:[#allocation2 + $0x80] sm:$0xff]
    %v2328 = vld [vmem:[#allocation2 + $0x88] sm:$0xff]
    %v2329 = vpack.c.bf16 %v2141, %v2141
    %2330 = vmatprep.subr.bf16.mxu0 %v809
    %2331 = vmatpush1.bf16.msra.mxu0 %v808
    %2332 = vmatprep.subr.bf16.mxu0 %v806
    %2333 = vmatpush1.bf16.msra.mxu0 %v805
    %2334 = vmatprep.subr.bf16.mxu0 %v803
    %2335 = vmatpush1.bf16.msra.mxu0 %v802
    %2336 = vmatprep.subr.bf16.mxu0 %v800
    %2337 = vmatpush1.bf16.msra.mxu0 %v799
    %2338 = vmatprep.subr.bf16.mxu0 %v797
    %2339 = vmatpush1.bf16.msra.mxu0 %v796
    %2340 = vmatprep.subr.bf16.mxu0 %v794
    %2341 = vmatpush1.bf16.msra.mxu0 %v793
    %2342 = vmatprep.subr.bf16.mxu0 %v791
    %2343 = vmatpush1.bf16.msra.mxu0 %v790
    %2344 = vmatprep.subr.bf16.mxu0 %v788
    %2345 = vmatpush1.bf16.msra.mxu0 %v787
    %2346 = vmatprep.subr.bf16.mxu0 0
    %2347 = vmatpush2.bf16.msra.mxu0 0
    %2348 = vmatprep.subr.bf16.mxu0 0
    %2349 = vmatpush2.bf16.msra.mxu0 0
    %2350 = vmatprep.subr.bf16.mxu0 0
    %2351 = vmatpush2.bf16.msra.mxu0 0
    %2352 = vmatprep.subr.bf16.mxu0 0
    %2353 = vmatpush2.bf16.msra.mxu0 0
    %2354 = vmatprep.subr.bf16.mxu0 0
    %2355 = vmatpush2.bf16.msra.mxu0 0
    %2356 = vmatprep.subr.bf16.mxu0 0
    %2357 = vmatpush2.bf16.msra.mxu0 0
    %2358 = vmatprep.subr.bf16.mxu0 0
    %2359 = vmatpush2.bf16.msra.mxu0 0
    %2360 = vmatprep.subr.bf16.mxu0 0
    %2361 = vmatpush2.bf16.msra.mxu0 0
    %2362 = vmatprep.mubr.bf16.mxu0 0
    %2363 = vmatmul.mubr.bf16.gmra.mxu0 %v2329
    %v2364 = vpop.f32.mrf.mxu0
    %v2365 = vadd.f32 0.0, %v2364
    %v2366 = vpop.f32.mrf.mxu0
    %v2367 = vadd.f32 0.0, %v2366
    %v2368 = vpop.f32.mrf.mxu0
    %v2369 = vpop.f32.mrf.mxu0
    %2370 = vdwg.mxu0
    %2371 = vmatprep.subr.bf16.mxu0 0
    %2372 = vmatpush1.bf16.msra.mxu0 %v810
    %2373 = vmatprep.subr.bf16.mxu0 0
    %2374 = vmatpush1.bf16.msra.mxu0 %v807
    %2375 = vmatprep.subr.bf16.mxu0 0
    %2376 = vmatpush1.bf16.msra.mxu0 %v804
    %2377 = vmatprep.subr.bf16.mxu0 0
    %2378 = vmatpush1.bf16.msra.mxu0 %v801
    %2379 = vmatprep.subr.bf16.mxu0 0
    %2380 = vmatpush1.bf16.msra.mxu0 %v798
    %2381 = vmatprep.subr.bf16.mxu0 0
    %2382 = vmatpush1.bf16.msra.mxu0 %v795
    %2383 = vmatprep.subr.bf16.mxu0 0
    %2384 = vmatpush1.bf16.msra.mxu0 %v792
    %2385 = vmatprep.subr.bf16.mxu0 0
    %2386 = vmatpush1.bf16.msra.mxu0 %v789
    %2387 = vmatprep.subr.bf16.mxu0 0
    %2388 = vmatpush2.bf16.msra.mxu0 0
    %2389 = vmatprep.subr.bf16.mxu0 0
    %2390 = vmatpush2.bf16.msra.mxu0 0
    %2391 = vmatprep.subr.bf16.mxu0 0
    %2392 = vmatpush2.bf16.msra.mxu0 0
    %2393 = vmatprep.subr.bf16.mxu0 0
    %2394 = vmatpush2.bf16.msra.mxu0 0
    %2395 = vmatprep.subr.bf16.mxu0 0
    %2396 = vmatpush2.bf16.msra.mxu0 0
    %2397 = vmatprep.subr.bf16.mxu0 0
    %2398 = vmatpush2.bf16.msra.mxu0 0
    %2399 = vmatprep.subr.bf16.mxu0 0
    %2400 = vmatpush2.bf16.msra.mxu0 0
    %2401 = vmatprep.subr.bf16.mxu0 0
    %2402 = vmatpush2.bf16.msra.mxu0 0
    %2403 = vmatprep.mubr.bf16.mxu0 0
    %2404 = vmatmul.mubr.bf16.gmra.mxu0 %v2329
    %v2405 = vpop.f32.mrf.mxu0
    %v2406 = vadd.f32 0.0, %v2405
    %v2407 = vpop.f32.mrf.mxu0
    %v2408 = vpop.f32.mrf.mxu0
    %v2409 = vpop.f32.mrf.mxu0
    %2410 = vdwg.mxu0
    %v2411 = vadd.f32 %v2326, %v2365
    %v2412 = vadd.f32 %v2327, %v2367
    %v2413 = vxor.u32 %v2411, 2147483648
    %v2414 = vxor.u32 %v2412, 2147483648
    %v2415 = vmul.f32 %v2413, 1.442695
    %v2416 = vpow.pop %v2415
    %v2417 = vmul.f32 %v2414, 1.442695
    %v2418 = vpow.pop %v2417
    %v2419 = vadd.f32 %v2416, 1.0
    %v2420 = vadd.f32 %v2418, 1.0
    %v2421 = vrcp.pop %v2419
    %v2422 = vmul.f32 1.0, %v2421
    %v2423 = vrcp.pop %v2420
    %v2424 = vmul.f32 1.0, %v2423
    %v2425 = vadd.f32 %v2406, %v397
    %v2426 = vmul.f32 %v2422, %v2425
    %v2427 = vadd.f32 %v2328, %v2426
    %v2428 = vtanh.pop %v2427
    %v2429 = vsub.f32 %v2141, %v2428
    %v2430 = vmul.f32 %v2424, %v2429
    %v2431 = vadd.f32 %v2428, %v2430
    %2432 = vmatprep.subr.bf16.mxu0 %v1087
    %2433 = vmatpush1.bf16.msra.mxu0 %v1086
    %2434 = vmatprep.subr.bf16.mxu0 %v1084
    %2435 = vmatpush1.bf16.msra.mxu0 %v1083
    %2436 = vmatprep.subr.bf16.mxu0 %v1081
    %2437 = vmatpush1.bf16.msra.mxu0 %v1080
    %2438 = vmatprep.subr.bf16.mxu0 %v1078
    %2439 = vmatpush1.bf16.msra.mxu0 %v1077
    %2440 = vmatprep.subr.bf16.mxu0 %v1075
    %2441 = vmatpush1.bf16.msra.mxu0 %v1074
    %2442 = vmatprep.subr.bf16.mxu0 %v1072
    %2443 = vmatpush1.bf16.msra.mxu0 %v1071
    %2444 = vmatprep.subr.bf16.mxu0 %v1069
    %2445 = vmatpush1.bf16.msra.mxu0 %v1068
    %2446 = vmatprep.subr.bf16.mxu0 %v1066
    %2447 = vmatpush1.bf16.msra.mxu0 %v1065
    %2448 = vmatprep.subr.bf16.mxu0 0
    %2449 = vmatpush2.bf16.msra.mxu0 0
    %2450 = vmatprep.subr.bf16.mxu0 0
    %2451 = vmatpush2.bf16.msra.mxu0 0
    %2452 = vmatprep.subr.bf16.mxu0 0
    %2453 = vmatpush2.bf16.msra.mxu0 0
    %2454 = vmatprep.subr.bf16.mxu0 0
    %2455 = vmatpush2.bf16.msra.mxu0 0
    %2456 = vmatprep.subr.bf16.mxu0 0
    %2457 = vmatpush2.bf16.msra.mxu0 0
    %2458 = vmatprep.subr.bf16.mxu0 0
    %2459 = vmatpush2.bf16.msra.mxu0 0
    %2460 = vmatprep.subr.bf16.mxu0 0
    %2461 = vmatpush2.bf16.msra.mxu0 0
    %2462 = vmatprep.subr.bf16.mxu0 0
    %2463 = vmatpush2.bf16.msra.mxu0 0
    %2464 = vmatprep.mubr.bf16.mxu0 0
    %2465 = vmatmul.mubr.bf16.gmra.mxu0 %v2329
    %v2466 = vpop.f32.mrf.mxu0
    %v2467 = vadd.f32 %v973, %v2466
    %v2468 = vpop.f32.mrf.mxu0
    %v2469 = vadd.f32 %v977, %v2468
    %v2470 = vpop.f32.mrf.mxu0
    %v2471 = vpop.f32.mrf.mxu0
    %2472 = vdwg.mxu0
    %2473 = vmatprep.subr.bf16.mxu0 0
    %2474 = vmatpush1.bf16.msra.mxu0 %v1088
    %2475 = vmatprep.subr.bf16.mxu0 0
    %2476 = vmatpush1.bf16.msra.mxu0 %v1085
    %2477 = vmatprep.subr.bf16.mxu0 0
    %2478 = vmatpush1.bf16.msra.mxu0 %v1082
    %2479 = vmatprep.subr.bf16.mxu0 0
    %2480 = vmatpush1.bf16.msra.mxu0 %v1079
    %2481 = vmatprep.subr.bf16.mxu0 0
    %2482 = vmatpush1.bf16.msra.mxu0 %v1076
    %2483 = vmatprep.subr.bf16.mxu0 0
    %2484 = vmatpush1.bf16.msra.mxu0 %v1073
    %2485 = vmatprep.subr.bf16.mxu0 0
    %2486 = vmatpush1.bf16.msra.mxu0 %v1070
    %2487 = vmatprep.subr.bf16.mxu0 0
    %2488 = vmatpush1.bf16.msra.mxu0 %v1067
    %2489 = vmatprep.subr.bf16.mxu0 0
    %2490 = vmatpush2.bf16.msra.mxu0 0
    %2491 = vmatprep.subr.bf16.mxu0 0
    %2492 = vmatpush2.bf16.msra.mxu0 0
    %2493 = vmatprep.subr.bf16.mxu0 0
    %2494 = vmatpush2.bf16.msra.mxu0 0
    %2495 = vmatprep.subr.bf16.mxu0 0
    %2496 = vmatpush2.bf16.msra.mxu0 0
    %2497 = vmatprep.subr.bf16.mxu0 0
    %2498 = vmatpush2.bf16.msra.mxu0 0
    %2499 = vmatprep.subr.bf16.mxu0 0
    %2500 = vmatpush2.bf16.msra.mxu0 0
    %2501 = vmatprep.subr.bf16.mxu0 0
    %2502 = vmatpush2.bf16.msra.mxu0 0
    %2503 = vmatprep.subr.bf16.mxu0 0
    %2504 = vmatpush2.bf16.msra.mxu0 0
    %2505 = vmatprep.mubr.bf16.mxu0 0
    %2506 = vmatmul.mubr.bf16.gmra.mxu0 %v2329
    %v2507 = vpop.f32.mrf.mxu0
    %v2508 = vadd.f32 %v981, %v2507
    %v2509 = vpop.f32.mrf.mxu0
    %v2510 = vpop.f32.mrf.mxu0
    %v2511 = vpop.f32.mrf.mxu0
    %2512 = vdwg.mxu0
    %v2513 = vpack.c.bf16 %v2325, %v2325
    %2514 = vmatprep.subr.bf16.mxu0 %v1328
    %2515 = vmatpush1.bf16.msra.mxu0 %v1327
    %2516 = vmatprep.subr.bf16.mxu0 %v1325
    %2517 = vmatpush1.bf16.msra.mxu0 %v1324
    %2518 = vmatprep.subr.bf16.mxu0 %v1322
    %2519 = vmatpush1.bf16.msra.mxu0 %v1321
    %2520 = vmatprep.subr.bf16.mxu0 %v1319
    %2521 = vmatpush1.bf16.msra.mxu0 %v1318
    %2522 = vmatprep.subr.bf16.mxu0 %v1316
    %2523 = vmatpush1.bf16.msra.mxu0 %v1315
    %2524 = vmatprep.subr.bf16.mxu0 %v1313
    %2525 = vmatpush1.bf16.msra.mxu0 %v1312
    %2526 = vmatprep.subr.bf16.mxu0 %v1310
    %2527 = vmatpush1.bf16.msra.mxu0 %v1309
    %2528 = vmatprep.subr.bf16.mxu0 %v1307
    %2529 = vmatpush1.bf16.msra.mxu0 %v1306
    %2530 = vmatprep.subr.bf16.mxu0 0
    %2531 = vmatpush2.bf16.msra.mxu0 0
    %2532 = vmatprep.subr.bf16.mxu0 0
    %2533 = vmatpush2.bf16.msra.mxu0 0
    %2534 = vmatprep.subr.bf16.mxu0 0
    %2535 = vmatpush2.bf16.msra.mxu0 0
    %2536 = vmatprep.subr.bf16.mxu0 0
    %2537 = vmatpush2.bf16.msra.mxu0 0
    %2538 = vmatprep.subr.bf16.mxu0 0
    %2539 = vmatpush2.bf16.msra.mxu0 0
    %2540 = vmatprep.subr.bf16.mxu0 0
    %2541 = vmatpush2.bf16.msra.mxu0 0
    %2542 = vmatprep.subr.bf16.mxu0 0
    %2543 = vmatpush2.bf16.msra.mxu0 0
    %2544 = vmatprep.subr.bf16.mxu0 0
    %2545 = vmatpush2.bf16.msra.mxu0 0
    %2546 = vmatprep.mubr.bf16.mxu0 0
    %2547 = vmatmul.mubr.bf16.gmra.mxu0 %v2513
    %v2548 = vpop.f32.mrf.mxu0
    %v2549 = vadd.f32 0.0, %v2548
    %v2550 = vpop.f32.mrf.mxu0
    %v2551 = vadd.f32 0.0, %v2550
    %v2552 = vpop.f32.mrf.mxu0
    %v2553 = vpop.f32.mrf.mxu0
    %2554 = vdwg.mxu0
    %2555 = vmatprep.subr.bf16.mxu0 0
    %2556 = vmatpush1.bf16.msra.mxu0 %v1329
    %2557 = vmatprep.subr.bf16.mxu0 0
    %2558 = vmatpush1.bf16.msra.mxu0 %v1326
    %2559 = vmatprep.subr.bf16.mxu0 0
    %2560 = vmatpush1.bf16.msra.mxu0 %v1323
    %2561 = vmatprep.subr.bf16.mxu0 0
    %2562 = vmatpush1.bf16.msra.mxu0 %v1320
    %2563 = vmatprep.subr.bf16.mxu0 0
    %2564 = vmatpush1.bf16.msra.mxu0 %v1317
    %2565 = vmatprep.subr.bf16.mxu0 0
    %2566 = vmatpush1.bf16.msra.mxu0 %v1314
    %2567 = vmatprep.subr.bf16.mxu0 0
    %2568 = vmatpush1.bf16.msra.mxu0 %v1311
    %2569 = vmatprep.subr.bf16.mxu0 0
    %2570 = vmatpush1.bf16.msra.mxu0 %v1308
    %2571 = vmatprep.subr.bf16.mxu0 0
    %2572 = vmatpush2.bf16.msra.mxu0 0
    %2573 = vmatprep.subr.bf16.mxu0 0
    %2574 = vmatpush2.bf16.msra.mxu0 0
    %2575 = vmatprep.subr.bf16.mxu0 0
    %2576 = vmatpush2.bf16.msra.mxu0 0
    %2577 = vmatprep.subr.bf16.mxu0 0
    %2578 = vmatpush2.bf16.msra.mxu0 0
    %2579 = vmatprep.subr.bf16.mxu0 0
    %2580 = vmatpush2.bf16.msra.mxu0 0
    %2581 = vmatprep.subr.bf16.mxu0 0
    %2582 = vmatpush2.bf16.msra.mxu0 0
    %2583 = vmatprep.subr.bf16.mxu0 0
    %2584 = vmatpush2.bf16.msra.mxu0 0
    %2585 = vmatprep.subr.bf16.mxu0 0
    %2586 = vmatpush2.bf16.msra.mxu0 0
    %2587 = vmatprep.mubr.bf16.mxu0 0
    %2588 = vmatmul.mubr.bf16.gmra.mxu0 %v2513
    %v2589 = vpop.f32.mrf.mxu0
    %v2590 = vadd.f32 0.0, %v2589
    %v2591 = vpop.f32.mrf.mxu0
    %v2592 = vpop.f32.mrf.mxu0
    %v2593 = vpop.f32.mrf.mxu0
    %2594 = vdwg.mxu0
    %v2595 = vadd.f32 %v2467, %v2549
    %v2596 = vadd.f32 %v2469, %v2551
    %v2597 = vxor.u32 %v2595, 2147483648
    %v2598 = vxor.u32 %v2596, 2147483648
    %v2599 = vmul.f32 %v2597, 1.442695
    %v2600 = vpow.pop %v2599
    %v2601 = vmul.f32 %v2598, 1.442695
    %v2602 = vpow.pop %v2601
    %v2603 = vadd.f32 %v2600, 1.0
    %v2604 = vadd.f32 %v2602, 1.0
    %v2605 = vrcp.pop %v2603
    %v2606 = vmul.f32 1.0, %v2605
    %v2607 = vrcp.pop %v2604
    %v2608 = vmul.f32 1.0, %v2607
    %v2609 = vadd.f32 %v2590, %v398
    %v2610 = vmul.f32 %v2606, %v2609
    %v2611 = vadd.f32 %v2508, %v2610
    %v2612 = vtanh.pop %v2611
    %v2613 = vsub.f32 %v2325, %v2612
    %v2614 = vmul.f32 %v2608, %v2613
    %v2615 = vadd.f32 %v2612, %v2614
    %v2616 = vld [vmem:[#allocation2 + $0x90] sm:$0xff]
    %v2617 = vld [vmem:[#allocation2 + $0x98] sm:$0xff]
    %v2618 = vld [vmem:[#allocation2 + $0xa0] sm:$0xff]
    %v2619 = vpack.c.bf16 %v2431, %v2431
    %2620 = vmatprep.subr.bf16.mxu0 %v809
    %2621 = vmatpush1.bf16.msra.mxu0 %v808
    %2622 = vmatprep.subr.bf16.mxu0 %v806
    %2623 = vmatpush1.bf16.msra.mxu0 %v805
    %2624 = vmatprep.subr.bf16.mxu0 %v803
    %2625 = vmatpush1.bf16.msra.mxu0 %v802
    %2626 = vmatprep.subr.bf16.mxu0 %v800
    %2627 = vmatpush1.bf16.msra.mxu0 %v799
    %2628 = vmatprep.subr.bf16.mxu0 %v797
    %2629 = vmatpush1.bf16.msra.mxu0 %v796
    %2630 = vmatprep.subr.bf16.mxu0 %v794
    %2631 = vmatpush1.bf16.msra.mxu0 %v793
    %2632 = vmatprep.subr.bf16.mxu0 %v791
    %2633 = vmatpush1.bf16.msra.mxu0 %v790
    %2634 = vmatprep.subr.bf16.mxu0 %v788
    %2635 = vmatpush1.bf16.msra.mxu0 %v787
    %2636 = vmatprep.subr.bf16.mxu0 0
    %2637 = vmatpush2.bf16.msra.mxu0 0
    %2638 = vmatprep.subr.bf16.mxu0 0
    %2639 = vmatpush2.bf16.msra.mxu0 0
    %2640 = vmatprep.subr.bf16.mxu0 0
    %2641 = vmatpush2.bf16.msra.mxu0 0
    %2642 = vmatprep.subr.bf16.mxu0 0
    %2643 = vmatpush2.bf16.msra.mxu0 0
    %2644 = vmatprep.subr.bf16.mxu0 0
    %2645 = vmatpush2.bf16.msra.mxu0 0
    %2646 = vmatprep.subr.bf16.mxu0 0
    %2647 = vmatpush2.bf16.msra.mxu0 0
    %2648 = vmatprep.subr.bf16.mxu0 0
    %2649 = vmatpush2.bf16.msra.mxu0 0
    %2650 = vmatprep.subr.bf16.mxu0 0
    %2651 = vmatpush2.bf16.msra.mxu0 0
    %2652 = vmatprep.mubr.bf16.mxu0 0
    %2653 = vmatmul.mubr.bf16.gmra.mxu0 %v2619
    %v2654 = vpop.f32.mrf.mxu0
    %v2655 = vadd.f32 0.0, %v2654
    %v2656 = vpop.f32.mrf.mxu0
    %v2657 = vadd.f32 0.0, %v2656
    %v2658 = vpop.f32.mrf.mxu0
    %v2659 = vpop.f32.mrf.mxu0
    %2660 = vdwg.mxu0
    %2661 = vmatprep.subr.bf16.mxu0 0
    %2662 = vmatpush1.bf16.msra.mxu0 %v810
    %2663 = vmatprep.subr.bf16.mxu0 0
    %2664 = vmatpush1.bf16.msra.mxu0 %v807
    %2665 = vmatprep.subr.bf16.mxu0 0
    %2666 = vmatpush1.bf16.msra.mxu0 %v804
    %2667 = vmatprep.subr.bf16.mxu0 0
    %2668 = vmatpush1.bf16.msra.mxu0 %v801
    %2669 = vmatprep.subr.bf16.mxu0 0
    %2670 = vmatpush1.bf16.msra.mxu0 %v798
    %2671 = vmatprep.subr.bf16.mxu0 0
    %2672 = vmatpush1.bf16.msra.mxu0 %v795
    %2673 = vmatprep.subr.bf16.mxu0 0
    %2674 = vmatpush1.bf16.msra.mxu0 %v792
    %2675 = vmatprep.subr.bf16.mxu0 0
    %2676 = vmatpush1.bf16.msra.mxu0 %v789
    %2677 = vmatprep.subr.bf16.mxu0 0
    %2678 = vmatpush2.bf16.msra.mxu0 0
    %2679 = vmatprep.subr.bf16.mxu0 0
    %2680 = vmatpush2.bf16.msra.mxu0 0
    %2681 = vmatprep.subr.bf16.mxu0 0
    %2682 = vmatpush2.bf16.msra.mxu0 0
    %2683 = vmatprep.subr.bf16.mxu0 0
    %2684 = vmatpush2.bf16.msra.mxu0 0
    %2685 = vmatprep.subr.bf16.mxu0 0
    %2686 = vmatpush2.bf16.msra.mxu0 0
    %2687 = vmatprep.subr.bf16.mxu0 0
    %2688 = vmatpush2.bf16.msra.mxu0 0
    %2689 = vmatprep.subr.bf16.mxu0 0
    %2690 = vmatpush2.bf16.msra.mxu0 0
    %2691 = vmatprep.subr.bf16.mxu0 0
    %2692 = vmatpush2.bf16.msra.mxu0 0
    %2693 = vmatprep.mubr.bf16.mxu0 0
    %2694 = vmatmul.mubr.bf16.gmra.mxu0 %v2619
    %v2695 = vpop.f32.mrf.mxu0
    %v2696 = vadd.f32 0.0, %v2695
    %v2697 = vpop.f32.mrf.mxu0
    %v2698 = vpop.f32.mrf.mxu0
    %v2699 = vpop.f32.mrf.mxu0
    %2700 = vdwg.mxu0
    %v2701 = vadd.f32 %v2616, %v2655
    %v2702 = vadd.f32 %v2617, %v2657
    %v2703 = vxor.u32 %v2701, 2147483648
    %v2704 = vxor.u32 %v2702, 2147483648
    %v2705 = vmul.f32 %v2703, 1.442695
    %v2706 = vpow.pop %v2705
    %v2707 = vmul.f32 %v2704, 1.442695
    %v2708 = vpow.pop %v2707
    %v2709 = vadd.f32 %v2706, 1.0
    %v2710 = vadd.f32 %v2708, 1.0
    %v2711 = vrcp.pop %v2709
    %v2712 = vmul.f32 1.0, %v2711
    %v2713 = vrcp.pop %v2710
    %v2714 = vmul.f32 1.0, %v2713
    %v2715 = vadd.f32 %v2696, %v397
    %v2716 = vmul.f32 %v2712, %v2715
    %v2717 = vadd.f32 %v2618, %v2716
    %v2718 = vtanh.pop %v2717
    %v2719 = vsub.f32 %v2431, %v2718
    %v2720 = vmul.f32 %v2714, %v2719
    %v2721 = vadd.f32 %v2718, %v2720
    %2722 = vmatprep.subr.bf16.mxu0 %v1087
    %2723 = vmatpush1.bf16.msra.mxu0 %v1086
    %2724 = vmatprep.subr.bf16.mxu0 %v1084
    %2725 = vmatpush1.bf16.msra.mxu0 %v1083
    %2726 = vmatprep.subr.bf16.mxu0 %v1081
    %2727 = vmatpush1.bf16.msra.mxu0 %v1080
    %2728 = vmatprep.subr.bf16.mxu0 %v1078
    %2729 = vmatpush1.bf16.msra.mxu0 %v1077
    %2730 = vmatprep.subr.bf16.mxu0 %v1075
    %2731 = vmatpush1.bf16.msra.mxu0 %v1074
    %2732 = vmatprep.subr.bf16.mxu0 %v1072
    %2733 = vmatpush1.bf16.msra.mxu0 %v1071
    %2734 = vmatprep.subr.bf16.mxu0 %v1069
    %2735 = vmatpush1.bf16.msra.mxu0 %v1068
    %2736 = vmatprep.subr.bf16.mxu0 %v1066
    %2737 = vmatpush1.bf16.msra.mxu0 %v1065
    %2738 = vmatprep.subr.bf16.mxu0 0
    %2739 = vmatpush2.bf16.msra.mxu0 0
    %2740 = vmatprep.subr.bf16.mxu0 0
    %2741 = vmatpush2.bf16.msra.mxu0 0
    %2742 = vmatprep.subr.bf16.mxu0 0
    %2743 = vmatpush2.bf16.msra.mxu0 0
    %2744 = vmatprep.subr.bf16.mxu0 0
    %2745 = vmatpush2.bf16.msra.mxu0 0
    %2746 = vmatprep.subr.bf16.mxu0 0
    %2747 = vmatpush2.bf16.msra.mxu0 0
    %2748 = vmatprep.subr.bf16.mxu0 0
    %2749 = vmatpush2.bf16.msra.mxu0 0
    %2750 = vmatprep.subr.bf16.mxu0 0
    %2751 = vmatpush2.bf16.msra.mxu0 0
    %2752 = vmatprep.subr.bf16.mxu0 0
    %2753 = vmatpush2.bf16.msra.mxu0 0
    %2754 = vmatprep.mubr.bf16.mxu0 0
    %2755 = vmatmul.mubr.bf16.gmra.mxu0 %v2619
    %v2756 = vpop.f32.mrf.mxu0
    %v2757 = vadd.f32 %v973, %v2756
    %v2758 = vpop.f32.mrf.mxu0
    %v2759 = vadd.f32 %v977, %v2758
    %v2760 = vpop.f32.mrf.mxu0
    %v2761 = vpop.f32.mrf.mxu0
    %2762 = vdwg.mxu0
    %2763 = vmatprep.subr.bf16.mxu0 0
    %2764 = vmatpush1.bf16.msra.mxu0 %v1088
    %2765 = vmatprep.subr.bf16.mxu0 0
    %2766 = vmatpush1.bf16.msra.mxu0 %v1085
    %2767 = vmatprep.subr.bf16.mxu0 0
    %2768 = vmatpush1.bf16.msra.mxu0 %v1082
    %2769 = vmatprep.subr.bf16.mxu0 0
    %2770 = vmatpush1.bf16.msra.mxu0 %v1079
    %2771 = vmatprep.subr.bf16.mxu0 0
    %2772 = vmatpush1.bf16.msra.mxu0 %v1076
    %2773 = vmatprep.subr.bf16.mxu0 0
    %2774 = vmatpush1.bf16.msra.mxu0 %v1073
    %2775 = vmatprep.subr.bf16.mxu0 0
    %2776 = vmatpush1.bf16.msra.mxu0 %v1070
    %2777 = vmatprep.subr.bf16.mxu0 0
    %2778 = vmatpush1.bf16.msra.mxu0 %v1067
    %2779 = vmatprep.subr.bf16.mxu0 0
    %2780 = vmatpush2.bf16.msra.mxu0 0
    %2781 = vmatprep.subr.bf16.mxu0 0
    %2782 = vmatpush2.bf16.msra.mxu0 0
    %2783 = vmatprep.subr.bf16.mxu0 0
    %2784 = vmatpush2.bf16.msra.mxu0 0
    %2785 = vmatprep.subr.bf16.mxu0 0
    %2786 = vmatpush2.bf16.msra.mxu0 0
    %2787 = vmatprep.subr.bf16.mxu0 0
    %2788 = vmatpush2.bf16.msra.mxu0 0
    %2789 = vmatprep.subr.bf16.mxu0 0
    %2790 = vmatpush2.bf16.msra.mxu0 0
    %2791 = vmatprep.subr.bf16.mxu0 0
    %2792 = vmatpush2.bf16.msra.mxu0 0
    %2793 = vmatprep.subr.bf16.mxu0 0
    %2794 = vmatpush2.bf16.msra.mxu0 0
    %2795 = vmatprep.mubr.bf16.mxu0 0
    %2796 = vmatmul.mubr.bf16.gmra.mxu0 %v2619
    %v2797 = vpop.f32.mrf.mxu0
    %v2798 = vadd.f32 %v981, %v2797
    %v2799 = vpop.f32.mrf.mxu0
    %v2800 = vpop.f32.mrf.mxu0
    %v2801 = vpop.f32.mrf.mxu0
    %2802 = vdwg.mxu0
    %v2803 = vpack.c.bf16 %v2615, %v2615
    %2804 = vmatprep.subr.bf16.mxu0 %v1328
    %2805 = vmatpush1.bf16.msra.mxu0 %v1327
    %2806 = vmatprep.subr.bf16.mxu0 %v1325
    %2807 = vmatpush1.bf16.msra.mxu0 %v1324
    %2808 = vmatprep.subr.bf16.mxu0 %v1322
    %2809 = vmatpush1.bf16.msra.mxu0 %v1321
    %2810 = vmatprep.subr.bf16.mxu0 %v1319
    %2811 = vmatpush1.bf16.msra.mxu0 %v1318
    %2812 = vmatprep.subr.bf16.mxu0 %v1316
    %2813 = vmatpush1.bf16.msra.mxu0 %v1315
    %2814 = vmatprep.subr.bf16.mxu0 %v1313
    %2815 = vmatpush1.bf16.msra.mxu0 %v1312
    %2816 = vmatprep.subr.bf16.mxu0 %v1310
    %2817 = vmatpush1.bf16.msra.mxu0 %v1309
    %2818 = vmatprep.subr.bf16.mxu0 %v1307
    %2819 = vmatpush1.bf16.msra.mxu0 %v1306
    %2820 = vmatprep.subr.bf16.mxu0 0
    %2821 = vmatpush2.bf16.msra.mxu0 0
    %2822 = vmatprep.subr.bf16.mxu0 0
    %2823 = vmatpush2.bf16.msra.mxu0 0
    %2824 = vmatprep.subr.bf16.mxu0 0
    %2825 = vmatpush2.bf16.msra.mxu0 0
    %2826 = vmatprep.subr.bf16.mxu0 0
    %2827 = vmatpush2.bf16.msra.mxu0 0
    %2828 = vmatprep.subr.bf16.mxu0 0
    %2829 = vmatpush2.bf16.msra.mxu0 0
    %2830 = vmatprep.subr.bf16.mxu0 0
    %2831 = vmatpush2.bf16.msra.mxu0 0
    %2832 = vmatprep.subr.bf16.mxu0 0
    %2833 = vmatpush2.bf16.msra.mxu0 0
    %2834 = vmatprep.subr.bf16.mxu0 0
    %2835 = vmatpush2.bf16.msra.mxu0 0
    %2836 = vmatprep.mubr.bf16.mxu0 0
    %2837 = vmatmul.mubr.bf16.gmra.mxu0 %v2803
    %v2838 = vpop.f32.mrf.mxu0
    %v2839 = vadd.f32 0.0, %v2838
    %v2840 = vpop.f32.mrf.mxu0
    %v2841 = vadd.f32 0.0, %v2840
    %v2842 = vpop.f32.mrf.mxu0
    %v2843 = vpop.f32.mrf.mxu0
    %2844 = vdwg.mxu0
    %2845 = vmatprep.subr.bf16.mxu0 0
    %2846 = vmatpush1.bf16.msra.mxu0 %v1329
    %2847 = vmatprep.subr.bf16.mxu0 0
    %2848 = vmatpush1.bf16.msra.mxu0 %v1326
    %2849 = vmatprep.subr.bf16.mxu0 0
    %2850 = vmatpush1.bf16.msra.mxu0 %v1323
    %2851 = vmatprep.subr.bf16.mxu0 0
    %2852 = vmatpush1.bf16.msra.mxu0 %v1320
    %2853 = vmatprep.subr.bf16.mxu0 0
    %2854 = vmatpush1.bf16.msra.mxu0 %v1317
    %2855 = vmatprep.subr.bf16.mxu0 0
    %2856 = vmatpush1.bf16.msra.mxu0 %v1314
    %2857 = vmatprep.subr.bf16.mxu0 0
    %2858 = vmatpush1.bf16.msra.mxu0 %v1311
    %2859 = vmatprep.subr.bf16.mxu0 0
    %2860 = vmatpush1.bf16.msra.mxu0 %v1308
    %2861 = vmatprep.subr.bf16.mxu0 0
    %2862 = vmatpush2.bf16.msra.mxu0 0
    %2863 = vmatprep.subr.bf16.mxu0 0
    %2864 = vmatpush2.bf16.msra.mxu0 0
    %2865 = vmatprep.subr.bf16.mxu0 0
    %2866 = vmatpush2.bf16.msra.mxu0 0
    %2867 = vmatprep.subr.bf16.mxu0 0
    %2868 = vmatpush2.bf16.msra.mxu0 0
    %2869 = vmatprep.subr.bf16.mxu0 0
    %2870 = vmatpush2.bf16.msra.mxu0 0
    %2871 = vmatprep.subr.bf16.mxu0 0
    %2872 = vmatpush2.bf16.msra.mxu0 0
    %2873 = vmatprep.subr.bf16.mxu0 0
    %2874 = vmatpush2.bf16.msra.mxu0 0
    %2875 = vmatprep.subr.bf16.mxu0 0
    %2876 = vmatpush2.bf16.msra.mxu0 0
    %2877 = vmatprep.mubr.bf16.mxu0 0
    %2878 = vmatmul.mubr.bf16.gmra.mxu0 %v2803
    %v2879 = vpop.f32.mrf.mxu0
    %v2880 = vadd.f32 0.0, %v2879
    %v2881 = vpop.f32.mrf.mxu0
    %v2882 = vpop.f32.mrf.mxu0
    %v2883 = vpop.f32.mrf.mxu0
    %2884 = vdwg.mxu0
    %v2885 = vadd.f32 %v2757, %v2839
    %v2886 = vadd.f32 %v2759, %v2841
    %v2887 = vxor.u32 %v2885, 2147483648
    %v2888 = vxor.u32 %v2886, 2147483648
    %v2889 = vmul.f32 %v2887, 1.442695
    %v2890 = vpow.pop %v2889
    %v2891 = vmul.f32 %v2888, 1.442695
    %v2892 = vpow.pop %v2891
    %v2893 = vadd.f32 %v2890, 1.0
    %v2894 = vadd.f32 %v2892, 1.0
    %v2895 = vrcp.pop %v2893
    %v2896 = vmul.f32 1.0, %v2895
    %v2897 = vrcp.pop %v2894
    %v2898 = vmul.f32 1.0, %v2897
    %v2899 = vadd.f32 %v2880, %v398
    %v2900 = vmul.f32 %v2896, %v2899
    %v2901 = vadd.f32 %v2798, %v2900
    %v2902 = vtanh.pop %v2901
    %v2903 = vsub.f32 %v2615, %v2902
    %v2904 = vmul.f32 %v2898, %v2903
    %v2905 = vadd.f32 %v2902, %v2904
    %v2906 = vld [vmem:[#allocation2 + $0xa8] sm:$0xff]
    %v2907 = vld [vmem:[#allocation2 + $0xb0] sm:$0xff]
    %v2908 = vld [vmem:[#allocation2 + $0xb8] sm:$0xff]
    %v2909 = vpack.c.bf16 %v2721, %v2721
    %2910 = vmatprep.subr.bf16.mxu0 %v809
    %2911 = vmatpush1.bf16.msra.mxu0 %v808
    %2912 = vmatprep.subr.bf16.mxu0 %v806
    %2913 = vmatpush1.bf16.msra.mxu0 %v805
    %2914 = vmatprep.subr.bf16.mxu0 %v803
    %2915 = vmatpush1.bf16.msra.mxu0 %v802
    %2916 = vmatprep.subr.bf16.mxu0 %v800
    %2917 = vmatpush1.bf16.msra.mxu0 %v799
    %2918 = vmatprep.subr.bf16.mxu0 %v797
    %2919 = vmatpush1.bf16.msra.mxu0 %v796
    %2920 = vmatprep.subr.bf16.mxu0 %v794
    %2921 = vmatpush1.bf16.msra.mxu0 %v793
    %2922 = vmatprep.subr.bf16.mxu0 %v791
    %2923 = vmatpush1.bf16.msra.mxu0 %v790
    %2924 = vmatprep.subr.bf16.mxu0 %v788
    %2925 = vmatpush1.bf16.msra.mxu0 %v787
    %2926 = vmatprep.subr.bf16.mxu0 0
    %2927 = vmatpush2.bf16.msra.mxu0 0
    %2928 = vmatprep.subr.bf16.mxu0 0
    %2929 = vmatpush2.bf16.msra.mxu0 0
    %2930 = vmatprep.subr.bf16.mxu0 0
    %2931 = vmatpush2.bf16.msra.mxu0 0
    %2932 = vmatprep.subr.bf16.mxu0 0
    %2933 = vmatpush2.bf16.msra.mxu0 0
    %2934 = vmatprep.subr.bf16.mxu0 0
    %2935 = vmatpush2.bf16.msra.mxu0 0
    %2936 = vmatprep.subr.bf16.mxu0 0
    %2937 = vmatpush2.bf16.msra.mxu0 0
    %2938 = vmatprep.subr.bf16.mxu0 0
    %2939 = vmatpush2.bf16.msra.mxu0 0
    %2940 = vmatprep.subr.bf16.mxu0 0
    %2941 = vmatpush2.bf16.msra.mxu0 0
    %2942 = vmatprep.mubr.bf16.mxu0 0
    %2943 = vmatmul.mubr.bf16.gmra.mxu0 %v2909
    %v2944 = vpop.f32.mrf.mxu0
    %v2945 = vadd.f32 0.0, %v2944
    %v2946 = vpop.f32.mrf.mxu0
    %v2947 = vadd.f32 0.0, %v2946
    %v2948 = vpop.f32.mrf.mxu0
    %v2949 = vpop.f32.mrf.mxu0
    %2950 = vdwg.mxu0
    %2951 = vmatprep.subr.bf16.mxu0 0
    %2952 = vmatpush1.bf16.msra.mxu0 %v810
    %2953 = vmatprep.subr.bf16.mxu0 0
    %2954 = vmatpush1.bf16.msra.mxu0 %v807
    %2955 = vmatprep.subr.bf16.mxu0 0
    %2956 = vmatpush1.bf16.msra.mxu0 %v804
    %2957 = vmatprep.subr.bf16.mxu0 0
    %2958 = vmatpush1.bf16.msra.mxu0 %v801
    %2959 = vmatprep.subr.bf16.mxu0 0
    %2960 = vmatpush1.bf16.msra.mxu0 %v798
    %2961 = vmatprep.subr.bf16.mxu0 0
    %2962 = vmatpush1.bf16.msra.mxu0 %v795
    %2963 = vmatprep.subr.bf16.mxu0 0
    %2964 = vmatpush1.bf16.msra.mxu0 %v792
    %2965 = vmatprep.subr.bf16.mxu0 0
    %2966 = vmatpush1.bf16.msra.mxu0 %v789
    %2967 = vmatprep.subr.bf16.mxu0 0
    %2968 = vmatpush2.bf16.msra.mxu0 0
    %2969 = vmatprep.subr.bf16.mxu0 0
    %2970 = vmatpush2.bf16.msra.mxu0 0
    %2971 = vmatprep.subr.bf16.mxu0 0
    %2972 = vmatpush2.bf16.msra.mxu0 0
    %2973 = vmatprep.subr.bf16.mxu0 0
    %2974 = vmatpush2.bf16.msra.mxu0 0
    %2975 = vmatprep.subr.bf16.mxu0 0
    %2976 = vmatpush2.bf16.msra.mxu0 0
    %2977 = vmatprep.subr.bf16.mxu0 0
    %2978 = vmatpush2.bf16.msra.mxu0 0
    %2979 = vmatprep.subr.bf16.mxu0 0
    %2980 = vmatpush2.bf16.msra.mxu0 0
    %2981 = vmatprep.subr.bf16.mxu0 0
    %2982 = vmatpush2.bf16.msra.mxu0 0
    %2983 = vmatprep.mubr.bf16.mxu0 0
    %2984 = vmatmul.mubr.bf16.gmra.mxu0 %v2909
    %v2985 = vpop.f32.mrf.mxu0
    %v2986 = vadd.f32 0.0, %v2985
    %v2987 = vpop.f32.mrf.mxu0
    %v2988 = vpop.f32.mrf.mxu0
    %v2989 = vpop.f32.mrf.mxu0
    %2990 = vdwg.mxu0
    %v2991 = vadd.f32 %v2906, %v2945
    %v2992 = vadd.f32 %v2907, %v2947
    %v2993 = vxor.u32 %v2991, 2147483648
    %v2994 = vxor.u32 %v2992, 2147483648
    %v2995 = vmul.f32 %v2993, 1.442695
    %v2996 = vpow.pop %v2995
    %v2997 = vmul.f32 %v2994, 1.442695
    %v2998 = vpow.pop %v2997
    %v2999 = vadd.f32 %v2996, 1.0
    %v3000 = vadd.f32 %v2998, 1.0
    %v3001 = vrcp.pop %v2999
    %v3002 = vmul.f32 1.0, %v3001
    %v3003 = vrcp.pop %v3000
    %v3004 = vmul.f32 1.0, %v3003
    %v3005 = vadd.f32 %v2986, %v397
    %v3006 = vmul.f32 %v3002, %v3005
    %v3007 = vadd.f32 %v2908, %v3006
    %v3008 = vtanh.pop %v3007
    %v3009 = vsub.f32 %v2721, %v3008
    %v3010 = vmul.f32 %v3004, %v3009
    %v3011 = vadd.f32 %v3008, %v3010
    %3012 = vmatprep.subr.bf16.mxu0 %v1087
    %3013 = vmatpush1.bf16.msra.mxu0 %v1086
    %3014 = vmatprep.subr.bf16.mxu0 %v1084
    %3015 = vmatpush1.bf16.msra.mxu0 %v1083
    %3016 = vmatprep.subr.bf16.mxu0 %v1081
    %3017 = vmatpush1.bf16.msra.mxu0 %v1080
    %3018 = vmatprep.subr.bf16.mxu0 %v1078
    %3019 = vmatpush1.bf16.msra.mxu0 %v1077
    %3020 = vmatprep.subr.bf16.mxu0 %v1075
    %3021 = vmatpush1.bf16.msra.mxu0 %v1074
    %3022 = vmatprep.subr.bf16.mxu0 %v1072
    %3023 = vmatpush1.bf16.msra.mxu0 %v1071
    %3024 = vmatprep.subr.bf16.mxu0 %v1069
    %3025 = vmatpush1.bf16.msra.mxu0 %v1068
    %3026 = vmatprep.subr.bf16.mxu0 %v1066
    %3027 = vmatpush1.bf16.msra.mxu0 %v1065
    %3028 = vmatprep.subr.bf16.mxu0 0
    %3029 = vmatpush2.bf16.msra.mxu0 0
    %3030 = vmatprep.subr.bf16.mxu0 0
    %3031 = vmatpush2.bf16.msra.mxu0 0
    %3032 = vmatprep.subr.bf16.mxu0 0
    %3033 = vmatpush2.bf16.msra.mxu0 0
    %3034 = vmatprep.subr.bf16.mxu0 0
    %3035 = vmatpush2.bf16.msra.mxu0 0
    %3036 = vmatprep.subr.bf16.mxu0 0
    %3037 = vmatpush2.bf16.msra.mxu0 0
    %3038 = vmatprep.subr.bf16.mxu0 0
    %3039 = vmatpush2.bf16.msra.mxu0 0
    %3040 = vmatprep.subr.bf16.mxu0 0
    %3041 = vmatpush2.bf16.msra.mxu0 0
    %3042 = vmatprep.subr.bf16.mxu0 0
    %3043 = vmatpush2.bf16.msra.mxu0 0
    %3044 = vmatprep.mubr.bf16.mxu0 0
    %3045 = vmatmul.mubr.bf16.gmra.mxu0 %v2909
    %v3046 = vpop.f32.mrf.mxu0
    %v3047 = vadd.f32 %v973, %v3046
    %v3048 = vpop.f32.mrf.mxu0
    %v3049 = vadd.f32 %v977, %v3048
    %v3050 = vpop.f32.mrf.mxu0
    %v3051 = vpop.f32.mrf.mxu0
    %3052 = vdwg.mxu0
    %3053 = vmatprep.subr.bf16.mxu0 0
    %3054 = vmatpush1.bf16.msra.mxu0 %v1088
    %3055 = vmatprep.subr.bf16.mxu0 0
    %3056 = vmatpush1.bf16.msra.mxu0 %v1085
    %3057 = vmatprep.subr.bf16.mxu0 0
    %3058 = vmatpush1.bf16.msra.mxu0 %v1082
    %3059 = vmatprep.subr.bf16.mxu0 0
    %3060 = vmatpush1.bf16.msra.mxu0 %v1079
    %3061 = vmatprep.subr.bf16.mxu0 0
    %3062 = vmatpush1.bf16.msra.mxu0 %v1076
    %3063 = vmatprep.subr.bf16.mxu0 0
    %3064 = vmatpush1.bf16.msra.mxu0 %v1073
    %3065 = vmatprep.subr.bf16.mxu0 0
    %3066 = vmatpush1.bf16.msra.mxu0 %v1070
    %3067 = vmatprep.subr.bf16.mxu0 0
    %3068 = vmatpush1.bf16.msra.mxu0 %v1067
    %3069 = vmatprep.subr.bf16.mxu0 0
    %3070 = vmatpush2.bf16.msra.mxu0 0
    %3071 = vmatprep.subr.bf16.mxu0 0
    %3072 = vmatpush2.bf16.msra.mxu0 0
    %3073 = vmatprep.subr.bf16.mxu0 0
    %3074 = vmatpush2.bf16.msra.mxu0 0
    %3075 = vmatprep.subr.bf16.mxu0 0
    %3076 = vmatpush2.bf16.msra.mxu0 0
    %3077 = vmatprep.subr.bf16.mxu0 0
    %3078 = vmatpush2.bf16.msra.mxu0 0
    %3079 = vmatprep.subr.bf16.mxu0 0
    %3080 = vmatpush2.bf16.msra.mxu0 0
    %3081 = vmatprep.subr.bf16.mxu0 0
    %3082 = vmatpush2.bf16.msra.mxu0 0
    %3083 = vmatprep.subr.bf16.mxu0 0
    %3084 = vmatpush2.bf16.msra.mxu0 0
    %3085 = vmatprep.mubr.bf16.mxu0 0
    %3086 = vmatmul.mubr.bf16.gmra.mxu0 %v2909
    %v3087 = vpop.f32.mrf.mxu0
    %v3088 = vadd.f32 %v981, %v3087
    %v3089 = vpop.f32.mrf.mxu0
    %v3090 = vpop.f32.mrf.mxu0
    %v3091 = vpop.f32.mrf.mxu0
    %3092 = vdwg.mxu0
    %v3093 = vpack.c.bf16 %v2905, %v2905
    %3094 = vmatprep.subr.bf16.mxu0 %v1328
    %3095 = vmatpush1.bf16.msra.mxu0 %v1327
    %3096 = vmatprep.subr.bf16.mxu0 %v1325
    %3097 = vmatpush1.bf16.msra.mxu0 %v1324
    %3098 = vmatprep.subr.bf16.mxu0 %v1322
    %3099 = vmatpush1.bf16.msra.mxu0 %v1321
    %3100 = vmatprep.subr.bf16.mxu0 %v1319
    %3101 = vmatpush1.bf16.msra.mxu0 %v1318
    %3102 = vmatprep.subr.bf16.mxu0 %v1316
    %3103 = vmatpush1.bf16.msra.mxu0 %v1315
    %3104 = vmatprep.subr.bf16.mxu0 %v1313
    %3105 = vmatpush1.bf16.msra.mxu0 %v1312
    %3106 = vmatprep.subr.bf16.mxu0 %v1310
    %3107 = vmatpush1.bf16.msra.mxu0 %v1309
    %3108 = vmatprep.subr.bf16.mxu0 %v1307
    %3109 = vmatpush1.bf16.msra.mxu0 %v1306
    %3110 = vmatprep.subr.bf16.mxu0 0
    %3111 = vmatpush2.bf16.msra.mxu0 0
    %3112 = vmatprep.subr.bf16.mxu0 0
    %3113 = vmatpush2.bf16.msra.mxu0 0
    %3114 = vmatprep.subr.bf16.mxu0 0
    %3115 = vmatpush2.bf16.msra.mxu0 0
    %3116 = vmatprep.subr.bf16.mxu0 0
    %3117 = vmatpush2.bf16.msra.mxu0 0
    %3118 = vmatprep.subr.bf16.mxu0 0
    %3119 = vmatpush2.bf16.msra.mxu0 0
    %3120 = vmatprep.subr.bf16.mxu0 0
    %3121 = vmatpush2.bf16.msra.mxu0 0
    %3122 = vmatprep.subr.bf16.mxu0 0
    %3123 = vmatpush2.bf16.msra.mxu0 0
    %3124 = vmatprep.subr.bf16.mxu0 0
    %3125 = vmatpush2.bf16.msra.mxu0 0
    %3126 = vmatprep.mubr.bf16.mxu0 0
    %3127 = vmatmul.mubr.bf16.gmra.mxu0 %v3093
    %v3128 = vpop.f32.mrf.mxu0
    %v3129 = vadd.f32 0.0, %v3128
    %v3130 = vpop.f32.mrf.mxu0
    %v3131 = vadd.f32 0.0, %v3130
    %v3132 = vpop.f32.mrf.mxu0
    %v3133 = vpop.f32.mrf.mxu0
    %3134 = vdwg.mxu0
    %3135 = vmatprep.subr.bf16.mxu0 0
    %3136 = vmatpush1.bf16.msra.mxu0 %v1329
    %3137 = vmatprep.subr.bf16.mxu0 0
    %3138 = vmatpush1.bf16.msra.mxu0 %v1326
    %3139 = vmatprep.subr.bf16.mxu0 0
    %3140 = vmatpush1.bf16.msra.mxu0 %v1323
    %3141 = vmatprep.subr.bf16.mxu0 0
    %3142 = vmatpush1.bf16.msra.mxu0 %v1320
    %3143 = vmatprep.subr.bf16.mxu0 0
    %3144 = vmatpush1.bf16.msra.mxu0 %v1317
    %3145 = vmatprep.subr.bf16.mxu0 0
    %3146 = vmatpush1.bf16.msra.mxu0 %v1314
    %3147 = vmatprep.subr.bf16.mxu0 0
    %3148 = vmatpush1.bf16.msra.mxu0 %v1311
    %3149 = vmatprep.subr.bf16.mxu0 0
    %3150 = vmatpush1.bf16.msra.mxu0 %v1308
    %3151 = vmatprep.subr.bf16.mxu0 0
    %3152 = vmatpush2.bf16.msra.mxu0 0
    %3153 = vmatprep.subr.bf16.mxu0 0
    %3154 = vmatpush2.bf16.msra.mxu0 0
    %3155 = vmatprep.subr.bf16.mxu0 0
    %3156 = vmatpush2.bf16.msra.mxu0 0
    %3157 = vmatprep.subr.bf16.mxu0 0
    %3158 = vmatpush2.bf16.msra.mxu0 0
    %3159 = vmatprep.subr.bf16.mxu0 0
    %3160 = vmatpush2.bf16.msra.mxu0 0
    %3161 = vmatprep.subr.bf16.mxu0 0
    %3162 = vmatpush2.bf16.msra.mxu0 0
    %3163 = vmatprep.subr.bf16.mxu0 0
    %3164 = vmatpush2.bf16.msra.mxu0 0
    %3165 = vmatprep.subr.bf16.mxu0 0
    %3166 = vmatpush2.bf16.msra.mxu0 0
    %3167 = vmatprep.mubr.bf16.mxu0 0
    %3168 = vmatmul.mubr.bf16.gmra.mxu0 %v3093
    %v3169 = vpop.f32.mrf.mxu0
    %v3170 = vadd.f32 0.0, %v3169
    %v3171 = vpop.f32.mrf.mxu0
    %v3172 = vpop.f32.mrf.mxu0
    %v3173 = vpop.f32.mrf.mxu0
    %3174 = vdwg.mxu0
    %v3175 = vadd.f32 %v3047, %v3129
    %v3176 = vadd.f32 %v3049, %v3131
    %v3177 = vxor.u32 %v3175, 2147483648
    %v3178 = vxor.u32 %v3176, 2147483648
    %v3179 = vmul.f32 %v3177, 1.442695
    %v3180 = vpow.pop %v3179
    %v3181 = vmul.f32 %v3178, 1.442695
    %v3182 = vpow.pop %v3181
    %v3183 = vadd.f32 %v3180, 1.0
    %v3184 = vadd.f32 %v3182, 1.0
    %v3185 = vrcp.pop %v3183
    %v3186 = vmul.f32 1.0, %v3185
    %v3187 = vrcp.pop %v3184
    %v3188 = vmul.f32 1.0, %v3187
    %v3189 = vadd.f32 %v3170, %v398
    %v3190 = vmul.f32 %v3186, %v3189
    %v3191 = vadd.f32 %v3088, %v3190
    %v3192 = vtanh.pop %v3191
    %v3193 = vsub.f32 %v2905, %v3192
    %v3194 = vmul.f32 %v3188, %v3193
    %v3195 = vadd.f32 %v3192, %v3194
    %v3196 = vpack.c.bf16 %v3011, %v3011
    %3197 = vmatprep.subr.bf16.mxu0 %v1087
    %3198 = vmatpush1.bf16.msra.mxu0 %v1086
    %3199 = vmatprep.subr.bf16.mxu0 %v1084
    %3200 = vmatpush1.bf16.msra.mxu0 %v1083
    %3201 = vmatprep.subr.bf16.mxu0 %v1081
    %3202 = vmatpush1.bf16.msra.mxu0 %v1080
    %3203 = vmatprep.subr.bf16.mxu0 %v1078
    %3204 = vmatpush1.bf16.msra.mxu0 %v1077
    %3205 = vmatprep.subr.bf16.mxu0 %v1075
    %3206 = vmatpush1.bf16.msra.mxu0 %v1074
    %3207 = vmatprep.subr.bf16.mxu0 %v1072
    %3208 = vmatpush1.bf16.msra.mxu0 %v1071
    %3209 = vmatprep.subr.bf16.mxu0 %v1069
    %3210 = vmatpush1.bf16.msra.mxu0 %v1068
    %3211 = vmatprep.subr.bf16.mxu0 %v1066
    %3212 = vmatpush1.bf16.msra.mxu0 %v1065
    %3213 = vmatprep.subr.bf16.mxu0 0
    %3214 = vmatpush2.bf16.msra.mxu0 0
    %3215 = vmatprep.subr.bf16.mxu0 0
    %3216 = vmatpush2.bf16.msra.mxu0 0
    %3217 = vmatprep.subr.bf16.mxu0 0
    %3218 = vmatpush2.bf16.msra.mxu0 0
    %3219 = vmatprep.subr.bf16.mxu0 0
    %3220 = vmatpush2.bf16.msra.mxu0 0
    %3221 = vmatprep.subr.bf16.mxu0 0
    %3222 = vmatpush2.bf16.msra.mxu0 0
    %3223 = vmatprep.subr.bf16.mxu0 0
    %3224 = vmatpush2.bf16.msra.mxu0 0
    %3225 = vmatprep.subr.bf16.mxu0 0
    %3226 = vmatpush2.bf16.msra.mxu0 0
    %3227 = vmatprep.subr.bf16.mxu0 0
    %3228 = vmatpush2.bf16.msra.mxu0 0
    %3229 = vmatprep.mubr.bf16.mxu0 0
    %3230 = vmatmul.mubr.bf16.gmra.mxu0 %v3196
    %v3231 = vpop.f32.mrf.mxu0
    %v3232 = vadd.f32 %v973, %v3231
    %v3233 = vpop.f32.mrf.mxu0
    %v3234 = vadd.f32 %v977, %v3233
    %v3235 = vpop.f32.mrf.mxu0
    %v3236 = vpop.f32.mrf.mxu0
    %3237 = vdwg.mxu0
    %3238 = vmatprep.subr.bf16.mxu0 0
    %3239 = vmatpush1.bf16.msra.mxu0 %v1088
    %3240 = vmatprep.subr.bf16.mxu0 0
    %3241 = vmatpush1.bf16.msra.mxu0 %v1085
    %3242 = vmatprep.subr.bf16.mxu0 0
    %3243 = vmatpush1.bf16.msra.mxu0 %v1082
    %3244 = vmatprep.subr.bf16.mxu0 0
    %3245 = vmatpush1.bf16.msra.mxu0 %v1079
    %3246 = vmatprep.subr.bf16.mxu0 0
    %3247 = vmatpush1.bf16.msra.mxu0 %v1076
    %3248 = vmatprep.subr.bf16.mxu0 0
    %3249 = vmatpush1.bf16.msra.mxu0 %v1073
    %3250 = vmatprep.subr.bf16.mxu0 0
    %3251 = vmatpush1.bf16.msra.mxu0 %v1070
    %3252 = vmatprep.subr.bf16.mxu0 0
    %3253 = vmatpush1.bf16.msra.mxu0 %v1067
    %3254 = vmatprep.subr.bf16.mxu0 0
    %3255 = vmatpush2.bf16.msra.mxu0 0
    %3256 = vmatprep.subr.bf16.mxu0 0
    %3257 = vmatpush2.bf16.msra.mxu0 0
    %3258 = vmatprep.subr.bf16.mxu0 0
    %3259 = vmatpush2.bf16.msra.mxu0 0
    %3260 = vmatprep.subr.bf16.mxu0 0
    %3261 = vmatpush2.bf16.msra.mxu0 0
    %3262 = vmatprep.subr.bf16.mxu0 0
    %3263 = vmatpush2.bf16.msra.mxu0 0
    %3264 = vmatprep.subr.bf16.mxu0 0
    %3265 = vmatpush2.bf16.msra.mxu0 0
    %3266 = vmatprep.subr.bf16.mxu0 0
    %3267 = vmatpush2.bf16.msra.mxu0 0
    %3268 = vmatprep.subr.bf16.mxu0 0
    %3269 = vmatpush2.bf16.msra.mxu0 0
    %3270 = vmatprep.mubr.bf16.mxu0 0
    %3271 = vmatmul.mubr.bf16.gmra.mxu0 %v3196
    %v3272 = vpop.f32.mrf.mxu0
    %v3273 = vadd.f32 %v981, %v3272
    %v3274 = vpop.f32.mrf.mxu0
    %v3275 = vpop.f32.mrf.mxu0
    %v3276 = vpop.f32.mrf.mxu0
    %3277 = vdwg.mxu0
    %v3278 = vpack.c.bf16 %v3195, %v3195
    %3279 = vmatprep.subr.bf16.mxu0 %v1328
    %3280 = vmatpush1.bf16.msra.mxu0 %v1327
    %3281 = vmatprep.subr.bf16.mxu0 %v1325
    %3282 = vmatpush1.bf16.msra.mxu0 %v1324
    %3283 = vmatprep.subr.bf16.mxu0 %v1322
    %3284 = vmatpush1.bf16.msra.mxu0 %v1321
    %3285 = vmatprep.subr.bf16.mxu0 %v1319
    %3286 = vmatpush1.bf16.msra.mxu0 %v1318
    %3287 = vmatprep.subr.bf16.mxu0 %v1316
    %3288 = vmatpush1.bf16.msra.mxu0 %v1315
    %3289 = vmatprep.subr.bf16.mxu0 %v1313
    %3290 = vmatpush1.bf16.msra.mxu0 %v1312
    %3291 = vmatprep.subr.bf16.mxu0 %v1310
    %3292 = vmatpush1.bf16.msra.mxu0 %v1309
    %3293 = vmatprep.subr.bf16.mxu0 %v1307
    %3294 = vmatpush1.bf16.msra.mxu0 %v1306
    %3295 = vmatprep.subr.bf16.mxu0 0
    %3296 = vmatpush2.bf16.msra.mxu0 0
    %3297 = vmatprep.subr.bf16.mxu0 0
    %3298 = vmatpush2.bf16.msra.mxu0 0
    %3299 = vmatprep.subr.bf16.mxu0 0
    %3300 = vmatpush2.bf16.msra.mxu0 0
    %3301 = vmatprep.subr.bf16.mxu0 0
    %3302 = vmatpush2.bf16.msra.mxu0 0
    %3303 = vmatprep.subr.bf16.mxu0 0
    %3304 = vmatpush2.bf16.msra.mxu0 0
    %3305 = vmatprep.subr.bf16.mxu0 0
    %3306 = vmatpush2.bf16.msra.mxu0 0
    %3307 = vmatprep.subr.bf16.mxu0 0
    %3308 = vmatpush2.bf16.msra.mxu0 0
    %3309 = vmatprep.subr.bf16.mxu0 0
    %3310 = vmatpush2.bf16.msra.mxu0 0
    %3311 = vmatprep.mubr.bf16.mxu0 0
    %3312 = vmatmul.mubr.bf16.gmra.mxu0 %v3278
    %v3313 = vpop.f32.mrf.mxu0
    %v3314 = vadd.f32 0.0, %v3313
    %v3315 = vpop.f32.mrf.mxu0
    %v3316 = vadd.f32 0.0, %v3315
    %v3317 = vpop.f32.mrf.mxu0
    %v3318 = vpop.f32.mrf.mxu0
    %3319 = vdwg.mxu0
    %3320 = vmatprep.subr.bf16.mxu0 0
    %3321 = vmatpush1.bf16.msra.mxu0 %v1329
    %3322 = vmatprep.subr.bf16.mxu0 0
    %3323 = vmatpush1.bf16.msra.mxu0 %v1326
    %3324 = vmatprep.subr.bf16.mxu0 0
    %3325 = vmatpush1.bf16.msra.mxu0 %v1323
    %3326 = vmatprep.subr.bf16.mxu0 0
    %3327 = vmatpush1.bf16.msra.mxu0 %v1320
    %3328 = vmatprep.subr.bf16.mxu0 0
    %3329 = vmatpush1.bf16.msra.mxu0 %v1317
    %3330 = vmatprep.subr.bf16.mxu0 0
    %3331 = vmatpush1.bf16.msra.mxu0 %v1314
    %3332 = vmatprep.subr.bf16.mxu0 0
    %3333 = vmatpush1.bf16.msra.mxu0 %v1311
    %3334 = vmatprep.subr.bf16.mxu0 0
    %3335 = vmatpush1.bf16.msra.mxu0 %v1308
    %3336 = vmatprep.subr.bf16.mxu0 0
    %3337 = vmatpush2.bf16.msra.mxu0 0
    %3338 = vmatprep.subr.bf16.mxu0 0
    %3339 = vmatpush2.bf16.msra.mxu0 0
    %3340 = vmatprep.subr.bf16.mxu0 0
    %3341 = vmatpush2.bf16.msra.mxu0 0
    %3342 = vmatprep.subr.bf16.mxu0 0
    %3343 = vmatpush2.bf16.msra.mxu0 0
    %3344 = vmatprep.subr.bf16.mxu0 0
    %3345 = vmatpush2.bf16.msra.mxu0 0
    %3346 = vmatprep.subr.bf16.mxu0 0
    %3347 = vmatpush2.bf16.msra.mxu0 0
    %3348 = vmatprep.subr.bf16.mxu0 0
    %3349 = vmatpush2.bf16.msra.mxu0 0
    %3350 = vmatprep.subr.bf16.mxu0 0
    %3351 = vmatpush2.bf16.msra.mxu0 0
    %3352 = vmatprep.mubr.bf16.mxu0 0
    %3353 = vmatmul.mubr.bf16.gmra.mxu0 %v3278
    %v3354 = vpop.f32.mrf.mxu0
    %v3355 = vadd.f32 0.0, %v3354
    %v3356 = vpop.f32.mrf.mxu0
    %v3357 = vpop.f32.mrf.mxu0
    %v3358 = vpop.f32.mrf.mxu0
    %3359 = vdwg.mxu0
    %v3360 = vadd.f32 %v3232, %v3314
    %v3361 = vadd.f32 %v3234, %v3316
    %v3362 = vxor.u32 %v3360, 2147483648
    %v3363 = vxor.u32 %v3361, 2147483648
    %v3364 = vmul.f32 %v3362, 1.442695
    %v3365 = vpow.pop %v3364
    %v3366 = vmul.f32 %v3363, 1.442695
    %v3367 = vpow.pop %v3366
    %v3368 = vadd.f32 %v3365, 1.0
    %v3369 = vadd.f32 %v3367, 1.0
    %v3370 = vrcp.pop %v3368
    %v3371 = vmul.f32 1.0, %v3370
    %v3372 = vrcp.pop %v3369
    %v3373 = vmul.f32 1.0, %v3372
    %v3374 = vadd.f32 %v3355, %v398
    %v3375 = vmul.f32 %v3371, %v3374
    %v3376 = vadd.f32 %v3273, %v3375
    %v3377 = vtanh.pop %v3376
    %v3378 = vsub.f32 %v3195, %v3377
    %v3379 = vmul.f32 %v3373, %v3378
    %v3380 = vadd.f32 %v3377, %v3379
    %v3381 = vld [vmem:[%s9] sm:$0xff]
    %v3382 = vld [vmem:[%s9 + $0x8] sm:$0xff]
    %v3383 = vld [vmem:[%s9 + $0x10] sm:$0xff]
    %v3384 = vld [vmem:[%s9 + $0x18] sm:$0xff]
    %v3385 = vld [vmem:[%s9 + $0x20] sm:$0xff]
    %v3386 = vld [vmem:[%s9 + $0x28] sm:$0xff]
    %v3387 = vld [vmem:[%s9 + $0x30] sm:$0xff]
    %v3388 = vld [vmem:[%s9 + $0x38] sm:$0xff]
    %v3389 = vld [vmem:[%s9 + $0x40] sm:$0xff]
    %v3390 = vld [vmem:[%s9 + $0x48] sm:$0xff]
    %v3391 = vld [vmem:[%s9 + $0x50] sm:$0xff]
    %v3392 = vld [vmem:[%s9 + $0x58] sm:$0xff]
    %v3393 = vld [vmem:[%s9 + $0x60] sm:$0xff]
    %v3394 = vld [vmem:[%s9 + $0x68] sm:$0xff]
    %v3395 = vld [vmem:[%s9 + $0x70] sm:$0xff]
    %v3396 = vld [vmem:[%s9 + $0x78] sm:$0xff]
    %v3397 = vld [vmem:[%s10] sm:$0x1]
    %v3399 = vlaneseq
    %v3400 = vshrl.u32 %v3399, 7
    %v3401 = vsub.s32 0, %v3400
    %v3402 = vrot.slane %v3397, %v3401
    %3404 = vmatprep.subr.mxu0 0.0
    %3405 = vmatpush1.msra.mxu0 %v3396
    %3406 = vmatprep.subr.mxu0 0.0
    %3407 = vmatpush1.msra.mxu0 %v3395
    %3408 = vmatprep.subr.mxu0 0.0
    %3409 = vmatpush1.msra.mxu0 %v3394
    %3410 = vmatprep.subr.mxu0 0.0
    %3411 = vmatpush1.msra.mxu0 %v3393
    %3412 = vmatprep.subr.mxu0 0.0
    %3413 = vmatpush1.msra.mxu0 %v3392
    %3414 = vmatprep.subr.mxu0 0.0
    %3415 = vmatpush1.msra.mxu0 %v3391
    %3416 = vmatprep.subr.mxu0 0.0
    %3417 = vmatpush1.msra.mxu0 %v3390
    %3418 = vmatprep.subr.mxu0 0.0
    %3419 = vmatpush1.msra.mxu0 %v3389
    %3420 = vmatprep.subr.mxu0 0.0
    %3421 = vmatpush1.msra.mxu0 %v3388
    %3422 = vmatprep.subr.mxu0 0.0
    %3423 = vmatpush1.msra.mxu0 %v3387
    %3424 = vmatprep.subr.mxu0 0.0
    %3425 = vmatpush1.msra.mxu0 %v3386
    %3426 = vmatprep.subr.mxu0 0.0
    %3427 = vmatpush1.msra.mxu0 %v3385
    %3428 = vmatprep.subr.mxu0 0.0
    %3429 = vmatpush1.msra.mxu0 %v3384
    %3430 = vmatprep.subr.mxu0 0.0
    %3431 = vmatpush1.msra.mxu0 %v3383
    %3432 = vmatprep.subr.mxu0 0.0
    %3433 = vmatpush1.msra.mxu0 %v3382
    %3434 = vmatprep.subr.mxu0 0.0
    %3435 = vmatpush1.msra.mxu0 %v3381
    %3436 = vmatprep.subr.mxu0 0.0
    %3437 = vmatpush2.msra.mxu0 0.0
    %3438 = vmatprep.subr.mxu0 0.0
    %3439 = vmatpush2.msra.mxu0 0.0
    %3440 = vmatprep.subr.mxu0 0.0
    %3441 = vmatpush2.msra.mxu0 0.0
    %3442 = vmatprep.subr.mxu0 0.0
    %3443 = vmatpush2.msra.mxu0 0.0
    %3444 = vmatprep.subr.mxu0 0.0
    %3445 = vmatpush2.msra.mxu0 0.0
    %3446 = vmatprep.subr.mxu0 0.0
    %3447 = vmatpush2.msra.mxu0 0.0
    %3448 = vmatprep.subr.mxu0 0.0
    %3449 = vmatpush2.msra.mxu0 0.0
    %3450 = vmatprep.subr.mxu0 0.0
    %3451 = vmatpush2.msra.mxu0 0.0
    %3452 = vmatprep.subr.mxu0 0.0
    %3453 = vmatpush2.msra.mxu0 0.0
    %3454 = vmatprep.subr.mxu0 0.0
    %3455 = vmatpush2.msra.mxu0 0.0
    %3456 = vmatprep.subr.mxu0 0.0
    %3457 = vmatpush2.msra.mxu0 0.0
    %3458 = vmatprep.subr.mxu0 0.0
    %3459 = vmatpush2.msra.mxu0 0.0
    %3460 = vmatprep.subr.mxu0 0.0
    %3461 = vmatpush2.msra.mxu0 0.0
    %3462 = vmatprep.subr.mxu0 0.0
    %3463 = vmatpush2.msra.mxu0 0.0
    %3464 = vmatprep.subr.mxu0 0.0
    %3465 = vmatpush2.msra.mxu0 0.0
    %3466 = vmatprep.subr.mxu0 0.0
    %3467 = vmatpush2.msra.mxu0 0.0
    %3468 = vmatprep.mubr.f32.mxu0 0.0
    %3469 = vmatmul.mubr.f32.gmra.mxu0 %v3380
    %v3470 = vpop.f32.mrf.mxu0
    %v3471 = vadd.f32 %v3402, %v3470
    %v3472 = vpop.f32.mrf.mxu0
    %3473 = vdwg.mxu0
    %3474 = vst.msk [vmem:[%s11] sm:$0xff] %vm123, %v3471
    // Predicated region
    $region58: #{tpu_custom_call.1} parent=1 // pred_check
      _
    $region59: #{tpu_custom_call.1} parent=1 // pred_check_branch
      %3476 = sbr.rel (0) target = $region61
    $region60: #{tpu_custom_call.1} parent=1 // pred_region
      _
    $region61: #{tpu_custom_call.1} parent=1 // pred_fallthru
      _
    // Predicated region
    $region62: #{tpu_custom_call.1} parent=1 // pred_check
      _
    $region63: #{tpu_custom_call.1} parent=1 // pred_check_branch
      %3478 = sbr.rel (0) target = $region65
    $region64: #{tpu_custom_call.1} parent=1 // pred_region
      _
    $region65: #{tpu_custom_call.1} parent=1 // pred_fallthru
      _
    %3479 = vsyncpa [#allocation7], 1
    %3480 = vsyncpa [#allocation9], 1
  %3481 = vsyncmov [#allocation5]
  %s3482 = vpop.sfrf %3481
  %p3483 = scmp.eq.s32.totalorder %s3482, 0
  %p3484 = pneg %p3483
  %3486 = shalt.err (%p3484)
  %s3487 = scalar_lea.sflag [#allocation5], 1
  %3488 = vsyncmov %s3487
  %s3489 = vpop.sfrf %3488
  %p3490 = scmp.eq.s32.totalorder %s3489, 0
  %p3491 = pneg %p3490
  %3493 = shalt.err (%p3491)

</llo_original>
